<compile_context>
chip_gen: v6e
topology: v6e:2x2x1
jax: 0.10.0
libtpu: 0.0.40
codegen_flags: <defaults>
</compile_context>

<pallas_src>
import functools

import jax
import jax.numpy as jnp
from jax import lax
from jax.experimental import pallas as pl
from jax.experimental.pallas import tpu as pltpu

# ----------------------------- config (small) --------------------------------
IMG_SIZE = 16          # must be divisible by 16
NF = 8
Z_DIM = 8
FACTOR = 2
N_SEQ = 4
BATCH = 2
H_DIM = NF * 8 * (IMG_SIZE // 16) * (IMG_SIZE // 16)   # 64
FZ = FACTOR * Z_DIM                                    # 16


# ----------------------------- Pallas kernels --------------------------------
def _mask_scale_kernel(x_ref, m_ref, inv_ref, o_ref):
    # lane-dense elementwise: x * mask * (1/max_norm), scalar lives in SMEM
    o_ref[...] = x_ref[...] * m_ref[...] * inv_ref[0]


def mask_scale(x2, m2, inv1):
    r, c = x2.shape
    return pl.pallas_call(
        _mask_scale_kernel,
        out_shape=jax.ShapeDtypeStruct((r, c), jnp.float32),
        grid=(1,),
        in_specs=[
            pl.BlockSpec((r, c), lambda i: (0, 0)),
            pl.BlockSpec((r, c), lambda i: (0, 0)),
            pl.BlockSpec(memory_space=pltpu.MemorySpace.SMEM),
        ],
        out_specs=pl.BlockSpec((r, c), lambda i: (0, 0)),
    )(x2.astype(jnp.float32), m2.astype(jnp.float32), inv1)


def _gemm_kernel(w_ref, col_ref, b_ref, *rest, act, has_extra, has_scale):
    # (Cout, K)bf16 @ (K, M)bf16 -> f32, fused bias + act + residual + scale.
    y = jnp.dot(w_ref[...], col_ref[...], preferred_element_type=jnp.float32)
    y = y + b_ref[...]
    if act == "relu":
        y = jnp.maximum(y, 0.0)
    elif act == "tanh":
        y = jnp.tanh(y)
    i = 0
    if has_extra:
        y = y + rest[i][...]
        i += 1
    if has_scale:
        y = y * rest[i][0]
        i += 1
    rest[i][...] = y


def gemm(w, col, bias_col, act="none", extra=None, scale=None):
    """Lane-dense conv GEMM: out(Cout, M) with M = N*Ho*Wo on the lane axis."""
    cout, k = w.shape
    _, m = col.shape
    # split the largest layers over M so v7x's 2nd TensorCore gets work
    nm = 2 if (m >= 2048 and (m // 2) % 128 == 0) else 1
    mt = m // nm
    in_specs = [
        pl.BlockSpec((cout, k), lambda i: (0, 0)),
        pl.BlockSpec((k, mt), lambda i: (0, i)),
        pl.BlockSpec((cout, 1), lambda i: (0, 0)),
    ]
    args = [w, col, bias_col]
    if extra is not None:
        in_specs.append(pl.BlockSpec((cout, mt), lambda i: (0, i)))
        args.append(extra.astype(jnp.float32))
    if scale is not None:
        in_specs.append(pl.BlockSpec(memory_space=pltpu.MemorySpace.SMEM))
        args.append(jnp.asarray(scale, jnp.float32).reshape(1))
    kernel = functools.partial(_gemm_kernel, act=act,
                               has_extra=extra is not None,
                               has_scale=scale is not None)
    return pl.pallas_call(
        kernel,
        out_shape=jax.ShapeDtypeStruct((cout, m), jnp.float32),
        grid=(nm,),
        in_specs=in_specs,
        out_specs=pl.BlockSpec((cout, mt), lambda i: (0, i)),
        compiler_params=pltpu.CompilerParams(dimension_semantics=("parallel",)),
    )(*args)


def _gemm_pair_kernel(w_ref, col_ref, b_ref, *rest, c_head, has_extra):
    # one GEMM, two consumers of the same im2col:
    #   rows [:c_head]  -> tanh head (optionally + residual)
    #   rows [c_head:]  -> relu 4-phase deconv body
    y = jnp.dot(w_ref[...], col_ref[...], preferred_element_type=jnp.float32)
    y = y + b_ref[...]
    head = jnp.tanh(y[:c_head, :])
    body = jnp.maximum(y[c_head:, :], 0.0)
    i = 0
    if has_extra:
        head = head + rest[i][...]
        i += 1
    rest[i][...] = head
    rest[i + 1][...] = body


def gemm_pair(w, col, bias_col, c_head, extra=None):
    ctot, k = w.shape
    _, m = col.shape
    cbody = ctot - c_head
    in_specs = [
        pl.BlockSpec((ctot, k), lambda i: (0, 0)),
        pl.BlockSpec((k, m), lambda i: (0, 0)),
        pl.BlockSpec((ctot, 1), lambda i: (0, 0)),
    ]
    args = [w, col, bias_col]
    if extra is not None:
        in_specs.append(pl.BlockSpec((c_head, m), lambda i: (0, 0)))
        args.append(extra.astype(jnp.float32))
    kernel = functools.partial(_gemm_pair_kernel, c_head=c_head,
                               has_extra=extra is not None)
    return pl.pallas_call(
        kernel,
        out_shape=(jax.ShapeDtypeStruct((c_head, m), jnp.float32),
                   jax.ShapeDtypeStruct((cbody, m), jnp.float32)),
        grid=(1,),
        in_specs=in_specs,
        out_specs=(pl.BlockSpec((c_head, m), lambda i: (0, 0)),
                   pl.BlockSpec((cbody, m), lambda i: (0, 0))),
        compiler_params=pltpu.CompilerParams(dimension_semantics=("parallel",)),
    )(*args)


def _bottleneck_kernel(xc_ref, eps_ref, w4_ref, b4_ref, wih_ref, whh_ref, bcat_ref,
                       wrih_ref, wrhh_ref, br_ref, wfc2_ref, bfc2_ref, wd1_ref, bd1_ref,
                       mu_ref, lv_ref, dec_ref, *, n_seq, bsz):
    """conv4 + fc11/fc12 RNNs + reparam + decoder rnn + fc2 + deconv1(1x1-input),
    all VMEM resident.  Rows are time-major: row = t*bsz + b, h_0 = 0."""
    f32 = jnp.float32
    # conv4 as a linear layer (2x2 input, only the 4 interior taps are nonzero)
    x = jnp.dot(xc_ref[...], w4_ref[...], preferred_element_type=f32) + b4_ref[...]
    x = jnp.maximum(x, 0.0)                                        # (TB, 64)

    # fc11 + fc12 fused: x@Wih for all T as ONE GEMM, tiny h@Whh in the loop
    h2 = whh_ref.shape[0]
    xg = jnp.dot(x, wih_ref[...], preferred_element_type=f32) + bcat_ref[...]   # (TB, 16)
    h = jnp.zeros((bsz, h2), f32)
    chunks = []
    for t in range(n_seq):                                         # T=4, static unroll
        pre = xg[t * bsz:(t + 1) * bsz, :] + jnp.dot(h, whh_ref[...],
                                                     preferred_element_type=f32)
        h = jnp.tanh(pre)
        chunks.append(h)
    ml = jnp.concatenate(chunks, axis=0)                           # (TB, 16)
    zd = h2 // 2
    mu = ml[:, :zd]
    lv = ml[:, zd:]
    mu_ref[...] = mu
    lv_ref[...] = lv

    # reparameterize (eps passed in, time-major)
    z = mu + eps_ref[...] * jnp.exp(0.5 * lv)                      # (TB, 8)

    # decoder rnn (tanh), same hoisted-input-GEMM structure
    fzl = wrhh_ref.shape[0]
    zg = jnp.dot(z, wrih_ref[...], preferred_element_type=f32) + br_ref[...]    # (TB, 16)
    hr = jnp.zeros((bsz, fzl), f32)
    chunks2 = []
    for t in range(n_seq):
        hr = jnp.tanh(zg[t * bsz:(t + 1) * bsz, :] +
                      jnp.dot(hr, wrhh_ref[...], preferred_element_type=f32))
        chunks2.append(hr)
    zz = jnp.concatenate(chunks2, axis=0)                          # (TB, 16)

    # fc2, then deconv1 (1x1 spatial input -> pure linear) + ReLU
    fz = jnp.dot(zz, wfc2_ref[...], preferred_element_type=f32) + bfc2_ref[...]  # (TB, 64)
    d1 = jnp.dot(fz, wd1_ref[...], preferred_element_type=f32) + bd1_ref[...]    # (TB, 128)
    dec_ref[...] = jnp.maximum(d1, 0.0)


def bottleneck_block(q, xc_tm, eps_tm):
    n = xc_tm.shape[0]
    bsz = n // N_SEQ
    args = (xc_tm, eps_tm, q["w4"], q["b4"], q["wih_cat"], q["whh_cat"], q["b_cat"],
            q["wr_ih"], q["wr_hh"], q["br"], q["wfc2"], q["bfc2"], q["wd1"], q["bd1"])
    in_specs = [pl.BlockSpec(a.shape, lambda i, nd=a.ndim: (0,) * nd) for a in args]
    out_shape = (jax.ShapeDtypeStruct((n, Z_DIM), jnp.float32),
                 jax.ShapeDtypeStruct((n, Z_DIM), jnp.float32),
                 jax.ShapeDtypeStruct((n, 4 * NF * 4), jnp.float32))
    out_specs = tuple(pl.BlockSpec(s.shape, lambda i: (0, 0)) for s in out_shape)
    kernel = functools.partial(_bottleneck_kernel, n_seq=N_SEQ, bsz=bsz)
    return pl.pallas_call(
        kernel,
        out_shape=out_shape,
        grid=(1,),
        in_specs=in_specs,
        out_specs=out_specs,
        compiler_params=pltpu.CompilerParams(dimension_semantics=("arbitrary",)),
    )(*args)


# --------------------------- XLA glue (tiny tensors) --------------------------
def _im2col(x, kh, kw, stride, pad):
    """x: (C, N, H, W) -> col (C*kh*kw, N*Ho*Wo); K index = c*kh*kw + i*kw + j."""
    c, n, h, w = x.shape
    ho = (h + 2 * pad - kh) // stride + 1
    wo = (w + 2 * pad - kw) // stride + 1
    xp = jnp.pad(x, ((0, 0), (0, 0), (pad, pad), (pad, pad)))
    cols = [xp[:, :, i:i + stride * (ho - 1) + 1:stride,
                     j:j + stride * (wo - 1) + 1:stride]
            for i in range(kh) for j in range(kw)]
    col = jnp.stack(cols, axis=1)                  # (C, kh*kw, N, Ho, Wo)
    return col.reshape(c * kh * kw, n * ho * wo)


def conv2d_cnhw(x, w_mat, bias_col, kh, kw, stride, pad, act, extra=None, scale=None):
    """Conv on CNHW data via one lane-dense Pallas GEMM with fused epilogue."""
    _, n, h, w = x.shape
    ho = (h + 2 * pad - kh) // stride + 1
    wo = (w + 2 * pad - kw) // stride + 1
    col = _im2col(x, kh, kw, stride, pad).astype(jnp.bfloat16)
    cout = w_mat.shape[0]
    ex = None if extra is None else extra.reshape(cout, -1)
    out = gemm(w_mat, col, bias_col, act=act, extra=ex, scale=scale)
    return out.reshape(cout, n, ho, wo)


def _depth_to_space2(y):
    """(4*Cout, N, H, W) phase tensor -> (Cout, N, 2H, 2W)."""
    c4, n, h, w = y.shape
    cout = c4 // 4
    y = y.reshape(2, 2, cout, n, h, w).transpose(2, 3, 4, 0, 5, 1)
    return y.reshape(cout, n, 2 * h, 2 * w)


def deconv2x_cnhw(x, w_phase_mat, bias4_col, act):
    """ConvTranspose2d(k=4,s=2,p=1) as 4-phase 3x3/s1/p1 conv + depth-to-space."""
    y = conv2d_cnhw(x, w_phase_mat, bias4_col, 3, 3, 1, 1, act)
    return _depth_to_space2(y)


def conv_head_deconv(x, w_pair, b_pair, c_head, extra=None):
    """tanh 3x3 head and 4-phase deconv sharing ONE im2col + GEMM."""
    _, n, h, w = x.shape
    col = _im2col(x, 3, 3, 1, 1).astype(jnp.bfloat16)
    ex = None if extra is None else extra.reshape(c_head, -1)
    o_head, o_body = gemm_pair(w_pair, col, b_pair, c_head, extra=ex)
    head = o_head.reshape(c_head, n, h, w)
    body = _depth_to_space2(o_body.reshape(o_body.shape[0], n, h, w))
    return head, body


def upsample2x(x):
    """F.interpolate(scale_factor=2, mode='bilinear', align_corners=False) as a
    fixed 0.25/0.75 separable stencil (no gathers).  x: (C, N, H, W)."""
    def up1d(t, axis):
        length = t.shape[axis]
        sl = lambda a, b: lax.slice_in_dim(t, a, b, axis=axis)
        prev = jnp.concatenate([sl(0, 1), sl(0, length - 1)], axis=axis)
        nxt = jnp.concatenate([sl(1, length), sl(length - 1, length)], axis=axis)
        even = 0.75 * t + 0.25 * prev
        odd = 0.75 * t + 0.25 * nxt
        out = jnp.stack([even, odd], axis=axis + 1)
        shp = list(t.shape)
        shp[axis] = 2 * length
        return out.reshape(shp)
    return up1d(up1d(x, 2), 3)


# ------------------------------- parameters ----------------------------------
def _uinit(key, shape, fan_in):
    bound = 1.0 / (float(fan_in) ** 0.5)
    return jax.random.uniform(key, shape, jnp.float32, -bound, bound)


def init_params(key):
    keys = iter(jax.random.split(key, 80))
    p = {}

    def conv(name, cout, cin, k):
        fan = cin * k * k
        p[name + "_w"] = _uinit(next(keys), (cout, cin, k, k), fan)
        p[name + "_b"] = _uinit(next(keys), (cout,), fan)

    def convT(name, cin, cout, k):
        fan = cin * k * k
        p[name + "_w"] = _uinit(next(keys), (cin, cout, k, k), fan)
        p[name + "_b"] = _uinit(next(keys), (cout,), fan)

    def rnn(name, din, h):
        p[name + "_wih"] = _uinit(next(keys), (h, din), h)
        p[name + "_whh"] = _uinit(next(keys), (h, h), h)
        p[name + "_bih"] = _uinit(next(keys), (h,), h)
        p[name + "_bhh"] = _uinit(next(keys), (h,), h)

    conv("conv1", NF, 2, 4)
    conv("conv2", NF * 2, NF, 4)
    conv("conv3", NF * 4, NF * 2, 4)
    conv("conv4", NF * 8, NF * 4, 4)
    rnn("fc11", H_DIM, Z_DIM)
    rnn("fc12", H_DIM, Z_DIM)
    rnn("rnn", Z_DIM, FZ)
    p["fc2_w"] = _uinit(next(keys), (H_DIM, FZ), FZ)   # PyTorch Linear: (out, in)
    p["fc2_b"] = _uinit(next(keys), (H_DIM,), FZ)
    convT("deconv1", NF * 8, NF * 4, 4)
    convT("deconv2", NF * 4, NF * 2, 4)
    conv("deconv22", NF * 2, NF * 2, 3)
    convT("deconv3", NF * 2, NF, 4)
    conv("deconv32", NF, NF, 3)
    convT("deconv4", NF, NF, 4)
    conv("deconv42", NF, NF, 3)
    conv("deconv21", 2, NF * 2, 3)
    conv("deconv31", 2, NF, 3)
    conv("deconv41", 2, NF, 3)
    return p


def _deconv_phase_mat(wt):
    """ConvTranspose2d(k=4,s=2,p=1) weight (Cin,Cout,4,4) -> 4-phase 3x3 matrix
    (4*Cout, Cin*9); phase (a,b), tap (di,dj) maps to kernel element
    (rmap[a][di], rmap[b][dj])."""
    cin, cout = wt.shape[0], wt.shape[1]
    rmap = {0: {0: 3, 1: 1}, 1: {1: 2, 2: 0}}
    wp = jnp.zeros((2, 2, cout, cin, 3, 3), jnp.float32)
    for a in (0, 1):
        for b in (0, 1):
            for di, r in rmap[a].items():
                for dj, c in rmap[b].items():
                    wp = wp.at[a, b, :, :, di, dj].set(wt[:, :, r, c].T)
    return wp.reshape(4 * cout, cin * 9)


def prepare_params(p):
    """Hoist all weight re-layouts out of the forward pass (done once)."""
    f32, bf16 = jnp.float32, jnp.bfloat16
    q = {}

    def conv_mat(w):
        return w.reshape(w.shape[0], -1)

    for name in ("conv1", "conv2", "conv3", "deconv22", "deconv32", "deconv42",
                 "deconv41"):
        q[name + "_wm"] = conv_mat(p[name + "_w"]).astype(bf16)
        q[name + "_bc"] = p[name + "_b"].reshape(-1, 1).astype(f32)

    q["deconv2_wm"] = _deconv_phase_mat(p["deconv2_w"]).astype(bf16)
    q["deconv2_bc"] = jnp.tile(p["deconv2_b"], 4).reshape(-1, 1).astype(f32)

    # tanh heads fused with the following deconv (they consume the same input)
    q["pair21_3_wm"] = jnp.concatenate(
        [conv_mat(p["deconv21_w"]), _deconv_phase_mat(p["deconv3_w"])], axis=0).astype(bf16)
    q["pair21_3_bc"] = jnp.concatenate(
        [p["deconv21_b"], jnp.tile(p["deconv3_b"], 4)]).reshape(-1, 1).astype(f32)
    q["pair31_4_wm"] = jnp.concatenate(
        [conv_mat(p["deconv31_w"]), _deconv_phase_mat(p["deconv4_w"])], axis=0).astype(bf16)
    q["pair31_4_bc"] = jnp.concatenate(
        [p["deconv31_b"], jnp.tile(p["deconv4_b"], 4)]).reshape(-1, 1).astype(f32)

    # bottleneck kernel weights (f32, pre-transposed / pre-fused)
    q["w4"] = p["conv4_w"][:, :, 1:3, 1:3].reshape(NF * 8, NF * 4 * 4).T.astype(f32)
    q["b4"] = p["conv4_b"].reshape(1, -1).astype(f32)
    q["wih_cat"] = jnp.concatenate([p["fc11_wih"].T, p["fc12_wih"].T], axis=1).astype(f32)
    whh = jnp.zeros((2 * Z_DIM, 2 * Z_DIM), f32)
    whh = whh.at[:Z_DIM, :Z_DIM].set(p["fc11_whh"].T)
    whh = whh.at[Z_DIM:, Z_DIM:].set(p["fc12_whh"].T)
    q["whh_cat"] = whh
    q["b_cat"] = jnp.concatenate([p["fc11_bih"] + p["fc11_bhh"],
                                  p["fc12_bih"] + p["fc12_bhh"]]).reshape(1, -1).astype(f32)
    q["wr_ih"] = p["rnn_wih"].T.astype(f32)
    q["wr_hh"] = p["rnn_whh"].T.astype(f32)
    q["br"] = (p["rnn_bih"] + p["rnn_bhh"]).reshape(1, -1).astype(f32)
    q["wfc2"] = p["fc2_w"].T.astype(f32)
    q["bfc2"] = p["fc2_b"].reshape(1, -1).astype(f32)
    # deconv1 on a 1x1 spatial input is a pure linear layer over channels
    wd1 = p["deconv1_w"][:, :, 1:3, 1:3].transpose(0, 2, 3, 1).reshape(NF * 8, 4 * NF * 4)
    q["wd1"] = wd1.astype(f32)
    q["bd1"] = jnp.tile(p["deconv1_b"], 4).reshape(1, -1).astype(f32)
    return q


# --------------------------------- forward -----------------------------------
def temporal_vae_forward(q, x, mask, max_norm, eps):
    n = x.shape[0]
    b = n // N_SEQ
    hw = IMG_SIZE * IMG_SIZE

    # x * mask / max_norm  (lane-dense Pallas kernel, scalar 1/max_norm in SMEM)
    inv1 = jnp.reshape(1.0 / max_norm, (1,)).astype(jnp.float32)
    x_cn = jnp.transpose(x, (1, 0, 2, 3))
    m_cn = jnp.transpose(mask, (1, 0, 2, 3))
    xs = mask_scale(x_cn.reshape(2 * n, hw), m_cn.reshape(2 * n, hw), inv1)
    xs = xs.reshape(2, n, IMG_SIZE, IMG_SIZE)

    # encoder (CNHW layout, lane-dense GEMMs, fused ReLU)
    h = conv2d_cnhw(xs, q["conv1_wm"], q["conv1_bc"], 4, 4, 2, 1, "relu")   # (8,N,8,8)
    h = conv2d_cnhw(h, q["conv2_wm"], q["conv2_bc"], 4, 4, 2, 1, "relu")    # (16,N,4,4)
    h = conv2d_cnhw(h, q["conv3_wm"], q["conv3_bc"], 4, 4, 2, 1, "relu")    # (32,N,2,2)

    # fused bottleneck kernel (time-major rows: t*B + b)
    xc = jnp.transpose(h, (1, 0, 2, 3)).reshape(n, NF * 4 * 4)              # (N,128)

    def bm_to_tm(a):
        return a.reshape(b, N_SEQ, -1).transpose(1, 0, 2).reshape(n, -1)

    def tm_to_bm(a):
        return a.reshape(N_SEQ, b, -1).transpose(1, 0, 2).reshape(n, -1)

    mu_t, lv_t, dec_t = bottleneck_block(q, bm_to_tm(xc), bm_to_tm(eps))
    mu, logvar, dec = tm_to_bm(mu_t), tm_to_bm(lv_t), tm_to_bm(dec_t)

    # deconv1 output (already ReLU'd in the bottleneck kernel): depth-to-space
    d = dec.reshape(n, 2, 2, NF * 4).transpose(3, 0, 1, 2)                  # (32,N,2,2)

    # decoder
    d = deconv2x_cnhw(d, q["deconv2_wm"], q["deconv2_bc"], "relu")          # (16,N,4,4)
    d = conv2d_cnhw(d, q["deconv22_wm"], q["deconv22_bc"], 3, 3, 1, 1, "relu")
    out1, d = conv_head_deconv(d, q["pair21_3_wm"], q["pair21_3_bc"], 2)    # (2,N,4,4),(8,N,8,8)
    d = conv2d_cnhw(d, q["deconv32_wm"], q["deconv32_bc"], 3, 3, 1, 1, "relu")
    out2, d = conv_head_deconv(d, q["pair31_4_wm"], q["pair31_4_bc"], 2,
                               extra=upsample2x(out1))                      # (2,N,8,8),(8,N,16,16)
    d = conv2d_cnhw(d, q["deconv42_wm"], q["deconv42_bc"], 3, 3, 1, 1, "relu")
    out3 = conv2d_cnhw(d, q["deconv41_wm"], q["deconv41_bc"], 3, 3, 1, 1, "tanh",
                       extra=upsample2x(out2), scale=max_norm)              # (2,N,16,16), *max_norm

    return jnp.transpose(out3, (1, 0, 2, 3)), mu, logvar


# ----------------------------------- main -------------------------------------
if __name__ == "__main__":
    key = jax.random.PRNGKey(0)
    k_param, k_x, k_mask, k_eps = jax.random.split(key, 4)

    params = init_params(k_param)
    q = prepare_params(params)     # weight re-layouts hoisted out of the forward

    N = BATCH * N_SEQ
    x = jax.random.normal(k_x, (N, 2, IMG_SIZE, IMG_SIZE), jnp.float32)
    mask = (jax.random.uniform(k_mask, (N, 2, IMG_SIZE, IMG_SIZE)) > 0.3).astype(jnp.float32)
    max_norm = jnp.float32(2.5)
    # reparameterization noise (torch.randn_like replaced by deterministic JAX noise)
    eps = jax.random.normal(k_eps, (N, Z_DIM), jnp.float32)

    fwd = jax.jit(temporal_vae_forward)
    out, mu, logvar = fwd(q, x, mask, max_norm, eps)
    jax.block_until_ready((out, mu, logvar))

    assert out.shape == (N, 2, IMG_SIZE, IMG_SIZE), out.shape
    assert mu.shape == (N, Z_DIM) and logvar.shape == (N, Z_DIM)
    assert jnp.all(jnp.isfinite(out)) and jnp.all(jnp.isfinite(mu)) and jnp.all(jnp.isfinite(logvar))
    print("KERNEL_OK")
</pallas_src>

<mosaic_0001>
module attributes {stable_mosaic.version = 11 : i64} {
  func.func @_mask_scale_kernel(%arg0: i32, %arg1: memref<16x256xf32, #tpu.memory_space<vmem>>, %arg2: memref<16x256xf32, #tpu.memory_space<vmem>>, %arg3: memref<1xf32, #tpu.memory_space<smem>>, %arg4: memref<16x256xf32, #tpu.memory_space<vmem>>) attributes {dimension_semantics = [#tpu.dimension_semantics<arbitrary>], iteration_bounds = array<i64: 1>, scalar_prefetch = 0 : i64, scratch_operands = 0 : i64, tpu.core_type = #tpu.core_type<tc>, window_params = [{pipeline_mode = #tpu.pipeline_mode<synchronous>, transform_indices = @transform_0, window_bounds = array<i64: 16, 256>}, {pipeline_mode = #tpu.pipeline_mode<synchronous>, transform_indices = @transform_1, window_bounds = array<i64: 16, 256>}, {transform_indices = @transform_2, window_bounds = array<i64: 1>}, {pipeline_mode = #tpu.pipeline_mode<synchronous>, transform_indices = @transform_3, window_bounds = array<i64: 16, 256>}]} {
    %c0 = arith.constant 0 : index
    %c0_0 = arith.constant 0 : index
    %0 = vector.load %arg1[%c0, %c0_0] : memref<16x256xf32, #tpu.memory_space<vmem>>, vector<16x256xf32>
    %c0_1 = arith.constant 0 : index
    %c0_2 = arith.constant 0 : index
    %1 = vector.load %arg2[%c0_1, %c0_2] : memref<16x256xf32, #tpu.memory_space<vmem>>, vector<16x256xf32>
    %2 = arith.mulf %0, %1 : vector<16x256xf32>
    %c0_3 = arith.constant 0 : index
    %3 = memref.load %arg3[%c0_3] : memref<1xf32, #tpu.memory_space<smem>>
    %4 = vector.broadcast %3 : f32 to vector<16x256xf32>
    %5 = arith.mulf %2, %4 : vector<16x256xf32>
    %c0_4 = arith.constant 0 : index
    %c0_5 = arith.constant 0 : index
    %6 = vector.load %arg4[%c0_4, %c0_5] : memref<16x256xf32, #tpu.memory_space<vmem>>, vector<16x256xf32>
    tpu.vector_store %arg4[%c0_4, %c0_5], %5 {strides = array<i32>} : memref<16x256xf32, #tpu.memory_space<vmem>>, vector<16x256xf32>,
    return
  }
  func.func @transform_0(%arg0: i32) -> (i32, i32) {
    %c0_i32 = arith.constant 0 : i32
    %c0_i32_0 = arith.constant 0 : i32
    %c0_i32_1 = arith.constant 0 : i32
    return %c0_i32, %c0_i32_0 : i32, i32
  }
  func.func @transform_1(%arg0: i32) -> (i32, i32) {
    %c0_i32 = arith.constant 0 : i32
    %c0_i32_0 = arith.constant 0 : i32
    %c0_i32_1 = arith.constant 0 : i32
    return %c0_i32, %c0_i32_0 : i32, i32
  }
  func.func @transform_2(%arg0: i32) -> i32 {
    %c0_i32 = arith.constant 0 : i32
    %c0_i32_0 = arith.constant 0 : i32
    return %c0_i32 : i32
  }
  func.func @transform_3(%arg0: i32) -> (i32, i32) {
    %c0_i32 = arith.constant 0 : i32
    %c0_i32_0 = arith.constant 0 : i32
    %c0_i32_1 = arith.constant 0 : i32
    return %c0_i32, %c0_i32_0 : i32, i32
  }
}

module attributes {stable_mosaic.version = 11 : i64} {
  func.func @_gemm_kernel(%arg0: i32, %arg1: memref<8x32xbf16, #tpu.memory_space<vmem>>, %arg2: memref<32x512xbf16, #tpu.memory_space<vmem>>, %arg3: memref<8x1xf32, #tpu.memory_space<vmem>>, %arg4: memref<8x512xf32, #tpu.memory_space<vmem>>) attributes {dimension_semantics = [#tpu.dimension_semantics<parallel>], iteration_bounds = array<i64: 1>, scalar_prefetch = 0 : i64, scratch_operands = 0 : i64, tpu.core_type = #tpu.core_type<tc>, window_params = [{pipeline_mode = #tpu.pipeline_mode<synchronous>, transform_indices = @transform_0, window_bounds = array<i64: 8, 32>}, {transform_indices = @transform_1, window_bounds = array<i64: 32, 512>}, {pipeline_mode = #tpu.pipeline_mode<synchronous>, transform_indices = @transform_2, window_bounds = array<i64: 8, 1>}, {transform_indices = @transform_3, window_bounds = array<i64: 8, 512>}]} {
    %c0 = arith.constant 0 : index
    %c0_0 = arith.constant 0 : index
    %0 = vector.load %arg1[%c0, %c0_0] : memref<8x32xbf16, #tpu.memory_space<vmem>>, vector<8x32xbf16>
    %c0_1 = arith.constant 0 : index
    %c0_2 = arith.constant 0 : index
    %1 = vector.load %arg2[%c0_1, %c0_2] : memref<32x512xbf16, #tpu.memory_space<vmem>>, vector<32x512xbf16>
    %cst = arith.constant dense<0.000000e+00> : vector<8x512xf32>
    %2 = tpu.matmul %0, %1, %cst {dimension_numbers = #tpu.dot_dimension_numbers<[1], [0], [0], [1], [0, 0, 1, 1], [], []>} : vector<8x32xbf16>, vector<32x512xbf16>, vector<8x512xf32> -> vector<8x512xf32>
    %c0_3 = arith.constant 0 : index
    %c0_4 = arith.constant 0 : index
    %3 = vector.load %arg3[%c0_3, %c0_4] : memref<8x1xf32, #tpu.memory_space<vmem>>, vector<8x1xf32>
    %4 = vector.broadcast %3 : vector<8x1xf32> to vector<8x512xf32>
    %5 = arith.addf %2, %4 : vector<8x512xf32>
    %cst_5 = arith.constant 0.000000e+00 : f32
    %6 = vector.broadcast %cst_5 : f32 to vector<8x512xf32>
    %7 = arith.maximumf %5, %6 : vector<8x512xf32>
    %c0_6 = arith.constant 0 : index
    %c0_7 = arith.constant 0 : index
    %8 = vector.load %arg4[%c0_6, %c0_7] : memref<8x512xf32, #tpu.memory_space<vmem>>, vector<8x512xf32>
    tpu.vector_store %arg4[%c0_6, %c0_7], %7 {strides = array<i32>} : memref<8x512xf32, #tpu.memory_space<vmem>>, vector<8x512xf32>,
    return
  }
  func.func @transform_0(%arg0: i32) -> (i32, i32) {
    %c0_i32 = arith.constant 0 : i32
    %c0_i32_0 = arith.constant 0 : i32
    %c0_i32_1 = arith.constant 0 : i32
    return %c0_i32, %c0_i32_0 : i32, i32
  }
  func.func @transform_1(%arg0: i32) -> (i32, i32) {
    %c0_i32 = arith.constant 0 : i32
    %c0_i32_0 = arith.constant 0 : i32
    return %c0_i32, %arg0 : i32, i32
  }
  func.func @transform_2(%arg0: i32) -> (i32, i32) {
    %c0_i32 = arith.constant 0 : i32
    %c0_i32_0 = arith.constant 0 : i32
    %c0_i32_1 = arith.constant 0 : i32
    return %c0_i32, %c0_i32_0 : i32, i32
  }
  func.func @transform_3(%arg0: i32) -> (i32, i32) {
    %c0_i32 = arith.constant 0 : i32
    %c0_i32_0 = arith.constant 0 : i32
    return %c0_i32, %arg0 : i32, i32
  }
}

module attributes {stable_mosaic.version = 11 : i64} {
  func.func @_gemm_kernel(%arg0: i32, %arg1: memref<16x128xbf16, #tpu.memory_space<vmem>>, %arg2: memref<128x128xbf16, #tpu.memory_space<vmem>>, %arg3: memref<16x1xf32, #tpu.memory_space<vmem>>, %arg4: memref<16x128xf32, #tpu.memory_space<vmem>>) attributes {dimension_semantics = [#tpu.dimension_semantics<parallel>], iteration_bounds = array<i64: 1>, scalar_prefetch = 0 : i64, scratch_operands = 0 : i64, tpu.core_type = #tpu.core_type<tc>, window_params = [{pipeline_mode = #tpu.pipeline_mode<synchronous>, transform_indices = @transform_0, window_bounds = array<i64: 16, 128>}, {transform_indices = @transform_1, window_bounds = array<i64: 128, 128>}, {pipeline_mode = #tpu.pipeline_mode<synchronous>, transform_indices = @transform_2, window_bounds = array<i64: 16, 1>}, {transform_indices = @transform_3, window_bounds = array<i64: 16, 128>}]} {
    %c0 = arith.constant 0 : index
    %c0_0 = arith.constant 0 : index
    %0 = vector.load %arg1[%c0, %c0_0] : memref<16x128xbf16, #tpu.memory_space<vmem>>, vector<16x128xbf16>
    %c0_1 = arith.constant 0 : index
    %c0_2 = arith.constant 0 : index
    %1 = vector.load %arg2[%c0_1, %c0_2] : memref<128x128xbf16, #tpu.memory_space<vmem>>, vector<128x128xbf16>
    %cst = arith.constant dense<0.000000e+00> : vector<16x128xf32>
    %2 = tpu.matmul %0, %1, %cst {dimension_numbers = #tpu.dot_dimension_numbers<[1], [0], [0], [1], [0, 0, 1, 1], [], []>} : vector<16x128xbf16>, vector<128x128xbf16>, vector<16x128xf32> -> vector<16x128xf32>
    %c0_3 = arith.constant 0 : index
    %c0_4 = arith.constant 0 : index
    %3 = vector.load %arg3[%c0_3, %c0_4] : memref<16x1xf32, #tpu.memory_space<vmem>>, vector<16x1xf32>
    %4 = vector.broadcast %3 : vector<16x1xf32> to vector<16x128xf32>
    %5 = arith.addf %2, %4 : vector<16x128xf32>
    %cst_5 = arith.constant 0.000000e+00 : f32
    %6 = vector.broadcast %cst_5 : f32 to vector<16x128xf32>
    %7 = arith.maximumf %5, %6 : vector<16x128xf32>
    %c0_6 = arith.constant 0 : index
    %c0_7 = arith.constant 0 : index
    %8 = vector.load %arg4[%c0_6, %c0_7] : memref<16x128xf32, #tpu.memory_space<vmem>>, vector<16x128xf32>
    tpu.vector_store %arg4[%c0_6, %c0_7], %7 {strides = array<i32>} : memref<16x128xf32, #tpu.memory_space<vmem>>, vector<16x128xf32>,
    return
  }
  func.func @transform_0(%arg0: i32) -> (i32, i32) {
    %c0_i32 = arith.constant 0 : i32
    %c0_i32_0 = arith.constant 0 : i32
    %c0_i32_1 = arith.constant 0 : i32
    return %c0_i32, %c0_i32_0 : i32, i32
  }
  func.func @transform_1(%arg0: i32) -> (i32, i32) {
    %c0_i32 = arith.constant 0 : i32
    %c0_i32_0 = arith.constant 0 : i32
    return %c0_i32, %arg0 : i32, i32
  }
  func.func @transform_2(%arg0: i32) -> (i32, i32) {
    %c0_i32 = arith.constant 0 : i32
    %c0_i32_0 = arith.constant 0 : i32
    %c0_i32_1 = arith.constant 0 : i32
    return %c0_i32, %c0_i32_0 : i32, i32
  }
  func.func @transform_3(%arg0: i32) -> (i32, i32) {
    %c0_i32 = arith.constant 0 : i32
    %c0_i32_0 = arith.constant 0 : i32
    return %c0_i32, %arg0 : i32, i32
  }
}

module attributes {stable_mosaic.version = 11 : i64} {
  func.func @_gemm_kernel(%arg0: i32, %arg1: memref<32x256xbf16, #tpu.memory_space<vmem>>, %arg2: memref<256x32xbf16, #tpu.memory_space<vmem>>, %arg3: memref<32x1xf32, #tpu.memory_space<vmem>>, %arg4: memref<32x32xf32, #tpu.memory_space<vmem>>) attributes {dimension_semantics = [#tpu.dimension_semantics<parallel>], iteration_bounds = array<i64: 1>, scalar_prefetch = 0 : i64, scratch_operands = 0 : i64, tpu.core_type = #tpu.core_type<tc>, window_params = [{pipeline_mode = #tpu.pipeline_mode<synchronous>, transform_indices = @transform_0, window_bounds = array<i64: 32, 256>}, {transform_indices = @transform_1, window_bounds = array<i64: 256, 32>}, {pipeline_mode = #tpu.pipeline_mode<synchronous>, transform_indices = @transform_2, window_bounds = array<i64: 32, 1>}, {transform_indices = @transform_3, window_bounds = array<i64: 32, 32>}]} {
    %c0 = arith.constant 0 : index
    %c0_0 = arith.constant 0 : index
    %0 = vector.load %arg1[%c0, %c0_0] : memref<32x256xbf16, #tpu.memory_space<vmem>>, vector<32x256xbf16>
    %c0_1 = arith.constant 0 : index
    %c0_2 = arith.constant 0 : index
    %1 = vector.load %arg2[%c0_1, %c0_2] : memref<256x32xbf16, #tpu.memory_space<vmem>>, vector<256x32xbf16>
    %cst = arith.constant dense<0.000000e+00> : vector<32x32xf32>
    %2 = tpu.matmul %0, %1, %cst {dimension_numbers = #tpu.dot_dimension_numbers<[1], [0], [0], [1], [0, 0, 1, 1], [], []>} : vector<32x256xbf16>, vector<256x32xbf16>, vector<32x32xf32> -> vector<32x32xf32>
    %c0_3 = arith.constant 0 : index
    %c0_4 = arith.constant 0 : index
    %3 = vector.load %arg3[%c0_3, %c0_4] : memref<32x1xf32, #tpu.memory_space<vmem>>, vector<32x1xf32>
    %4 = vector.broadcast %3 : vector<32x1xf32> to vector<32x32xf32>
    %5 = arith.addf %2, %4 : vector<32x32xf32>
    %cst_5 = arith.constant 0.000000e+00 : f32
    %6 = vector.broadcast %cst_5 : f32 to vector<32x32xf32>
    %7 = arith.maximumf %5, %6 : vector<32x32xf32>
    %c0_6 = arith.constant 0 : index
    %c0_7 = arith.constant 0 : index
    %8 = vector.load %arg4[%c0_6, %c0_7] : memref<32x32xf32, #tpu.memory_space<vmem>>, vector<32x32xf32>
    tpu.vector_store %arg4[%c0_6, %c0_7], %7 {strides = array<i32>} : memref<32x32xf32, #tpu.memory_space<vmem>>, vector<32x32xf32>,
    return
  }
  func.func @transform_0(%arg0: i32) -> (i32, i32) {
    %c0_i32 = arith.constant 0 : i32
    %c0_i32_0 = arith.constant 0 : i32
    %c0_i32_1 = arith.constant 0 : i32
    return %c0_i32, %c0_i32_0 : i32, i32
  }
  func.func @transform_1(%arg0: i32) -> (i32, i32) {
    %c0_i32 = arith.constant 0 : i32
    %c0_i32_0 = arith.constant 0 : i32
    return %c0_i32, %arg0 : i32, i32
  }
  func.func @transform_2(%arg0: i32) -> (i32, i32) {
    %c0_i32 = arith.constant 0 : i32
    %c0_i32_0 = arith.constant 0 : i32
    %c0_i32_1 = arith.constant 0 : i32
    return %c0_i32, %c0_i32_0 : i32, i32
  }
  func.func @transform_3(%arg0: i32) -> (i32, i32) {
    %c0_i32 = arith.constant 0 : i32
    %c0_i32_0 = arith.constant 0 : i32
    return %c0_i32, %arg0 : i32, i32
  }
}

module attributes {stable_mosaic.version = 11 : i64} {
  func.func @_bottleneck_kernel(%arg0: i32, %arg1: memref<8x128xf32, #tpu.memory_space<vmem>>, %arg2: memref<8x8xf32, #tpu.memory_space<vmem>>, %arg3: memref<128x64xf32, #tpu.memory_space<vmem>>, %arg4: memref<1x64xf32, #tpu.memory_space<vmem>>, %arg5: memref<64x16xf32, #tpu.memory_space<vmem>>, %arg6: memref<16x16xf32, #tpu.memory_space<vmem>>, %arg7: memref<1x16xf32, #tpu.memory_space<vmem>>, %arg8: memref<8x16xf32, #tpu.memory_space<vmem>>, %arg9: memref<16x16xf32, #tpu.memory_space<vmem>>, %arg10: memref<1x16xf32, #tpu.memory_space<vmem>>, %arg11: memref<16x64xf32, #tpu.memory_space<vmem>>, %arg12: memref<1x64xf32, #tpu.memory_space<vmem>>, %arg13: memref<64x128xf32, #tpu.memory_space<vmem>>, %arg14: memref<1x128xf32, #tpu.memory_space<vmem>>, %arg15: memref<8x8xf32, #tpu.memory_space<vmem>>, %arg16: memref<8x8xf32, #tpu.memory_space<vmem>>, %arg17: memref<8x128xf32, #tpu.memory_space<vmem>>) attributes {dimension_semantics = [#tpu.dimension_semantics<arbitrary>], iteration_bounds = array<i64: 1>, scalar_prefetch = 0 : i64, scratch_operands = 0 : i64, tpu.core_type = #tpu.core_type<tc>, window_params = [{pipeline_mode = #tpu.pipeline_mode<synchronous>, transform_indices = @transform_0, window_bounds = array<i64: 8, 128>}, {pipeline_mode = #tpu.pipeline_mode<synchronous>, transform_indices = @transform_1, window_bounds = array<i64: 8, 8>}, {pipeline_mode = #tpu.pipeline_mode<synchronous>, transform_indices = @transform_2, window_bounds = array<i64: 128, 64>}, {pipeline_mode = #tpu.pipeline_mode<synchronous>, transform_indices = @transform_3, window_bounds = array<i64: 1, 64>}, {pipeline_mode = #tpu.pipeline_mode<synchronous>, transform_indices = @transform_4, window_bounds = array<i64: 64, 16>}, {pipeline_mode = #tpu.pipeline_mode<synchronous>, transform_indices = @transform_5, window_bounds = array<i64: 16, 16>}, {pipeline_mode = #tpu.pipeline_mode<synchronous>, transform_indices = @transform_6, window_bounds = array<i64: 1, 16>}, {pipeline_mode = #tpu.pipeline_mode<synchronous>, transform_indices = @transform_7, window_bounds = array<i64: 8, 16>}, {pipeline_mode = #tpu.pipeline_mode<synchronous>, transform_indices = @transform_8, window_bounds = array<i64: 16, 16>}, {pipeline_mode = #tpu.pipeline_mode<synchronous>, transform_indices = @transform_9, window_bounds = array<i64: 1, 16>}, {pipeline_mode = #tpu.pipeline_mode<synchronous>, transform_indices = @transform_10, window_bounds = array<i64: 16, 64>}, {pipeline_mode = #tpu.pipeline_mode<synchronous>, transform_indices = @transform_11, window_bounds = array<i64: 1, 64>}, {pipeline_mode = #tpu.pipeline_mode<synchronous>, transform_indices = @transform_12, window_bounds = array<i64: 64, 128>}, {pipeline_mode = #tpu.pipeline_mode<synchronous>, transform_indices = @transform_13, window_bounds = array<i64: 1, 128>}, {pipeline_mode = #tpu.pipeline_mode<synchronous>, transform_indices = @transform_14, window_bounds = array<i64: 8, 8>}, {pipeline_mode = #tpu.pipeline_mode<synchronous>, transform_indices = @transform_15, window_bounds = array<i64: 8, 8>}, {pipeline_mode = #tpu.pipeline_mode<synchronous>, transform_indices = @transform_16, window_bounds = array<i64: 8, 128>}]} {
    %c0 = arith.constant 0 : index
    %c0_0 = arith.constant 0 : index
    %0 = vector.load %arg1[%c0, %c0_0] : memref<8x128xf32, #tpu.memory_space<vmem>>, vector<8x128xf32>
    %c0_1 = arith.constant 0 : index
    %c0_2 = arith.constant 0 : index
    %1 = vector.load %arg3[%c0_1, %c0_2] : memref<128x64xf32, #tpu.memory_space<vmem>>, vector<128x64xf32>
    %cst = arith.constant dense<0.000000e+00> : vector<8x64xf32>
    %2 = tpu.matmul %0, %1, %cst {dimension_numbers = #tpu.dot_dimension_numbers<[1], [0], [0], [1], [0, 0, 1, 1], [], []>} : vector<8x128xf32>, vector<128x64xf32>, vector<8x64xf32> -> vector<8x64xf32>
    %c0_3 = arith.constant 0 : index
    %c0_4 = arith.constant 0 : index
    %3 = vector.load %arg4[%c0_3, %c0_4] : memref<1x64xf32, #tpu.memory_space<vmem>>, vector<1x64xf32>
    %4 = vector.broadcast %3 : vector<1x64xf32> to vector<8x64xf32>
    %5 = arith.addf %2, %4 : vector<8x64xf32>
    %cst_5 = arith.constant 0.000000e+00 : f32
    %6 = vector.broadcast %cst_5 : f32 to vector<8x64xf32>
    %7 = arith.maximumf %5, %6 : vector<8x64xf32>
    %c0_6 = arith.constant 0 : index
    %c0_7 = arith.constant 0 : index
    %8 = vector.load %arg5[%c0_6, %c0_7] : memref<64x16xf32, #tpu.memory_space<vmem>>, vector<64x16xf32>
    %cst_8 = arith.constant dense<0.000000e+00> : vector<8x16xf32>
    %9 = tpu.matmul %7, %8, %cst_8 {dimension_numbers = #tpu.dot_dimension_numbers<[1], [0], [0], [1], [0, 0, 1, 1], [], []>} : vector<8x64xf32>, vector<64x16xf32>, vector<8x16xf32> -> vector<8x16xf32>
    %c0_9 = arith.constant 0 : index
    %c0_10 = arith.constant 0 : index
    %10 = vector.load %arg7[%c0_9, %c0_10] : memref<1x16xf32, #tpu.memory_space<vmem>>, vector<1x16xf32>
    %11 = vector.broadcast %10 : vector<1x16xf32> to vector<8x16xf32>
    %12 = arith.addf %9, %11 : vector<8x16xf32>
    %cst_11 = arith.constant 0.000000e+00 : f32
    %13 = vector.broadcast %cst_11 : f32 to vector<2x16xf32>
    %14 = vector.extract_strided_slice %12 {offsets = [0, 0], sizes = [2, 16], strides = [1, 1]} : vector<8x16xf32> to vector<2x16xf32>
    %c0_12 = arith.constant 0 : index
    %c0_13 = arith.constant 0 : index
    %15 = vector.load %arg6[%c0_12, %c0_13] : memref<16x16xf32, #tpu.memory_space<vmem>>, vector<16x16xf32>
    %cst_14 = arith.constant dense<0.000000e+00> : vector<2x16xf32>
    %16 = tpu.matmul %13, %15, %cst_14 {dimension_numbers = #tpu.dot_dimension_numbers<[1], [0], [0], [1], [0, 0, 1, 1], [], []>} : vector<2x16xf32>, vector<16x16xf32>, vector<2x16xf32> -> vector<2x16xf32>
    %17 = arith.addf %14, %16 : vector<2x16xf32>
    %18 = math.tanh %17 : vector<2x16xf32>
    %19 = vector.extract_strided_slice %12 {offsets = [2, 0], sizes = [2, 16], strides = [1, 1]} : vector<8x16xf32> to vector<2x16xf32>
    %c0_15 = arith.constant 0 : index
    %c0_16 = arith.constant 0 : index
    %20 = vector.load %arg6[%c0_15, %c0_16] : memref<16x16xf32, #tpu.memory_space<vmem>>, vector<16x16xf32>
    %cst_17 = arith.constant dense<0.000000e+00> : vector<2x16xf32>
    %21 = tpu.matmul %18, %20, %cst_17 {dimension_numbers = #tpu.dot_dimension_numbers<[1], [0], [0], [1], [0, 0, 1, 1], [], []>} : vector<2x16xf32>, vector<16x16xf32>, vector<2x16xf32> -> vector<2x16xf32>
    %22 = arith.addf %19, %21 : vector<2x16xf32>
    %23 = math.tanh %22 : vector<2x16xf32>
    %24 = vector.extract_strided_slice %12 {offsets = [4, 0], sizes = [2, 16], strides = [1, 1]} : vector<8x16xf32> to vector<2x16xf32>
    %c0_18 = arith.constant 0 : index
    %c0_19 = arith.constant 0 : index
    %25 = vector.load %arg6[%c0_18, %c0_19] : memref<16x16xf32, #tpu.memory_space<vmem>>, vector<16x16xf32>
    %cst_20 = arith.constant dense<0.000000e+00> : vector<2x16xf32>
    %26 = tpu.matmul %23, %25, %cst_20 {dimension_numbers = #tpu.dot_dimension_numbers<[1], [0], [0], [1], [0, 0, 1, 1], [], []>} : vector<2x16xf32>, vector<16x16xf32>, vector<2x16xf32> -> vector<2x16xf32>
    %27 = arith.addf %24, %26 : vector<2x16xf32>
    %28 = math.tanh %27 : vector<2x16xf32>
    %29 = vector.extract_strided_slice %12 {offsets = [6, 0], sizes = [2, 16], strides = [1, 1]} : vector<8x16xf32> to vector<2x16xf32>
    %c0_21 = arith.constant 0 : index
    %c0_22 = arith.constant 0 : index
    %30 = vector.load %arg6[%c0_21, %c0_22] : memref<16x16xf32, #tpu.memory_space<vmem>>, vector<16x16xf32>
    %cst_23 = arith.constant dense<0.000000e+00> : vector<2x16xf32>
    %31 = tpu.matmul %28, %30, %cst_23 {dimension_numbers = #tpu.dot_dimension_numbers<[1], [0], [0], [1], [0, 0, 1, 1], [], []>} : vector<2x16xf32>, vector<16x16xf32>, vector<2x16xf32> -> vector<2x16xf32>
    %32 = arith.addf %29, %31 : vector<2x16xf32>
    %33 = math.tanh %32 : vector<2x16xf32>
    %34 = tpu.concatenate %18, %23, %28, %33 in 0 : vector<2x16xf32>, vector<2x16xf32>, vector<2x16xf32>, vector<2x16xf32> -> vector<8x16xf32>
    %35 = vector.extract_strided_slice %34 {offsets = [0, 0], sizes = [8, 8], strides = [1, 1]} : vector<8x16xf32> to vector<8x8xf32>
    %36 = vector.extract_strided_slice %34 {offsets = [0, 8], sizes = [8, 8], strides = [1, 1]} : vector<8x16xf32> to vector<8x8xf32>
    %c0_24 = arith.constant 0 : index
    %c0_25 = arith.constant 0 : index
    %37 = vector.load %arg15[%c0_24, %c0_25] : memref<8x8xf32, #tpu.memory_space<vmem>>, vector<8x8xf32>
    tpu.vector_store %arg15[%c0_24, %c0_25], %35 {strides = array<i32>} : memref<8x8xf32, #tpu.memory_space<vmem>>, vector<8x8xf32>,
    %c0_26 = arith.constant 0 : index
    %c0_27 = arith.constant 0 : index
    %38 = vector.load %arg16[%c0_26, %c0_27] : memref<8x8xf32, #tpu.memory_space<vmem>>, vector<8x8xf32>
    tpu.vector_store %arg16[%c0_26, %c0_27], %36 {strides = array<i32>} : memref<8x8xf32, #tpu.memory_space<vmem>>, vector<8x8xf32>,
    %c0_28 = arith.constant 0 : index
    %c0_29 = arith.constant 0 : index
    %39 = vector.load %arg2[%c0_28, %c0_29] : memref<8x8xf32, #tpu.memory_space<vmem>>, vector<8x8xf32>
    %cst_30 = arith.constant 5.000000e-01 : f32
    %40 = vector.broadcast %cst_30 : f32 to vector<8x8xf32>
    %41 = arith.mulf %40, %36 : vector<8x8xf32>
    %42 = math.exp %41 : vector<8x8xf32>
    %43 = arith.mulf %39, %42 : vector<8x8xf32>
    %44 = arith.addf %35, %43 : vector<8x8xf32>
    %c0_31 = arith.constant 0 : index
    %c0_32 = arith.constant 0 : index
    %45 = vector.load %arg8[%c0_31, %c0_32] : memref<8x16xf32, #tpu.memory_space<vmem>>, vector<8x16xf32>
    %cst_33 = arith.constant dense<0.000000e+00> : vector<8x16xf32>
    %46 = tpu.matmul %44, %45, %cst_33 {dimension_numbers = #tpu.dot_dimension_numbers<[1], [0], [0], [1], [0, 0, 1, 1], [], []>} : vector<8x8xf32>, vector<8x16xf32>, vector<8x16xf32> -> vector<8x16xf32>
    %c0_34 = arith.constant 0 : index
    %c0_35 = arith.constant 0 : index
    %47 = vector.load %arg10[%c0_34, %c0_35] : memref<1x16xf32, #tpu.memory_space<vmem>>, vector<1x16xf32>
    %48 = vector.broadcast %47 : vector<1x16xf32> to vector<8x16xf32>
    %49 = arith.addf %46, %48 : vector<8x16xf32>
    %cst_36 = arith.constant 0.000000e+00 : f32
    %50 = vector.broadcast %cst_36 : f32 to vector<2x16xf32>
    %51 = vector.extract_strided_slice %49 {offsets = [0, 0], sizes = [2, 16], strides = [1, 1]} : vector<8x16xf32> to vector<2x16xf32>
    %c0_37 = arith.constant 0 : index
    %c0_38 = arith.constant 0 : index
    %52 = vector.load %arg9[%c0_37, %c0_38] : memref<16x16xf32, #tpu.memory_space<vmem>>, vector<16x16xf32>
    %cst_39 = arith.constant dense<0.000000e+00> : vector<2x16xf32>
    %53 = tpu.matmul %50, %52, %cst_39 {dimension_numbers = #tpu.dot_dimension_numbers<[1], [0], [0], [1], [0, 0, 1, 1], [], []>} : vector<2x16xf32>, vector<16x16xf32>, vector<2x16xf32> -> vector<2x16xf32>
    %54 = arith.addf %51, %53 : vector<2x16xf32>
    %55 = math.tanh %54 : vector<2x16xf32>
    %56 = vector.extract_strided_slice %49 {offsets = [2, 0], sizes = [2, 16], strides = [1, 1]} : vector<8x16xf32> to vector<2x16xf32>
    %c0_40 = arith.constant 0 : index
    %c0_41 = arith.constant 0 : index
    %57 = vector.load %arg9[%c0_40, %c0_41] : memref<16x16xf32, #tpu.memory_space<vmem>>, vector<16x16xf32>
    %cst_42 = arith.constant dense<0.000000e+00> : vector<2x16xf32>
    %58 = tpu.matmul %55, %57, %cst_42 {dimension_numbers = #tpu.dot_dimension_numbers<[1], [0], [0], [1], [0, 0, 1, 1], [], []>} : vector<2x16xf32>, vector<16x16xf32>, vector<2x16xf32> -> vector<2x16xf32>
    %59 = arith.addf %56, %58 : vector<2x16xf32>
    %60 = math.tanh %59 : vector<2x16xf32>
    %61 = vector.extract_strided_slice %49 {offsets = [4, 0], sizes = [2, 16], strides = [1, 1]} : vector<8x16xf32> to vector<2x16xf32>
    %c0_43 = arith.constant 0 : index
    %c0_44 = arith.constant 0 : index
    %62 = vector.load %arg9[%c0_43, %c0_44] : memref<16x16xf32, #tpu.memory_space<vmem>>, vector<16x16xf32>
    %cst_45 = arith.constant dense<0.000000e+00> : vector<2x16xf32>
    %63 = tpu.matmul %60, %62, %cst_45 {dimension_numbers = #tpu.dot_dimension_numbers<[1], [0], [0], [1], [0, 0, 1, 1], [], []>} : vector<2x16xf32>, vector<16x16xf32>, vector<2x16xf32> -> vector<2x16xf32>
    %64 = arith.addf %61, %63 : vector<2x16xf32>
    %65 = math.tanh %64 : vector<2x16xf32>
    %66 = vector.extract_strided_slice %49 {offsets = [6, 0], sizes = [2, 16], strides = [1, 1]} : vector<8x16xf32> to vector<2x16xf32>
    %c0_46 = arith.constant 0 : index
    %c0_47 = arith.constant 0 : index
    %67 = vector.load %arg9[%c0_46, %c0_47] : memref<16x16xf32, #tpu.memory_space<vmem>>, vector<16x16xf32>
    %cst_48 = arith.constant dense<0.000000e+00> : vector<2x16xf32>
    %68 = tpu.matmul %65, %67, %cst_48 {dimension_numbers = #tpu.dot_dimension_numbers<[1], [0], [0], [1], [0, 0, 1, 1], [], []>} : vector<2x16xf32>, vector<16x16xf32>, vector<2x16xf32> -> vector<2x16xf32>
    %69 = arith.addf %66, %68 : vector<2x16xf32>
    %70 = math.tanh %69 : vector<2x16xf32>
    %71 = tpu.concatenate %55, %60, %65, %70 in 0 : vector<2x16xf32>, vector<2x16xf32>, vector<2x16xf32>, vector<2x16xf32> -> vector<8x16xf32>
    %c0_49 = arith.constant 0 : index
    %c0_50 = arith.constant 0 : index
    %72 = vector.load %arg11[%c0_49, %c0_50] : memref<16x64xf32, #tpu.memory_space<vmem>>, vector<16x64xf32>
    %cst_51 = arith.constant dense<0.000000e+00> : vector<8x64xf32>
    %73 = tpu.matmul %71, %72, %cst_51 {dimension_numbers = #tpu.dot_dimension_numbers<[1], [0], [0], [1], [0, 0, 1, 1], [], []>} : vector<8x16xf32>, vector<16x64xf32>, vector<8x64xf32> -> vector<8x64xf32>
    %c0_52 = arith.constant 0 : index
    %c0_53 = arith.constant 0 : index
    %74 = vector.load %arg12[%c0_52, %c0_53] : memref<1x64xf32, #tpu.memory_space<vmem>>, vector<1x64xf32>
    %75 = vector.broadcast %74 : vector<1x64xf32> to vector<8x64xf32>
    %76 = arith.addf %73, %75 : vector<8x64xf32>
    %c0_54 = arith.constant 0 : index
    %c0_55 = arith.constant 0 : index
    %77 = vector.load %arg13[%c0_54, %c0_55] : memref<64x128xf32, #tpu.memory_space<vmem>>, vector<64x128xf32>
    %cst_56 = arith.constant dense<0.000000e+00> : vector<8x128xf32>
    %78 = tpu.matmul %76, %77, %cst_56 {dimension_numbers = #tpu.dot_dimension_numbers<[1], [0], [0], [1], [0, 0, 1, 1], [], []>} : vector<8x64xf32>, vector<64x128xf32>, vector<8x128xf32> -> vector<8x128xf32>
    %c0_57 = arith.constant 0 : index
    %c0_58 = arith.constant 0 : index
    %79 = vector.load %arg14[%c0_57, %c0_58] : memref<1x128xf32, #tpu.memory_space<vmem>>, vector<1x128xf32>
    %80 = vector.broadcast %79 : vector<1x128xf32> to vector<8x128xf32>
    %81 = arith.addf %78, %80 : vector<8x128xf32>
    %cst_59 = arith.constant 0.000000e+00 : f32
    %82 = vector.broadcast %cst_59 : f32 to vector<8x128xf32>
    %83 = arith.maximumf %81, %82 : vector<8x128xf32>
    %c0_60 = arith.constant 0 : index
    %c0_61 = arith.constant 0 : index
    %84 = vector.load %arg17[%c0_60, %c0_61] : memref<8x128xf32, #tpu.memory_space<vmem>>, vector<8x128xf32>
    tpu.vector_store %arg17[%c0_60, %c0_61], %83 {strides = array<i32>} : memref<8x128xf32, #tpu.memory_space<vmem>>, vector<8x128xf32>,
    return
  }
  func.func @transform_0(%arg0: i32) -> (i32, i32) {
    %c0_i32 = arith.constant 0 : i32
    %c0_i32_0 = arith.constant 0 : i32
    %c0_i32_1 = arith.constant 0 : i32
    return %c0_i32, %c0_i32_0 : i32, i32
  }
  func.func @transform_1(%arg0: i32) -> (i32, i32) {
    %c0_i32 = arith.constant 0 : i32
    %c0_i32_0 = arith.constant 0 : i32
    %c0_i32_1 = arith.constant 0 : i32
    return %c0_i32, %c0_i32_0 : i32, i32
  }
  func.func @transform_2(%arg0: i32) -> (i32, i32) {
    %c0_i32 = arith.constant 0 : i32
    %c0_i32_0 = arith.constant 0 : i32
    %c0_i32_1 = arith.constant 0 : i32
    return %c0_i32, %c0_i32_0 : i32, i32
  }
  func.func @transform_3(%arg0: i32) -> (i32, i32) {
    %c0_i32 = arith.constant 0 : i32
    %c0_i32_0 = arith.constant 0 : i32
    %c0_i32_1 = arith.constant 0 : i32
    return %c0_i32, %c0_i32_0 : i32, i32
  }
  func.func @transform_4(%arg0: i32) -> (i32, i32) {
    %c0_i32 = arith.constant 0 : i32
    %c0_i32_0 = arith.constant 0 : i32
    %c0_i32_1 = arith.constant 0 : i32
    return %c0_i32, %c0_i32_0 : i32, i32
  }
  func.func @transform_5(%arg0: i32) -> (i32, i32) {
    %c0_i32 = arith.constant 0 : i32
    %c0_i32_0 = arith.constant 0 : i32
    %c0_i32_1 = arith.constant 0 : i32
    return %c0_i32, %c0_i32_0 : i32, i32
  }
  func.func @transform_6(%arg0: i32) -> (i32, i32) {
    %c0_i32 = arith.constant 0 : i32
    %c0_i32_0 = arith.constant 0 : i32
    %c0_i32_1 = arith.constant 0 : i32
    return %c0_i32, %c0_i32_0 : i32, i32
  }
  func.func @transform_7(%arg0: i32) -> (i32, i32) {
    %c0_i32 = arith.constant 0 : i32
    %c0_i32_0 = arith.constant 0 : i32
    %c0_i32_1 = arith.constant 0 : i32
    return %c0_i32, %c0_i32_0 : i32, i32
  }
  func.func @transform_8(%arg0: i32) -> (i32, i32) {
    %c0_i32 = arith.constant 0 : i32
    %c0_i32_0 = arith.constant 0 : i32
    %c0_i32_1 = arith.constant 0 : i32
    return %c0_i32, %c0_i32_0 : i32, i32
  }
  func.func @transform_9(%arg0: i32) -> (i32, i32) {
    %c0_i32 = arith.constant 0 : i32
    %c0_i32_0 = arith.constant 0 : i32
    %c0_i32_1 = arith.constant 0 : i32
    return %c0_i32, %c0_i32_0 : i32, i32
  }
  func.func @transform_10(%arg0: i32) -> (i32, i32) {
    %c0_i32 = arith.constant 0 : i32
    %c0_i32_0 = arith.constant 0 : i32
    %c0_i32_1 = arith.constant 0 : i32
    return %c0_i32, %c0_i32_0 : i32, i32
  }
  func.func @transform_11(%arg0: i32) -> (i32, i32) {
    %c0_i32 = arith.constant 0 : i32
    %c0_i32_0 = arith.constant 0 : i32
    %c0_i32_1 = arith.constant 0 : i32
    return %c0_i32, %c0_i32_0 : i32, i32
  }
  func.func @transform_12(%arg0: i32) -> (i32, i32) {
    %c0_i32 = arith.constant 0 : i32
    %c0_i32_0 = arith.constant 0 : i32
    %c0_i32_1 = arith.constant 0 : i32
    return %c0_i32, %c0_i32_0 : i32, i32
  }
  func.func @transform_13(%arg0: i32) -> (i32, i32) {
    %c0_i32 = arith.constant 0 : i32
    %c0_i32_0 = arith.constant 0 : i32
    %c0_i32_1 = arith.constant 0 : i32
    return %c0_i32, %c0_i32_0 : i32, i32
  }
  func.func @transform_14(%arg0: i32) -> (i32, i32) {
    %c0_i32 = arith.constant 0 : i32
    %c0_i32_0 = arith.constant 0 : i32
    %c0_i32_1 = arith.constant 0 : i32
    return %c0_i32, %c0_i32_0 : i32, i32
  }
  func.func @transform_15(%arg0: i32) -> (i32, i32) {
    %c0_i32 = arith.constant 0 : i32
    %c0_i32_0 = arith.constant 0 : i32
    %c0_i32_1 = arith.constant 0 : i32
    return %c0_i32, %c0_i32_0 : i32, i32
  }
  func.func @transform_16(%arg0: i32) -> (i32, i32) {
    %c0_i32 = arith.constant 0 : i32
    %c0_i32_0 = arith.constant 0 : i32
    %c0_i32_1 = arith.constant 0 : i32
    return %c0_i32, %c0_i32_0 : i32, i32
  }
}

module attributes {stable_mosaic.version = 11 : i64} {
  func.func @_gemm_kernel(%arg0: i32, %arg1: memref<64x288xbf16, #tpu.memory_space<vmem>>, %arg2: memref<288x32xbf16, #tpu.memory_space<vmem>>, %arg3: memref<64x1xf32, #tpu.memory_space<vmem>>, %arg4: memref<64x32xf32, #tpu.memory_space<vmem>>) attributes {dimension_semantics = [#tpu.dimension_semantics<parallel>], iteration_bounds = array<i64: 1>, scalar_prefetch = 0 : i64, scratch_operands = 0 : i64, tpu.core_type = #tpu.core_type<tc>, window_params = [{pipeline_mode = #tpu.pipeline_mode<synchronous>, transform_indices = @transform_0, window_bounds = array<i64: 64, 288>}, {transform_indices = @transform_1, window_bounds = array<i64: 288, 32>}, {pipeline_mode = #tpu.pipeline_mode<synchronous>, transform_indices = @transform_2, window_bounds = array<i64: 64, 1>}, {transform_indices = @transform_3, window_bounds = array<i64: 64, 32>}]} {
    %c0 = arith.constant 0 : index
    %c0_0 = arith.constant 0 : index
    %0 = vector.load %arg1[%c0, %c0_0] : memref<64x288xbf16, #tpu.memory_space<vmem>>, vector<64x288xbf16>
    %c0_1 = arith.constant 0 : index
    %c0_2 = arith.constant 0 : index
    %1 = vector.load %arg2[%c0_1, %c0_2] : memref<288x32xbf16, #tpu.memory_space<vmem>>, vector<288x32xbf16>
    %cst = arith.constant dense<0.000000e+00> : vector<64x32xf32>
    %2 = tpu.matmul %0, %1, %cst {dimension_numbers = #tpu.dot_dimension_numbers<[1], [0], [0], [1], [0, 0, 1, 1], [], []>} : vector<64x288xbf16>, vector<288x32xbf16>, vector<64x32xf32> -> vector<64x32xf32>
    %c0_3 = arith.constant 0 : index
    %c0_4 = arith.constant 0 : index
    %3 = vector.load %arg3[%c0_3, %c0_4] : memref<64x1xf32, #tpu.memory_space<vmem>>, vector<64x1xf32>
    %4 = vector.broadcast %3 : vector<64x1xf32> to vector<64x32xf32>
    %5 = arith.addf %2, %4 : vector<64x32xf32>
    %cst_5 = arith.constant 0.000000e+00 : f32
    %6 = vector.broadcast %cst_5 : f32 to vector<64x32xf32>
    %7 = arith.maximumf %5, %6 : vector<64x32xf32>
    %c0_6 = arith.constant 0 : index
    %c0_7 = arith.constant 0 : index
    %8 = vector.load %arg4[%c0_6, %c0_7] : memref<64x32xf32, #tpu.memory_space<vmem>>, vector<64x32xf32>
    tpu.vector_store %arg4[%c0_6, %c0_7], %7 {strides = array<i32>} : memref<64x32xf32, #tpu.memory_space<vmem>>, vector<64x32xf32>,
    return
  }
  func.func @transform_0(%arg0: i32) -> (i32, i32) {
    %c0_i32 = arith.constant 0 : i32
    %c0_i32_0 = arith.constant 0 : i32
    %c0_i32_1 = arith.constant 0 : i32
    return %c0_i32, %c0_i32_0 : i32, i32
  }
  func.func @transform_1(%arg0: i32) -> (i32, i32) {
    %c0_i32 = arith.constant 0 : i32
    %c0_i32_0 = arith.constant 0 : i32
    return %c0_i32, %arg0 : i32, i32
  }
  func.func @transform_2(%arg0: i32) -> (i32, i32) {
    %c0_i32 = arith.constant 0 : i32
    %c0_i32_0 = arith.constant 0 : i32
    %c0_i32_1 = arith.constant 0 : i32
    return %c0_i32, %c0_i32_0 : i32, i32
  }
  func.func @transform_3(%arg0: i32) -> (i32, i32) {
    %c0_i32 = arith.constant 0 : i32
    %c0_i32_0 = arith.constant 0 : i32
    return %c0_i32, %arg0 : i32, i32
  }
}

module attributes {stable_mosaic.version = 11 : i64} {
  func.func @_gemm_kernel(%arg0: i32, %arg1: memref<16x144xbf16, #tpu.memory_space<vmem>>, %arg2: memref<144x128xbf16, #tpu.memory_space<vmem>>, %arg3: memref<16x1xf32, #tpu.memory_space<vmem>>, %arg4: memref<16x128xf32, #tpu.memory_space<vmem>>) attributes {dimension_semantics = [#tpu.dimension_semantics<parallel>], iteration_bounds = array<i64: 1>, scalar_prefetch = 0 : i64, scratch_operands = 0 : i64, tpu.core_type = #tpu.core_type<tc>, window_params = [{pipeline_mode = #tpu.pipeline_mode<synchronous>, transform_indices = @transform_0, window_bounds = array<i64: 16, 144>}, {transform_indices = @transform_1, window_bounds = array<i64: 144, 128>}, {pipeline_mode = #tpu.pipeline_mode<synchronous>, transform_indices = @transform_2, window_bounds = array<i64: 16, 1>}, {transform_indices = @transform_3, window_bounds = array<i64: 16, 128>}]} {
    %c0 = arith.constant 0 : index
    %c0_0 = arith.constant 0 : index
    %0 = vector.load %arg1[%c0, %c0_0] : memref<16x144xbf16, #tpu.memory_space<vmem>>, vector<16x144xbf16>
    %c0_1 = arith.constant 0 : index
    %c0_2 = arith.constant 0 : index
    %1 = vector.load %arg2[%c0_1, %c0_2] : memref<144x128xbf16, #tpu.memory_space<vmem>>, vector<144x128xbf16>
    %cst = arith.constant dense<0.000000e+00> : vector<16x128xf32>
    %2 = tpu.matmul %0, %1, %cst {dimension_numbers = #tpu.dot_dimension_numbers<[1], [0], [0], [1], [0, 0, 1, 1], [], []>} : vector<16x144xbf16>, vector<144x128xbf16>, vector<16x128xf32> -> vector<16x128xf32>
    %c0_3 = arith.constant 0 : index
    %c0_4 = arith.constant 0 : index
    %3 = vector.load %arg3[%c0_3, %c0_4] : memref<16x1xf32, #tpu.memory_space<vmem>>, vector<16x1xf32>
    %4 = vector.broadcast %3 : vector<16x1xf32> to vector<16x128xf32>
    %5 = arith.addf %2, %4 : vector<16x128xf32>
    %cst_5 = arith.constant 0.000000e+00 : f32
    %6 = vector.broadcast %cst_5 : f32 to vector<16x128xf32>
    %7 = arith.maximumf %5, %6 : vector<16x128xf32>
    %c0_6 = arith.constant 0 : index
    %c0_7 = arith.constant 0 : index
    %8 = vector.load %arg4[%c0_6, %c0_7] : memref<16x128xf32, #tpu.memory_space<vmem>>, vector<16x128xf32>
    tpu.vector_store %arg4[%c0_6, %c0_7], %7 {strides = array<i32>} : memref<16x128xf32, #tpu.memory_space<vmem>>, vector<16x128xf32>,
    return
  }
  func.func @transform_0(%arg0: i32) -> (i32, i32) {
    %c0_i32 = arith.constant 0 : i32
    %c0_i32_0 = arith.constant 0 : i32
    %c0_i32_1 = arith.constant 0 : i32
    return %c0_i32, %c0_i32_0 : i32, i32
  }
  func.func @transform_1(%arg0: i32) -> (i32, i32) {
    %c0_i32 = arith.constant 0 : i32
    %c0_i32_0 = arith.constant 0 : i32
    return %c0_i32, %arg0 : i32, i32
  }
  func.func @transform_2(%arg0: i32) -> (i32, i32) {
    %c0_i32 = arith.constant 0 : i32
    %c0_i32_0 = arith.constant 0 : i32
    %c0_i32_1 = arith.constant 0 : i32
    return %c0_i32, %c0_i32_0 : i32, i32
  }
  func.func @transform_3(%arg0: i32) -> (i32, i32) {
    %c0_i32 = arith.constant 0 : i32
    %c0_i32_0 = arith.constant 0 : i32
    return %c0_i32, %arg0 : i32, i32
  }
}

module attributes {stable_mosaic.version = 11 : i64} {
  func.func @_gemm_pair_kernel(%arg0: i32, %arg1: memref<34x144xbf16, #tpu.memory_space<vmem>>, %arg2: memref<144x128xbf16, #tpu.memory_space<vmem>>, %arg3: memref<34x1xf32, #tpu.memory_space<vmem>>, %arg4: memref<2x128xf32, #tpu.memory_space<vmem>>, %arg5: memref<32x128xf32, #tpu.memory_space<vmem>>) attributes {dimension_semantics = [#tpu.dimension_semantics<parallel>], iteration_bounds = array<i64: 1>, scalar_prefetch = 0 : i64, scratch_operands = 0 : i64, tpu.core_type = #tpu.core_type<tc>, window_params = [{pipeline_mode = #tpu.pipeline_mode<synchronous>, transform_indices = @transform_0, window_bounds = array<i64: 34, 144>}, {pipeline_mode = #tpu.pipeline_mode<synchronous>, transform_indices = @transform_1, window_bounds = array<i64: 144, 128>}, {pipeline_mode = #tpu.pipeline_mode<synchronous>, transform_indices = @transform_2, window_bounds = array<i64: 34, 1>}, {pipeline_mode = #tpu.pipeline_mode<synchronous>, transform_indices = @transform_3, window_bounds = array<i64: 2, 128>}, {pipeline_mode = #tpu.pipeline_mode<synchronous>, transform_indices = @transform_4, window_bounds = array<i64: 32, 128>}]} {
    %c0 = arith.constant 0 : index
    %c0_0 = arith.constant 0 : index
    %0 = vector.load %arg1[%c0, %c0_0] : memref<34x144xbf16, #tpu.memory_space<vmem>>, vector<34x144xbf16>
    %c0_1 = arith.constant 0 : index
    %c0_2 = arith.constant 0 : index
    %1 = vector.load %arg2[%c0_1, %c0_2] : memref<144x128xbf16, #tpu.memory_space<vmem>>, vector<144x128xbf16>
    %cst = arith.constant dense<0.000000e+00> : vector<34x128xf32>
    %2 = tpu.matmul %0, %1, %cst {dimension_numbers = #tpu.dot_dimension_numbers<[1], [0], [0], [1], [0, 0, 1, 1], [], []>} : vector<34x144xbf16>, vector<144x128xbf16>, vector<34x128xf32> -> vector<34x128xf32>
    %c0_3 = arith.constant 0 : index
    %c0_4 = arith.constant 0 : index
    %3 = vector.load %arg3[%c0_3, %c0_4] : memref<34x1xf32, #tpu.memory_space<vmem>>, vector<34x1xf32>
    %4 = vector.broadcast %3 : vector<34x1xf32> to vector<34x128xf32>
    %5 = arith.addf %2, %4 : vector<34x128xf32>
    %6 = vector.extract_strided_slice %5 {offsets = [0, 0], sizes = [2, 128], strides = [1, 1]} : vector<34x128xf32> to vector<2x128xf32>
    %7 = math.tanh %6 : vector<2x128xf32>
    %8 = vector.extract_strided_slice %5 {offsets = [2, 0], sizes = [32, 128], strides = [1, 1]} : vector<34x128xf32> to vector<32x128xf32>
    %cst_5 = arith.constant 0.000000e+00 : f32
    %9 = vector.broadcast %cst_5 : f32 to vector<32x128xf32>
    %10 = arith.maximumf %8, %9 : vector<32x128xf32>
    %c0_6 = arith.constant 0 : index
    %c0_7 = arith.constant 0 : index
    %11 = vector.load %arg4[%c0_6, %c0_7] : memref<2x128xf32, #tpu.memory_space<vmem>>, vector<2x128xf32>
    tpu.vector_store %arg4[%c0_6, %c0_7], %7 {strides = array<i32>} : memref<2x128xf32, #tpu.memory_space<vmem>>, vector<2x128xf32>,
    %c0_8 = arith.constant 0 : index
    %c0_9 = arith.constant 0 : index
    %12 = vector.load %arg5[%c0_8, %c0_9] : memref<32x128xf32, #tpu.memory_space<vmem>>, vector<32x128xf32>
    tpu.vector_store %arg5[%c0_8, %c0_9], %10 {strides = array<i32>} : memref<32x128xf32, #tpu.memory_space<vmem>>, vector<32x128xf32>,
    return
  }
  func.func @transform_0(%arg0: i32) -> (i32, i32) {
    %c0_i32 = arith.constant 0 : i32
    %c0_i32_0 = arith.constant 0 : i32
    %c0_i32_1 = arith.constant 0 : i32
    return %c0_i32, %c0_i32_0 : i32, i32
  }
  func.func @transform_1(%arg0: i32) -> (i32, i32) {
    %c0_i32 = arith.constant 0 : i32
    %c0_i32_0 = arith.constant 0 : i32
    %c0_i32_1 = arith.constant 0 : i32
    return %c0_i32, %c0_i32_0 : i32, i32
  }
  func.func @transform_2(%arg0: i32) -> (i32, i32) {
    %c0_i32 = arith.constant 0 : i32
    %c0_i32_0 = arith.constant 0 : i32
    %c0_i32_1 = arith.constant 0 : i32
    return %c0_i32, %c0_i32_0 : i32, i32
  }
  func.func @transform_3(%arg0: i32) -> (i32, i32) {
    %c0_i32 = arith.constant 0 : i32
    %c0_i32_0 = arith.constant 0 : i32
    %c0_i32_1 = arith.constant 0 : i32
    return %c0_i32, %c0_i32_0 : i32, i32
  }
  func.func @transform_4(%arg0: i32) -> (i32, i32) {
    %c0_i32 = arith.constant 0 : i32
    %c0_i32_0 = arith.constant 0 : i32
    %c0_i32_1 = arith.constant 0 : i32
    return %c0_i32, %c0_i32_0 : i32, i32
  }
}

module attributes {stable_mosaic.version = 11 : i64} {
  func.func @_gemm_kernel(%arg0: i32, %arg1: memref<8x72xbf16, #tpu.memory_space<vmem>>, %arg2: memref<72x512xbf16, #tpu.memory_space<vmem>>, %arg3: memref<8x1xf32, #tpu.memory_space<vmem>>, %arg4: memref<8x512xf32, #tpu.memory_space<vmem>>) attributes {dimension_semantics = [#tpu.dimension_semantics<parallel>], iteration_bounds = array<i64: 1>, scalar_prefetch = 0 : i64, scratch_operands = 0 : i64, tpu.core_type = #tpu.core_type<tc>, window_params = [{pipeline_mode = #tpu.pipeline_mode<synchronous>, transform_indices = @transform_0, window_bounds = array<i64: 8, 72>}, {transform_indices = @transform_1, window_bounds = array<i64: 72, 512>}, {pipeline_mode = #tpu.pipeline_mode<synchronous>, transform_indices = @transform_2, window_bounds = array<i64: 8, 1>}, {transform_indices = @transform_3, window_bounds = array<i64: 8, 512>}]} {
    %c0 = arith.constant 0 : index
    %c0_0 = arith.constant 0 : index
    %0 = vector.load %arg1[%c0, %c0_0] : memref<8x72xbf16, #tpu.memory_space<vmem>>, vector<8x72xbf16>
    %c0_1 = arith.constant 0 : index
    %c0_2 = arith.constant 0 : index
    %1 = vector.load %arg2[%c0_1, %c0_2] : memref<72x512xbf16, #tpu.memory_space<vmem>>, vector<72x512xbf16>
    %cst = arith.constant dense<0.000000e+00> : vector<8x512xf32>
    %2 = tpu.matmul %0, %1, %cst {dimension_numbers = #tpu.dot_dimension_numbers<[1], [0], [0], [1], [0, 0, 1, 1], [], []>} : vector<8x72xbf16>, vector<72x512xbf16>, vector<8x512xf32> -> vector<8x512xf32>
    %c0_3 = arith.constant 0 : index
    %c0_4 = arith.constant 0 : index
    %3 = vector.load %arg3[%c0_3, %c0_4] : memref<8x1xf32, #tpu.memory_space<vmem>>, vector<8x1xf32>
    %4 = vector.broadcast %3 : vector<8x1xf32> to vector<8x512xf32>
    %5 = arith.addf %2, %4 : vector<8x512xf32>
    %cst_5 = arith.constant 0.000000e+00 : f32
    %6 = vector.broadcast %cst_5 : f32 to vector<8x512xf32>
    %7 = arith.maximumf %5, %6 : vector<8x512xf32>
    %c0_6 = arith.constant 0 : index
    %c0_7 = arith.constant 0 : index
    %8 = vector.load %arg4[%c0_6, %c0_7] : memref<8x512xf32, #tpu.memory_space<vmem>>, vector<8x512xf32>
    tpu.vector_store %arg4[%c0_6, %c0_7], %7 {strides = array<i32>} : memref<8x512xf32, #tpu.memory_space<vmem>>, vector<8x512xf32>,
    return
  }
  func.func @transform_0(%arg0: i32) -> (i32, i32) {
    %c0_i32 = arith.constant 0 : i32
    %c0_i32_0 = arith.constant 0 : i32
    %c0_i32_1 = arith.constant 0 : i32
    return %c0_i32, %c0_i32_0 : i32, i32
  }
  func.func @transform_1(%arg0: i32) -> (i32, i32) {
    %c0_i32 = arith.constant 0 : i32
    %c0_i32_0 = arith.constant 0 : i32
    return %c0_i32, %arg0 : i32, i32
  }
  func.func @transform_2(%arg0: i32) -> (i32, i32) {
    %c0_i32 = arith.constant 0 : i32
    %c0_i32_0 = arith.constant 0 : i32
    %c0_i32_1 = arith.constant 0 : i32
    return %c0_i32, %c0_i32_0 : i32, i32
  }
  func.func @transform_3(%arg0: i32) -> (i32, i32) {
    %c0_i32 = arith.constant 0 : i32
    %c0_i32_0 = arith.constant 0 : i32
    return %c0_i32, %arg0 : i32, i32
  }
}

module attributes {stable_mosaic.version = 11 : i64} {
  func.func @_gemm_pair_kernel(%arg0: i32, %arg1: memref<34x72xbf16, #tpu.memory_space<vmem>>, %arg2: memref<72x512xbf16, #tpu.memory_space<vmem>>, %arg3: memref<34x1xf32, #tpu.memory_space<vmem>>, %arg4: memref<2x512xf32, #tpu.memory_space<vmem>>, %arg5: memref<2x512xf32, #tpu.memory_space<vmem>>, %arg6: memref<32x512xf32, #tpu.memory_space<vmem>>) attributes {dimension_semantics = [#tpu.dimension_semantics<parallel>], iteration_bounds = array<i64: 1>, scalar_prefetch = 0 : i64, scratch_operands = 0 : i64, tpu.core_type = #tpu.core_type<tc>, window_params = [{pipeline_mode = #tpu.pipeline_mode<synchronous>, transform_indices = @transform_0, window_bounds = array<i64: 34, 72>}, {pipeline_mode = #tpu.pipeline_mode<synchronous>, transform_indices = @transform_1, window_bounds = array<i64: 72, 512>}, {pipeline_mode = #tpu.pipeline_mode<synchronous>, transform_indices = @transform_2, window_bounds = array<i64: 34, 1>}, {pipeline_mode = #tpu.pipeline_mode<synchronous>, transform_indices = @transform_3, window_bounds = array<i64: 2, 512>}, {pipeline_mode = #tpu.pipeline_mode<synchronous>, transform_indices = @transform_4, window_bounds = array<i64: 2, 512>}, {pipeline_mode = #tpu.pipeline_mode<synchronous>, transform_indices = @transform_5, window_bounds = array<i64: 32, 512>}]} {
    %c0 = arith.constant 0 : index
    %c0_0 = arith.constant 0 : index
    %0 = vector.load %arg1[%c0, %c0_0] : memref<34x72xbf16, #tpu.memory_space<vmem>>, vector<34x72xbf16>
    %c0_1 = arith.constant 0 : index
    %c0_2 = arith.constant 0 : index
    %1 = vector.load %arg2[%c0_1, %c0_2] : memref<72x512xbf16, #tpu.memory_space<vmem>>, vector<72x512xbf16>
    %cst = arith.constant dense<0.000000e+00> : vector<34x512xf32>
    %2 = tpu.matmul %0, %1, %cst {dimension_numbers = #tpu.dot_dimension_numbers<[1], [0], [0], [1], [0, 0, 1, 1], [], []>} : vector<34x72xbf16>, vector<72x512xbf16>, vector<34x512xf32> -> vector<34x512xf32>
    %c0_3 = arith.constant 0 : index
    %c0_4 = arith.constant 0 : index
    %3 = vector.load %arg3[%c0_3, %c0_4] : memref<34x1xf32, #tpu.memory_space<vmem>>, vector<34x1xf32>
    %4 = vector.broadcast %3 : vector<34x1xf32> to vector<34x512xf32>
    %5 = arith.addf %2, %4 : vector<34x512xf32>
    %6 = vector.extract_strided_slice %5 {offsets = [0, 0], sizes = [2, 512], strides = [1, 1]} : vector<34x512xf32> to vector<2x512xf32>
    %7 = math.tanh %6 : vector<2x512xf32>
    %8 = vector.extract_strided_slice %5 {offsets = [2, 0], sizes = [32, 512], strides = [1, 1]} : vector<34x512xf32> to vector<32x512xf32>
    %cst_5 = arith.constant 0.000000e+00 : f32
    %9 = vector.broadcast %cst_5 : f32 to vector<32x512xf32>
    %10 = arith.maximumf %8, %9 : vector<32x512xf32>
    %c0_6 = arith.constant 0 : index
    %c0_7 = arith.constant 0 : index
    %11 = vector.load %arg4[%c0_6, %c0_7] : memref<2x512xf32, #tpu.memory_space<vmem>>, vector<2x512xf32>
    %12 = arith.addf %7, %11 : vector<2x512xf32>
    %c0_8 = arith.constant 0 : index
    %c0_9 = arith.constant 0 : index
    %13 = vector.load %arg5[%c0_8, %c0_9] : memref<2x512xf32, #tpu.memory_space<vmem>>, vector<2x512xf32>
    tpu.vector_store %arg5[%c0_8, %c0_9], %12 {strides = array<i32>} : memref<2x512xf32, #tpu.memory_space<vmem>>, vector<2x512xf32>,
    %c0_10 = arith.constant 0 : index
    %c0_11 = arith.constant 0 : index
    %14 = vector.load %arg6[%c0_10, %c0_11] : memref<32x512xf32, #tpu.memory_space<vmem>>, vector<32x512xf32>
    tpu.vector_store %arg6[%c0_10, %c0_11], %10 {strides = array<i32>} : memref<32x512xf32, #tpu.memory_space<vmem>>, vector<32x512xf32>,
    return
  }
  func.func @transform_0(%arg0: i32) -> (i32, i32) {
    %c0_i32 = arith.constant 0 : i32
    %c0_i32_0 = arith.constant 0 : i32
    %c0_i32_1 = arith.constant 0 : i32
    return %c0_i32, %c0_i32_0 : i32, i32
  }
  func.func @transform_1(%arg0: i32) -> (i32, i32) {
    %c0_i32 = arith.constant 0 : i32
    %c0_i32_0 = arith.constant 0 : i32
    %c0_i32_1 = arith.constant 0 : i32
    return %c0_i32, %c0_i32_0 : i32, i32
  }
  func.func @transform_2(%arg0: i32) -> (i32, i32) {
    %c0_i32 = arith.constant 0 : i32
    %c0_i32_0 = arith.constant 0 : i32
    %c0_i32_1 = arith.constant 0 : i32
    return %c0_i32, %c0_i32_0 : i32, i32
  }
  func.func @transform_3(%arg0: i32) -> (i32, i32) {
    %c0_i32 = arith.constant 0 : i32
    %c0_i32_0 = arith.constant 0 : i32
    %c0_i32_1 = arith.constant 0 : i32
    return %c0_i32, %c0_i32_0 : i32, i32
  }
  func.func @transform_4(%arg0: i32) -> (i32, i32) {
    %c0_i32 = arith.constant 0 : i32
    %c0_i32_0 = arith.constant 0 : i32
    %c0_i32_1 = arith.constant 0 : i32
    return %c0_i32, %c0_i32_0 : i32, i32
  }
  func.func @transform_5(%arg0: i32) -> (i32, i32) {
    %c0_i32 = arith.constant 0 : i32
    %c0_i32_0 = arith.constant 0 : i32
    %c0_i32_1 = arith.constant 0 : i32
    return %c0_i32, %c0_i32_0 : i32, i32
  }
}

module attributes {stable_mosaic.version = 11 : i64} {
  func.func @_gemm_kernel(%arg0: i32, %arg1: memref<8x72xbf16, #tpu.memory_space<vmem>>, %arg2: memref<72x1024xbf16, #tpu.memory_space<vmem>>, %arg3: memref<8x1xf32, #tpu.memory_space<vmem>>, %arg4: memref<8x1024xf32, #tpu.memory_space<vmem>>) attributes {dimension_semantics = [#tpu.dimension_semantics<parallel>], iteration_bounds = array<i64: 2>, scalar_prefetch = 0 : i64, scratch_operands = 0 : i64, tpu.core_type = #tpu.core_type<tc>, window_params = [{pipeline_mode = #tpu.pipeline_mode<synchronous>, transform_indices = @transform_0, window_bounds = array<i64: 8, 72>}, {transform_indices = @transform_1, window_bounds = array<i64: 72, 1024>}, {pipeline_mode = #tpu.pipeline_mode<synchronous>, transform_indices = @transform_2, window_bounds = array<i64: 8, 1>}, {transform_indices = @transform_3, window_bounds = array<i64: 8, 1024>}]} {
    %c0 = arith.constant 0 : index
    %c0_0 = arith.constant 0 : index
    %0 = vector.load %arg1[%c0, %c0_0] : memref<8x72xbf16, #tpu.memory_space<vmem>>, vector<8x72xbf16>
    %c0_1 = arith.constant 0 : index
    %c0_2 = arith.constant 0 : index
    %1 = vector.load %arg2[%c0_1, %c0_2] : memref<72x1024xbf16, #tpu.memory_space<vmem>>, vector<72x1024xbf16>
    %cst = arith.constant dense<0.000000e+00> : vector<8x1024xf32>
    %2 = tpu.matmul %0, %1, %cst {dimension_numbers = #tpu.dot_dimension_numbers<[1], [0], [0], [1], [0, 0, 1, 1], [], []>} : vector<8x72xbf16>, vector<72x1024xbf16>, vector<8x1024xf32> -> vector<8x1024xf32>
    %c0_3 = arith.constant 0 : index
    %c0_4 = arith.constant 0 : index
    %3 = vector.load %arg3[%c0_3, %c0_4] : memref<8x1xf32, #tpu.memory_space<vmem>>, vector<8x1xf32>
    %4 = vector.broadcast %3 : vector<8x1xf32> to vector<8x1024xf32>
    %5 = arith.addf %2, %4 : vector<8x1024xf32>
    %cst_5 = arith.constant 0.000000e+00 : f32
    %6 = vector.broadcast %cst_5 : f32 to vector<8x1024xf32>
    %7 = arith.maximumf %5, %6 : vector<8x1024xf32>
    %c0_6 = arith.constant 0 : index
    %c0_7 = arith.constant 0 : index
    %8 = vector.load %arg4[%c0_6, %c0_7] : memref<8x1024xf32, #tpu.memory_space<vmem>>, vector<8x1024xf32>
    tpu.vector_store %arg4[%c0_6, %c0_7], %7 {strides = array<i32>} : memref<8x1024xf32, #tpu.memory_space<vmem>>, vector<8x1024xf32>,
    return
  }
  func.func @transform_0(%arg0: i32) -> (i32, i32) {
    %c0_i32 = arith.constant 0 : i32
    %c0_i32_0 = arith.constant 0 : i32
    %c0_i32_1 = arith.constant 0 : i32
    return %c0_i32, %c0_i32_0 : i32, i32
  }
  func.func @transform_1(%arg0: i32) -> (i32, i32) {
    %c0_i32 = arith.constant 0 : i32
    %c0_i32_0 = arith.constant 0 : i32
    return %c0_i32, %arg0 : i32, i32
  }
  func.func @transform_2(%arg0: i32) -> (i32, i32) {
    %c0_i32 = arith.constant 0 : i32
    %c0_i32_0 = arith.constant 0 : i32
    %c0_i32_1 = arith.constant 0 : i32
    return %c0_i32, %c0_i32_0 : i32, i32
  }
  func.func @transform_3(%arg0: i32) -> (i32, i32) {
    %c0_i32 = arith.constant 0 : i32
    %c0_i32_0 = arith.constant 0 : i32
    return %c0_i32, %arg0 : i32, i32
  }
}

module attributes {stable_mosaic.version = 11 : i64} {
  func.func @_gemm_kernel(%arg0: i32, %arg1: memref<2x72xbf16, #tpu.memory_space<vmem>>, %arg2: memref<72x1024xbf16, #tpu.memory_space<vmem>>, %arg3: memref<2x1xf32, #tpu.memory_space<vmem>>, %arg4: memref<2x1024xf32, #tpu.memory_space<vmem>>, %arg5: memref<1xf32, #tpu.memory_space<smem>>, %arg6: memref<2x1024xf32, #tpu.memory_space<vmem>>) attributes {dimension_semantics = [#tpu.dimension_semantics<parallel>], iteration_bounds = array<i64: 2>, scalar_prefetch = 0 : i64, scratch_operands = 0 : i64, tpu.core_type = #tpu.core_type<tc>, window_params = [{pipeline_mode = #tpu.pipeline_mode<synchronous>, transform_indices = @transform_0, window_bounds = array<i64: 2, 72>}, {transform_indices = @transform_1, window_bounds = array<i64: 72, 1024>}, {pipeline_mode = #tpu.pipeline_mode<synchronous>, transform_indices = @transform_2, window_bounds = array<i64: 2, 1>}, {transform_indices = @transform_3, window_bounds = array<i64: 2, 1024>}, {transform_indices = @transform_4, window_bounds = array<i64: 1>}, {transform_indices = @transform_5, window_bounds = array<i64: 2, 1024>}]} {
    %c0 = arith.constant 0 : index
    %c0_0 = arith.constant 0 : index
    %0 = vector.load %arg1[%c0, %c0_0] : memref<2x72xbf16, #tpu.memory_space<vmem>>, vector<2x72xbf16>
    %c0_1 = arith.constant 0 : index
    %c0_2 = arith.constant 0 : index
    %1 = vector.load %arg2[%c0_1, %c0_2] : memref<72x1024xbf16, #tpu.memory_space<vmem>>, vector<72x1024xbf16>
    %cst = arith.constant dense<0.000000e+00> : vector<2x1024xf32>
    %2 = tpu.matmul %0, %1, %cst {dimension_numbers = #tpu.dot_dimension_numbers<[1], [0], [0], [1], [0, 0, 1, 1], [], []>} : vector<2x72xbf16>, vector<72x1024xbf16>, vector<2x1024xf32> -> vector<2x1024xf32>
    %c0_3 = arith.constant 0 : index
    %c0_4 = arith.constant 0 : index
    %3 = vector.load %arg3[%c0_3, %c0_4] : memref<2x1xf32, #tpu.memory_space<vmem>>, vector<2x1xf32>
    %4 = vector.broadcast %3 : vector<2x1xf32> to vector<2x1024xf32>
    %5 = arith.addf %2, %4 : vector<2x1024xf32>
    %6 = math.tanh %5 : vector<2x1024xf32>
    %c0_5 = arith.constant 0 : index
    %c0_6 = arith.constant 0 : index
    %7 = vector.load %arg4[%c0_5, %c0_6] : memref<2x1024xf32, #tpu.memory_space<vmem>>, vector<2x1024xf32>
    %8 = arith.addf %6, %7 : vector<2x1024xf32>
    %c0_7 = arith.constant 0 : index
    %9 = memref.load %arg5[%c0_7] : memref<1xf32, #tpu.memory_space<smem>>
    %10 = vector.broadcast %9 : f32 to vector<2x1024xf32>
    %11 = arith.mulf %8, %10 : vector<2x1024xf32>
    %c0_8 = arith.constant 0 : index
    %c0_9 = arith.constant 0 : index
    %12 = vector.load %arg6[%c0_8, %c0_9] : memref<2x1024xf32, #tpu.memory_space<vmem>>, vector<2x1024xf32>
    tpu.vector_store %arg6[%c0_8, %c0_9], %11 {strides = array<i32>} : memref<2x1024xf32, #tpu.memory_space<vmem>>, vector<2x1024xf32>,
    return
  }
  func.func @transform_0(%arg0: i32) -> (i32, i32) {
    %c0_i32 = arith.constant 0 : i32
    %c0_i32_0 = arith.constant 0 : i32
    %c0_i32_1 = arith.constant 0 : i32
    return %c0_i32, %c0_i32_0 : i32, i32
  }
  func.func @transform_1(%arg0: i32) -> (i32, i32) {
    %c0_i32 = arith.constant 0 : i32
    %c0_i32_0 = arith.constant 0 : i32
    return %c0_i32, %arg0 : i32, i32
  }
  func.func @transform_2(%arg0: i32) -> (i32, i32) {
    %c0_i32 = arith.constant 0 : i32
    %c0_i32_0 = arith.constant 0 : i32
    %c0_i32_1 = arith.constant 0 : i32
    return %c0_i32, %c0_i32_0 : i32, i32
  }
  func.func @transform_3(%arg0: i32) -> (i32, i32) {
    %c0_i32 = arith.constant 0 : i32
    %c0_i32_0 = arith.constant 0 : i32
    return %c0_i32, %arg0 : i32, i32
  }
  func.func @transform_4(%arg0: i32) -> i32 {
    %c0_i32 = arith.constant 0 : i32
    %c0_i32_0 = arith.constant 0 : i32
    return %c0_i32 : i32
  }
  func.func @transform_5(%arg0: i32) -> (i32, i32) {
    %c0_i32 = arith.constant 0 : i32
    %c0_i32_0 = arith.constant 0 : i32
    return %c0_i32, %arg0 : i32, i32
  }
}

</mosaic_0001>

<llo_original>
// kernel: temporal_vae_forward.12
$region0: #{temporal_vae_forward.12}
  #allocation0 [shape = 'u32[]', space=smem, size = 0x4, offset = 0x4, fixed_abs, tag = 'smem constant byte address 0x4 - core index']
  #allocation1 [shape = 'u32[144,128]{1,0:T(1,128)}', space=vmem, size = 0x12000, scoped, tag = 'internal scratch']
  #allocation2 [shape = 'f32[1]{0:T(128)S(6)}', space=smem, size = 0x200, scoped, tag = 'scoped memory for temporal_vae_forward.12']
  %s0 = inlined_call_operand.vmem [shape: f32[16,256], index: 0, kind: input, shape index: {}]
  %s1 = inlined_call_operand.vmem [shape: f32[16,256], index: 1, kind: input, shape index: {}]
  %s2 = inlined_call_operand.<no memory space> [shape: f32[1], index: 2, kind: input, shape index: {}]
  %s3 = inlined_call_operand.vmem [shape: f32[16,256], index: 3, kind: output, shape index: {}]
  %s4 = sld [smem:[#allocation0]]
  $region22: #{temporal_vae_forward.12} parent=0
    _
  %s6 = ssub.s32 1, %s4
  %s7 = scalar_select 0, %s6, %s4
  %8 = sst [smem:[#allocation2]] %s2
  // Predicated region
  $region2: #{temporal_vae_forward.12} parent=0 // pred_check
    _
  $region3: #{temporal_vae_forward.12} parent=0 // pred_check_branch
    %10 = sbr.rel (0) target = $region5
  $region4: #{temporal_vae_forward.12} parent=0 // pred_region
    _
  $region5: #{temporal_vae_forward.12} parent=0 // pred_fallthru
    _
  // Predicated region
  $region6: #{temporal_vae_forward.12} parent=0 // pred_check
    _
  $region7: #{temporal_vae_forward.12} parent=0 // pred_check_branch
    %12 = sbr.rel (0) target = $region9
  $region8: #{temporal_vae_forward.12} parent=0 // pred_region
    _
  $region9: #{temporal_vae_forward.12} parent=0 // pred_fallthru
    _
  // Predicated region
  $region10: #{temporal_vae_forward.12} parent=0 // pred_check
    _
  $region11: #{temporal_vae_forward.12} parent=0 // pred_check_branch
    %14 = sbr.rel (0) target = $region13
  $region12: #{temporal_vae_forward.12} parent=0 // pred_region
    _
  $region13: #{temporal_vae_forward.12} parent=0 // pred_fallthru
    _
  %v15 = vld [vmem:[%s0] sm:$0xff]
  %v16 = vld [vmem:[%s0 + $0x8] sm:$0xff]
  %v17 = vld [vmem:[%s0 + $0x10] sm:$0xff]
  %v18 = vld [vmem:[%s0 + $0x18] sm:$0xff]
  %v19 = vld [vmem:[%s1] sm:$0xff]
  %v20 = vld [vmem:[%s1 + $0x8] sm:$0xff]
  %v21 = vld [vmem:[%s1 + $0x10] sm:$0xff]
  %v22 = vld [vmem:[%s1 + $0x18] sm:$0xff]
  %v23 = vmul.f32 %v15, %v19
  %v24 = vmul.f32 %v16, %v20
  %v25 = vmul.f32 %v17, %v21
  %v26 = vmul.f32 %v18, %v22
  %s27 = sld [smem:[#allocation2]]
  %v28 = vstv %s27
  %v29 = vmul.f32 %v23, %v28
  %v30 = vmul.f32 %v24, %v28
  %v31 = vmul.f32 %v25, %v28
  %v32 = vmul.f32 %v26, %v28
  %33 = vst [vmem:[%s3] sm:$0xff] %v29
  %34 = vst [vmem:[%s3 + $0x8] sm:$0xff] %v30
  %35 = vst [vmem:[%s3 + $0x10] sm:$0xff] %v31
  %36 = vst [vmem:[%s3 + $0x18] sm:$0xff] %v32
  // Predicated region
  $region14: #{temporal_vae_forward.12} parent=0 // pred_check
    _
  $region15: #{temporal_vae_forward.12} parent=0 // pred_check_branch
    %38 = sbr.rel (0) target = $region17
  $region16: #{temporal_vae_forward.12} parent=0 // pred_region
    _
  $region17: #{temporal_vae_forward.12} parent=0 // pred_fallthru
    _
  // Predicated region
  $region18: #{temporal_vae_forward.12} parent=0 // pred_check
    _
  $region19: #{temporal_vae_forward.12} parent=0 // pred_check_branch
    %40 = sbr.rel (0) target = $region21
  $region20: #{temporal_vae_forward.12} parent=0 // pred_region
    _
  $region21: #{temporal_vae_forward.12} parent=0 // pred_fallthru
    _

// kernel: temporal_vae_forward.13
$region0: #{temporal_vae_forward.13}
  #allocation0 [shape = 'u32[]', space=smem, size = 0x4, offset = 0x4, fixed_abs, tag = 'smem constant byte address 0x4 - core index']
  #allocation1 [shape = 'u32[144,128]{1,0:T(1,128)}', space=vmem, size = 0x12000, scoped, tag = 'internal scratch']
  %s0 = inlined_call_operand.vmem [shape: bf16[8,32], index: 0, kind: input, shape index: {}]
  %s1 = inlined_call_operand.vmem [shape: bf16[32,512], index: 1, kind: input, shape index: {}]
  %s2 = inlined_call_operand.vmem [shape: f32[8,1], index: 2, kind: input, shape index: {}]
  %s3 = inlined_call_operand.vmem [shape: f32[8,512], index: 3, kind: output, shape index: {}]
  %s4 = sld [smem:[#allocation0]]
  $region22: #{temporal_vae_forward.13} parent=0
    _
  %s6 = ssub.s32 1, %s4
  %s7 = scalar_select 0, %s6, %s4
  // Predicated region
  $region2: #{temporal_vae_forward.13} parent=0 // pred_check
    _
  $region3: #{temporal_vae_forward.13} parent=0 // pred_check_branch
    %9 = sbr.rel (0) target = $region5
  $region4: #{temporal_vae_forward.13} parent=0 // pred_region
    _
  $region5: #{temporal_vae_forward.13} parent=0 // pred_fallthru
    _
  // Predicated region
  $region6: #{temporal_vae_forward.13} parent=0 // pred_check
    _
  $region7: #{temporal_vae_forward.13} parent=0 // pred_check_branch
    %11 = sbr.rel (0) target = $region9
  $region8: #{temporal_vae_forward.13} parent=0 // pred_region
    _
  $region9: #{temporal_vae_forward.13} parent=0 // pred_fallthru
    _
  // Predicated region
  $region10: #{temporal_vae_forward.13} parent=0 // pred_check
    _
  $region11: #{temporal_vae_forward.13} parent=0 // pred_check_branch
    %13 = sbr.rel (0) target = $region13
  $region12: #{temporal_vae_forward.13} parent=0 // pred_region
    _
  $region13: #{temporal_vae_forward.13} parent=0 // pred_fallthru
    _
  %v15 = vld [vmem:[%s0] sm:$0xf]
  %v16 = vld [vmem:[%s1] sm:$0xff]
  %v17 = vld [vmem:[%s1 + $0x8] sm:$0xff]
  %v18 = vld [vmem:[%s1 + $0x10] sm:$0xff]
  %v19 = vld [vmem:[%s1 + $0x18] sm:$0xff]
  %v20 = vld [vmem:[%s1 + $0x20] sm:$0xff]
  %v21 = vld [vmem:[%s1 + $0x28] sm:$0xff]
  %v22 = vld [vmem:[%s1 + $0x30] sm:$0xff]
  %v23 = vld [vmem:[%s1 + $0x38] sm:$0xff]
  %v24 = vld [vmem:[%s2] sm:$0xff]
  %26 = vset.pattern.permute.xlu0 0
  %27 = vperm.xlu0 %26, %v24
  %v28 = vpop.permute.xlu0 %27
  %v38 = vunpack.c.l.b16 %v16
  %v39 = vunpack.c.h.b16 %v16
  %v40 = vunpack.c.l.b16 %v17
  %v41 = vunpack.c.h.b16 %v17
  %v42 = vunpack.c.l.b16 %v18
  %v43 = vunpack.c.h.b16 %v18
  %v44 = vunpack.c.l.b16 %v19
  %v45 = vunpack.c.h.b16 %v19
  %v46 = vunpack.c.l.b16 %v20
  %v47 = vunpack.c.h.b16 %v20
  %v48 = vunpack.c.l.b16 %v21
  %v49 = vunpack.c.h.b16 %v21
  %v50 = vunpack.c.l.b16 %v22
  %v51 = vunpack.c.h.b16 %v22
  %v52 = vunpack.c.l.b16 %v23
  %v53 = vunpack.c.h.b16 %v23
  %v54 = vpack.c.b16 %v42, %v38
  %v55 = vpack.c.b16 %v43, %v39
  %v56 = vpack.c.b16 %v44, %v40
  %v57 = vpack.c.b16 %v45, %v41
  %v58 = vpack.c.b16 %v50, %v46
  %v59 = vpack.c.b16 %v51, %v47
  %v60 = vpack.c.b16 %v52, %v48
  %v61 = vpack.c.b16 %v53, %v49
  %vm70 = vcmask 261120
  %v72 = vsel %vm70, %v15, 0
  %74 = vmatprep.subr.bf16.mxu0 0
  %75 = vmatpush1.bf16.msra.mxu0 0
  %76 = vmatprep.subr.bf16.mxu0 0
  %77 = vmatpush1.bf16.msra.mxu0 0
  %78 = vmatprep.subr.bf16.mxu0 0
  %79 = vmatpush1.bf16.msra.mxu0 0
  %80 = vmatprep.subr.bf16.mxu0 0
  %81 = vmatpush1.bf16.msra.mxu0 0
  %82 = vmatprep.subr.bf16.mxu0 0
  %83 = vmatpush1.bf16.msra.mxu0 0
  %84 = vmatprep.subr.bf16.mxu0 0
  %85 = vmatpush1.bf16.msra.mxu0 0
  %86 = vmatprep.subr.bf16.mxu0 %v59
  %87 = vmatpush1.bf16.msra.mxu0 %v58
  %88 = vmatprep.subr.bf16.mxu0 %v55
  %89 = vmatpush1.bf16.msra.mxu0 %v54
  %90 = vmatprep.subr.bf16.mxu0 0
  %91 = vmatpush2.bf16.msra.mxu0 0
  %92 = vmatprep.subr.bf16.mxu0 0
  %93 = vmatpush2.bf16.msra.mxu0 0
  %94 = vmatprep.subr.bf16.mxu0 0
  %95 = vmatpush2.bf16.msra.mxu0 0
  %96 = vmatprep.subr.bf16.mxu0 0
  %97 = vmatpush2.bf16.msra.mxu0 0
  %98 = vmatprep.subr.bf16.mxu0 0
  %99 = vmatpush2.bf16.msra.mxu0 0
  %100 = vmatprep.subr.bf16.mxu0 0
  %101 = vmatpush2.bf16.msra.mxu0 0
  %102 = vmatprep.subr.bf16.mxu0 0
  %103 = vmatpush2.bf16.msra.mxu0 0
  %104 = vmatprep.subr.bf16.mxu0 0
  %105 = vmatpush2.bf16.msra.mxu0 0
  %106 = vmatprep.mubr.bf16.mxu0 0
  %107 = vmatmul.mubr.bf16.gmra.mxu0 %v72
  %v108 = vpop.f32.mrf.mxu0
  %v109 = vadd.f32 %v28, %v108
  %v110 = vpop.f32.mrf.mxu0
  %v111 = vadd.f32 %v28, %v110
  %v112 = vpop.f32.mrf.mxu0
  %v113 = vpop.f32.mrf.mxu0
  %114 = vdwg.mxu0
  %115 = vmatprep.subr.bf16.mxu0 0
  %116 = vmatpush1.bf16.msra.mxu0 0
  %117 = vmatprep.subr.bf16.mxu0 0
  %118 = vmatpush1.bf16.msra.mxu0 0
  %119 = vmatprep.subr.bf16.mxu0 0
  %120 = vmatpush1.bf16.msra.mxu0 0
  %121 = vmatprep.subr.bf16.mxu0 0
  %122 = vmatpush1.bf16.msra.mxu0 0
  %123 = vmatprep.subr.bf16.mxu0 0
  %124 = vmatpush1.bf16.msra.mxu0 0
  %125 = vmatprep.subr.bf16.mxu0 0
  %126 = vmatpush1.bf16.msra.mxu0 0
  %127 = vmatprep.subr.bf16.mxu0 %v61
  %128 = vmatpush1.bf16.msra.mxu0 %v60
  %129 = vmatprep.subr.bf16.mxu0 %v57
  %130 = vmatpush1.bf16.msra.mxu0 %v56
  %131 = vmatprep.subr.bf16.mxu0 0
  %132 = vmatpush2.bf16.msra.mxu0 0
  %133 = vmatprep.subr.bf16.mxu0 0
  %134 = vmatpush2.bf16.msra.mxu0 0
  %135 = vmatprep.subr.bf16.mxu0 0
  %136 = vmatpush2.bf16.msra.mxu0 0
  %137 = vmatprep.subr.bf16.mxu0 0
  %138 = vmatpush2.bf16.msra.mxu0 0
  %139 = vmatprep.subr.bf16.mxu0 0
  %140 = vmatpush2.bf16.msra.mxu0 0
  %141 = vmatprep.subr.bf16.mxu0 0
  %142 = vmatpush2.bf16.msra.mxu0 0
  %143 = vmatprep.subr.bf16.mxu0 0
  %144 = vmatpush2.bf16.msra.mxu0 0
  %145 = vmatprep.subr.bf16.mxu0 0
  %146 = vmatpush2.bf16.msra.mxu0 0
  %147 = vmatprep.mubr.bf16.mxu0 0
  %148 = vmatmul.mubr.bf16.gmra.mxu0 %v72
  %v149 = vpop.f32.mrf.mxu0
  %v150 = vadd.f32 %v28, %v149
  %v151 = vpop.f32.mrf.mxu0
  %v152 = vadd.f32 %v28, %v151
  %v153 = vpop.f32.mrf.mxu0
  %v154 = vpop.f32.mrf.mxu0
  %155 = vdwg.mxu0
  %v156 = vmax.f32 %v109, 0.0
  %v157 = vmax.f32 %v111, 0.0
  %v158 = vmax.f32 %v150, 0.0
  %v159 = vmax.f32 %v152, 0.0
  %160 = vst [vmem:[%s3] sm:$0xff] %v156
  %161 = vst [vmem:[%s3 + $0x8] sm:$0xff] %v157
  %162 = vst [vmem:[%s3 + $0x10] sm:$0xff] %v158
  %163 = vst [vmem:[%s3 + $0x18] sm:$0xff] %v159
  // Predicated region
  $region14: #{temporal_vae_forward.13} parent=0 // pred_check
    _
  $region15: #{temporal_vae_forward.13} parent=0 // pred_check_branch
    %165 = sbr.rel (0) target = $region17
  $region16: #{temporal_vae_forward.13} parent=0 // pred_region
    _
  $region17: #{temporal_vae_forward.13} parent=0 // pred_fallthru
    _
  // Predicated region
  $region18: #{temporal_vae_forward.13} parent=0 // pred_check
    _
  $region19: #{temporal_vae_forward.13} parent=0 // pred_check_branch
    %167 = sbr.rel (0) target = $region21
  $region20: #{temporal_vae_forward.13} parent=0 // pred_region
    _
  $region21: #{temporal_vae_forward.13} parent=0 // pred_fallthru
    _

// kernel: temporal_vae_forward.14
$region0: #{temporal_vae_forward.14}
  #allocation0 [shape = 'u32[]', space=smem, size = 0x4, offset = 0x4, fixed_abs, tag = 'smem constant byte address 0x4 - core index']
  #allocation1 [shape = 'u32[144,128]{1,0:T(1,128)}', space=vmem, size = 0x12000, scoped, tag = 'internal scratch']
  %s0 = inlined_call_operand.vmem [shape: bf16[16,128], index: 0, kind: input, shape index: {}]
  %s1 = inlined_call_operand.vmem [shape: bf16[128,128], index: 1, kind: input, shape index: {}]
  %s2 = inlined_call_operand.vmem [shape: f32[16,1], index: 2, kind: input, shape index: {}]
  %s3 = inlined_call_operand.vmem [shape: f32[16,128], index: 3, kind: output, shape index: {}]
  %s4 = sld [smem:[#allocation0]]
  $region22: #{temporal_vae_forward.14} parent=0
    _
  %s6 = ssub.s32 1, %s4
  %s7 = scalar_select 0, %s6, %s4
  // Predicated region
  $region2: #{temporal_vae_forward.14} parent=0 // pred_check
    _
  $region3: #{temporal_vae_forward.14} parent=0 // pred_check_branch
    %9 = sbr.rel (0) target = $region5
  $region4: #{temporal_vae_forward.14} parent=0 // pred_region
    _
  $region5: #{temporal_vae_forward.14} parent=0 // pred_fallthru
    _
  // Predicated region
  $region6: #{temporal_vae_forward.14} parent=0 // pred_check
    _
  $region7: #{temporal_vae_forward.14} parent=0 // pred_check_branch
    %11 = sbr.rel (0) target = $region9
  $region8: #{temporal_vae_forward.14} parent=0 // pred_region
    _
  $region9: #{temporal_vae_forward.14} parent=0 // pred_fallthru
    _
  // Predicated region
  $region10: #{temporal_vae_forward.14} parent=0 // pred_check
    _
  $region11: #{temporal_vae_forward.14} parent=0 // pred_check_branch
    %13 = sbr.rel (0) target = $region13
  $region12: #{temporal_vae_forward.14} parent=0 // pred_region
    _
  $region13: #{temporal_vae_forward.14} parent=0 // pred_fallthru
    _
  %v15 = vld [vmem:[%s0] sm:$0xf]
  %v16 = vld [vmem:[%s0 + $0x4] sm:$0xf]
  %v17 = vld [vmem:[%s1] sm:$0xf]
  %v18 = vld [vmem:[%s1 + $0x4] sm:$0xf]
  %v19 = vld [vmem:[%s1 + $0x8] sm:$0xf]
  %v20 = vld [vmem:[%s1 + $0xc] sm:$0xf]
  %v21 = vld [vmem:[%s1 + $0x10] sm:$0xf]
  %v22 = vld [vmem:[%s1 + $0x14] sm:$0xf]
  %v23 = vld [vmem:[%s1 + $0x18] sm:$0xf]
  %v24 = vld [vmem:[%s1 + $0x1c] sm:$0xf]
  %v25 = vld [vmem:[%s1 + $0x20] sm:$0xf]
  %v26 = vld [vmem:[%s1 + $0x24] sm:$0xf]
  %v27 = vld [vmem:[%s1 + $0x28] sm:$0xf]
  %v28 = vld [vmem:[%s1 + $0x2c] sm:$0xf]
  %v29 = vld [vmem:[%s1 + $0x30] sm:$0xf]
  %v30 = vld [vmem:[%s1 + $0x34] sm:$0xf]
  %v31 = vld [vmem:[%s1 + $0x38] sm:$0xf]
  %v32 = vld [vmem:[%s1 + $0x3c] sm:$0xf]
  %v33 = vld [vmem:[%s2] sm:$0xff]
  %v34 = vld [vmem:[%s2 + $0x8] sm:$0xff]
  %36 = vset.pattern.permute.xlu0 0
  %37 = vperm.xlu0 %36, %v33
  %v38 = vpop.permute.xlu0 %37
  %41 = vset.pattern.permute.xlu0 0
  %42 = vperm.xlu0 %41, %v34
  %v43 = vpop.permute.xlu0 %42
  %v47 = vunpack.c.l.b16 %v15
  %v48 = vunpack.c.l.b16 %v16
  %v49 = vpack.c.b16 %v48, %v47
  %v67 = vunpack.c.l.b16 %v17
  %v68 = vunpack.c.l.b16 %v18
  %v69 = vunpack.c.l.b16 %v19
  %v70 = vunpack.c.l.b16 %v20
  %v71 = vunpack.c.l.b16 %v21
  %v72 = vunpack.c.l.b16 %v22
  %v73 = vunpack.c.l.b16 %v23
  %v74 = vunpack.c.l.b16 %v24
  %v75 = vunpack.c.l.b16 %v25
  %v76 = vunpack.c.l.b16 %v26
  %v77 = vunpack.c.l.b16 %v27
  %v78 = vunpack.c.l.b16 %v28
  %v79 = vunpack.c.l.b16 %v29
  %v80 = vunpack.c.l.b16 %v30
  %v81 = vunpack.c.l.b16 %v31
  %v82 = vunpack.c.l.b16 %v32
  %v83 = vpack.c.b16 %v68, %v67
  %v84 = vpack.c.b16 %v70, %v69
  %v85 = vpack.c.b16 %v72, %v71
  %v86 = vpack.c.b16 %v74, %v73
  %v87 = vpack.c.b16 %v76, %v75
  %v88 = vpack.c.b16 %v78, %v77
  %v89 = vpack.c.b16 %v80, %v79
  %v90 = vpack.c.b16 %v82, %v81
  %99 = vmatprep.subr.bf16.mxu0 0
  %100 = vmatpush1.bf16.msra.mxu0 %v90
  %101 = vmatprep.subr.bf16.mxu0 0
  %102 = vmatpush1.bf16.msra.mxu0 %v89
  %103 = vmatprep.subr.bf16.mxu0 0
  %104 = vmatpush1.bf16.msra.mxu0 %v88
  %105 = vmatprep.subr.bf16.mxu0 0
  %106 = vmatpush1.bf16.msra.mxu0 %v87
  %107 = vmatprep.subr.bf16.mxu0 0
  %108 = vmatpush1.bf16.msra.mxu0 %v86
  %109 = vmatprep.subr.bf16.mxu0 0
  %110 = vmatpush1.bf16.msra.mxu0 %v85
  %111 = vmatprep.subr.bf16.mxu0 0
  %112 = vmatpush1.bf16.msra.mxu0 %v84
  %113 = vmatprep.subr.bf16.mxu0 0
  %114 = vmatpush1.bf16.msra.mxu0 %v83
  %115 = vmatprep.subr.bf16.mxu0 0
  %116 = vmatpush2.bf16.msra.mxu0 0
  %117 = vmatprep.subr.bf16.mxu0 0
  %118 = vmatpush2.bf16.msra.mxu0 0
  %119 = vmatprep.subr.bf16.mxu0 0
  %120 = vmatpush2.bf16.msra.mxu0 0
  %121 = vmatprep.subr.bf16.mxu0 0
  %122 = vmatpush2.bf16.msra.mxu0 0
  %123 = vmatprep.subr.bf16.mxu0 0
  %124 = vmatpush2.bf16.msra.mxu0 0
  %125 = vmatprep.subr.bf16.mxu0 0
  %126 = vmatpush2.bf16.msra.mxu0 0
  %127 = vmatprep.subr.bf16.mxu0 0
  %128 = vmatpush2.bf16.msra.mxu0 0
  %129 = vmatprep.subr.bf16.mxu0 0
  %130 = vmatpush2.bf16.msra.mxu0 0
  %131 = vmatprep.mubr.bf16.mxu0 0
  %132 = vmatmul.mubr.bf16.gmra.mxu0 %v49
  %v133 = vpop.f32.mrf.mxu0
  %v134 = vadd.f32 %v38, %v133
  %v135 = vpop.f32.mrf.mxu0
  %v136 = vpop.f32.mrf.mxu0
  %v137 = vadd.f32 %v43, %v136
  %v138 = vpop.f32.mrf.mxu0
  %139 = vdwg.mxu0
  %v140 = vmax.f32 %v134, 0.0
  %v141 = vmax.f32 %v137, 0.0
  %142 = vst [vmem:[%s3] sm:$0xff] %v140
  %143 = vst [vmem:[%s3 + $0x8] sm:$0xff] %v141
  // Predicated region
  $region14: #{temporal_vae_forward.14} parent=0 // pred_check
    _
  $region15: #{temporal_vae_forward.14} parent=0 // pred_check_branch
    %145 = sbr.rel (0) target = $region17
  $region16: #{temporal_vae_forward.14} parent=0 // pred_region
    _
  $region17: #{temporal_vae_forward.14} parent=0 // pred_fallthru
    _
  // Predicated region
  $region18: #{temporal_vae_forward.14} parent=0 // pred_check
    _
  $region19: #{temporal_vae_forward.14} parent=0 // pred_check_branch
    %147 = sbr.rel (0) target = $region21
  $region20: #{temporal_vae_forward.14} parent=0 // pred_region
    _
  $region21: #{temporal_vae_forward.14} parent=0 // pred_fallthru
    _

// kernel: temporal_vae_forward.15
$region0: #{temporal_vae_forward.15}
  #allocation0 [shape = 'u32[]', space=smem, size = 0x4, offset = 0x4, fixed_abs, tag = 'smem constant byte address 0x4 - core index']
  #allocation1 [shape = 'u32[144,128]{1,0:T(1,128)}', space=vmem, size = 0x12000, scoped, tag = 'internal scratch']
  %s0 = inlined_call_operand.vmem [shape: bf16[32,256], index: 0, kind: input, shape index: {}]
  %s1 = inlined_call_operand.vmem [shape: bf16[256,32], index: 1, kind: input, shape index: {}]
  %s2 = inlined_call_operand.vmem [shape: f32[32,1], index: 2, kind: input, shape index: {}]
  %s3 = inlined_call_operand.vmem [shape: f32[32,32], index: 3, kind: output, shape index: {}]
  %s4 = sld [smem:[#allocation0]]
  $region22: #{temporal_vae_forward.15} parent=0
    _
  %s6 = ssub.s32 1, %s4
  %s7 = scalar_select 0, %s6, %s4
  // Predicated region
  $region2: #{temporal_vae_forward.15} parent=0 // pred_check
    _
  $region3: #{temporal_vae_forward.15} parent=0 // pred_check_branch
    %9 = sbr.rel (0) target = $region5
  $region4: #{temporal_vae_forward.15} parent=0 // pred_region
    _
  $region5: #{temporal_vae_forward.15} parent=0 // pred_fallthru
    _
  // Predicated region
  $region6: #{temporal_vae_forward.15} parent=0 // pred_check
    _
  $region7: #{temporal_vae_forward.15} parent=0 // pred_check_branch
    %11 = sbr.rel (0) target = $region9
  $region8: #{temporal_vae_forward.15} parent=0 // pred_region
    _
  $region9: #{temporal_vae_forward.15} parent=0 // pred_fallthru
    _
  // Predicated region
  $region10: #{temporal_vae_forward.15} parent=0 // pred_check
    _
  $region11: #{temporal_vae_forward.15} parent=0 // pred_check_branch
    %13 = sbr.rel (0) target = $region13
  $region12: #{temporal_vae_forward.15} parent=0 // pred_region
    _
  $region13: #{temporal_vae_forward.15} parent=0 // pred_fallthru
    _
  %v15 = vld [vmem:[%s0] sm:$0xff]
  %v16 = vld [vmem:[%s0 + $0x8] sm:$0xff]
  %v17 = vld [vmem:[%s0 + $0x10] sm:$0xff]
  %v18 = vld [vmem:[%s0 + $0x18] sm:$0xff]
  %v19 = vld [vmem:[%s1] sm:$0xf]
  %v20 = vld [vmem:[%s1 + $0x4] sm:$0xf]
  %v21 = vld [vmem:[%s1 + $0x8] sm:$0xf]
  %v22 = vld [vmem:[%s1 + $0xc] sm:$0xf]
  %v23 = vld [vmem:[%s1 + $0x10] sm:$0xf]
  %v24 = vld [vmem:[%s1 + $0x14] sm:$0xf]
  %v25 = vld [vmem:[%s1 + $0x18] sm:$0xf]
  %v26 = vld [vmem:[%s1 + $0x1c] sm:$0xf]
  %v27 = vld [vmem:[%s1 + $0x20] sm:$0xf]
  %v28 = vld [vmem:[%s1 + $0x24] sm:$0xf]
  %v29 = vld [vmem:[%s1 + $0x28] sm:$0xf]
  %v30 = vld [vmem:[%s1 + $0x2c] sm:$0xf]
  %v31 = vld [vmem:[%s1 + $0x30] sm:$0xf]
  %v32 = vld [vmem:[%s1 + $0x34] sm:$0xf]
  %v33 = vld [vmem:[%s1 + $0x38] sm:$0xf]
  %v34 = vld [vmem:[%s1 + $0x3c] sm:$0xf]
  %v35 = vld [vmem:[%s1 + $0x40] sm:$0xf]
  %v36 = vld [vmem:[%s1 + $0x44] sm:$0xf]
  %v37 = vld [vmem:[%s1 + $0x48] sm:$0xf]
  %v38 = vld [vmem:[%s1 + $0x4c] sm:$0xf]
  %v39 = vld [vmem:[%s1 + $0x50] sm:$0xf]
  %v40 = vld [vmem:[%s1 + $0x54] sm:$0xf]
  %v41 = vld [vmem:[%s1 + $0x58] sm:$0xf]
  %v42 = vld [vmem:[%s1 + $0x5c] sm:$0xf]
  %v43 = vld [vmem:[%s1 + $0x60] sm:$0xf]
  %v44 = vld [vmem:[%s1 + $0x64] sm:$0xf]
  %v45 = vld [vmem:[%s1 + $0x68] sm:$0xf]
  %v46 = vld [vmem:[%s1 + $0x6c] sm:$0xf]
  %v47 = vld [vmem:[%s1 + $0x70] sm:$0xf]
  %v48 = vld [vmem:[%s1 + $0x74] sm:$0xf]
  %v49 = vld [vmem:[%s1 + $0x78] sm:$0xf]
  %v50 = vld [vmem:[%s1 + $0x7c] sm:$0xf]
  %v51 = vld [vmem:[%s2] sm:$0xff]
  %v52 = vld [vmem:[%s2 + $0x8] sm:$0xff]
  %v53 = vld [vmem:[%s2 + $0x10] sm:$0xff]
  %v54 = vld [vmem:[%s2 + $0x18] sm:$0xff]
  %56 = vset.pattern.permute.xlu0 0
  %57 = vperm.xlu0 %56, %v51
  %v58 = vpop.permute.xlu0 %57
  %61 = vset.pattern.permute.xlu0 0
  %62 = vperm.xlu0 %61, %v52
  %v63 = vpop.permute.xlu0 %62
  %66 = vset.pattern.permute.xlu0 0
  %67 = vperm.xlu0 %66, %v53
  %v68 = vpop.permute.xlu0 %67
  %71 = vset.pattern.permute.xlu0 0
  %72 = vperm.xlu0 %71, %v54
  %v73 = vpop.permute.xlu0 %72
  %v79 = vunpack.c.l.b16 %v15
  %v80 = vunpack.c.h.b16 %v15
  %v81 = vunpack.c.l.b16 %v16
  %v82 = vunpack.c.h.b16 %v16
  %v83 = vunpack.c.l.b16 %v17
  %v84 = vunpack.c.h.b16 %v17
  %v85 = vunpack.c.l.b16 %v18
  %v86 = vunpack.c.h.b16 %v18
  %v87 = vpack.c.b16 %v81, %v79
  %v88 = vpack.c.b16 %v82, %v80
  %v89 = vpack.c.b16 %v85, %v83
  %v90 = vpack.c.b16 %v86, %v84
  %v127 = vunpack.c.l.b16 %v19
  %v128 = vunpack.c.l.b16 %v20
  %v129 = vunpack.c.l.b16 %v21
  %v130 = vunpack.c.l.b16 %v22
  %v131 = vunpack.c.l.b16 %v23
  %v132 = vunpack.c.l.b16 %v24
  %v133 = vunpack.c.l.b16 %v25
  %v134 = vunpack.c.l.b16 %v26
  %v135 = vunpack.c.l.b16 %v27
  %v136 = vunpack.c.l.b16 %v28
  %v137 = vunpack.c.l.b16 %v29
  %v138 = vunpack.c.l.b16 %v30
  %v139 = vunpack.c.l.b16 %v31
  %v140 = vunpack.c.l.b16 %v32
  %v141 = vunpack.c.l.b16 %v33
  %v142 = vunpack.c.l.b16 %v34
  %v143 = vunpack.c.l.b16 %v35
  %v144 = vunpack.c.l.b16 %v36
  %v145 = vunpack.c.l.b16 %v37
  %v146 = vunpack.c.l.b16 %v38
  %v147 = vunpack.c.l.b16 %v39
  %v148 = vunpack.c.l.b16 %v40
  %v149 = vunpack.c.l.b16 %v41
  %v150 = vunpack.c.l.b16 %v42
  %v151 = vunpack.c.l.b16 %v43
  %v152 = vunpack.c.l.b16 %v44
  %v153 = vunpack.c.l.b16 %v45
  %v154 = vunpack.c.l.b16 %v46
  %v155 = vunpack.c.l.b16 %v47
  %v156 = vunpack.c.l.b16 %v48
  %v157 = vunpack.c.l.b16 %v49
  %v158 = vunpack.c.l.b16 %v50
  %v159 = vpack.c.b16 %v128, %v127
  %v160 = vpack.c.b16 %v130, %v129
  %v161 = vpack.c.b16 %v132, %v131
  %v162 = vpack.c.b16 %v134, %v133
  %v163 = vpack.c.b16 %v136, %v135
  %v164 = vpack.c.b16 %v138, %v137
  %v165 = vpack.c.b16 %v140, %v139
  %v166 = vpack.c.b16 %v142, %v141
  %v167 = vpack.c.b16 %v144, %v143
  %v168 = vpack.c.b16 %v146, %v145
  %v169 = vpack.c.b16 %v148, %v147
  %v170 = vpack.c.b16 %v150, %v149
  %v171 = vpack.c.b16 %v152, %v151
  %v172 = vpack.c.b16 %v154, %v153
  %v173 = vpack.c.b16 %v156, %v155
  %v174 = vpack.c.b16 %v158, %v157
  %191 = vmatprep.subr.bf16.mxu0 0
  %192 = vmatpush1.bf16.msra.mxu0 %v166
  %193 = vmatprep.subr.bf16.mxu0 0
  %194 = vmatpush1.bf16.msra.mxu0 %v165
  %195 = vmatprep.subr.bf16.mxu0 0
  %196 = vmatpush1.bf16.msra.mxu0 %v164
  %197 = vmatprep.subr.bf16.mxu0 0
  %198 = vmatpush1.bf16.msra.mxu0 %v163
  %199 = vmatprep.subr.bf16.mxu0 0
  %200 = vmatpush1.bf16.msra.mxu0 %v162
  %201 = vmatprep.subr.bf16.mxu0 0
  %202 = vmatpush1.bf16.msra.mxu0 %v161
  %203 = vmatprep.subr.bf16.mxu0 0
  %204 = vmatpush1.bf16.msra.mxu0 %v160
  %205 = vmatprep.subr.bf16.mxu0 0
  %206 = vmatpush1.bf16.msra.mxu0 %v159
  %207 = vmatprep.subr.bf16.mxu0 0
  %208 = vmatpush2.bf16.msra.mxu0 %v174
  %209 = vmatprep.subr.bf16.mxu0 0
  %210 = vmatpush2.bf16.msra.mxu0 %v173
  %211 = vmatprep.subr.bf16.mxu0 0
  %212 = vmatpush2.bf16.msra.mxu0 %v172
  %213 = vmatprep.subr.bf16.mxu0 0
  %214 = vmatpush2.bf16.msra.mxu0 %v171
  %215 = vmatprep.subr.bf16.mxu0 0
  %216 = vmatpush2.bf16.msra.mxu0 %v170
  %217 = vmatprep.subr.bf16.mxu0 0
  %218 = vmatpush2.bf16.msra.mxu0 %v169
  %219 = vmatprep.subr.bf16.mxu0 0
  %220 = vmatpush2.bf16.msra.mxu0 %v168
  %221 = vmatprep.subr.bf16.mxu0 0
  %222 = vmatpush2.bf16.msra.mxu0 %v167
  %223 = vmatprep.mubr.bf16.mxu0 %v88
  %224 = vmatmul.mubr.bf16.gmra.mxu0 %v87
  %v225 = vpop.f32.mrf.mxu0
  %v226 = vadd.f32 %v58, %v225
  %v227 = vpop.f32.mrf.mxu0
  %v228 = vpop.f32.mrf.mxu0
  %v229 = vadd.f32 %v63, %v228
  %v230 = vpop.f32.mrf.mxu0
  %231 = vmatprep.mubr.bf16.mxu0 %v90
  %232 = vmatmul.mubr.bf16.gmra.mxu0 %v89
  %v233 = vpop.f32.mrf.mxu0
  %v234 = vadd.f32 %v68, %v233
  %v235 = vpop.f32.mrf.mxu0
  %v236 = vpop.f32.mrf.mxu0
  %v237 = vadd.f32 %v73, %v236
  %v238 = vpop.f32.mrf.mxu0
  %239 = vdwg.mxu0
  %v240 = vmax.f32 %v226, 0.0
  %v241 = vmax.f32 %v229, 0.0
  %v242 = vmax.f32 %v234, 0.0
  %v243 = vmax.f32 %v237, 0.0
  %vm244 = vcmask 261120
  %245 = vst.msk [vmem:[%s3] sm:$0xff] %vm244, %v240
  %246 = vst.msk [vmem:[%s3 + $0x8] sm:$0xff] %vm244, %v241
  %247 = vst.msk [vmem:[%s3 + $0x10] sm:$0xff] %vm244, %v242
  %248 = vst.msk [vmem:[%s3 + $0x18] sm:$0xff] %vm244, %v243
  // Predicated region
  $region14: #{temporal_vae_forward.15} parent=0 // pred_check
    _
  $region15: #{temporal_vae_forward.15} parent=0 // pred_check_branch
    %250 = sbr.rel (0) target = $region17
  $region16: #{temporal_vae_forward.15} parent=0 // pred_region
    _
  $region17: #{temporal_vae_forward.15} parent=0 // pred_fallthru
    _
  // Predicated region
  $region18: #{temporal_vae_forward.15} parent=0 // pred_check
    _
  $region19: #{temporal_vae_forward.15} parent=0 // pred_check_branch
    %252 = sbr.rel (0) target = $region21
  $region20: #{temporal_vae_forward.15} parent=0 // pred_region
    _
  $region21: #{temporal_vae_forward.15} parent=0 // pred_fallthru
    _

// kernel: temporal_vae_forward.16
$region0: #{temporal_vae_forward.16}
  #allocation0 [shape = 'u32[]', space=smem, size = 0x4, offset = 0x4, fixed_abs, tag = 'smem constant byte address 0x4 - core index']
  #allocation1 [shape = 'u32[144,128]{1,0:T(1,128)}', space=vmem, size = 0x12000, scoped, tag = 'internal scratch']
  %s0 = inlined_call_operand.vmem [shape: f32[8,128], index: 0, kind: input, shape index: {}]
  %s1 = inlined_call_operand.vmem [shape: f32[8,8], index: 1, kind: input, shape index: {}]
  %s2 = inlined_call_operand.vmem [shape: f32[128,64], index: 2, kind: input, shape index: {}]
  %s3 = inlined_call_operand.vmem [shape: f32[1,64], index: 3, kind: input, shape index: {}]
  %s4 = inlined_call_operand.vmem [shape: f32[64,16], index: 4, kind: input, shape index: {}]
  %s5 = inlined_call_operand.vmem [shape: f32[16,16], index: 5, kind: input, shape index: {}]
  %s6 = inlined_call_operand.vmem [shape: f32[1,16], index: 6, kind: input, shape index: {}]
  %s7 = inlined_call_operand.vmem [shape: f32[8,16], index: 7, kind: input, shape index: {}]
  %s8 = inlined_call_operand.vmem [shape: f32[16,16], index: 8, kind: input, shape index: {}]
  %s9 = inlined_call_operand.vmem [shape: f32[1,16], index: 9, kind: input, shape index: {}]
  %s10 = inlined_call_operand.vmem [shape: f32[16,64], index: 10, kind: input, shape index: {}]
  %s11 = inlined_call_operand.vmem [shape: f32[1,64], index: 11, kind: input, shape index: {}]
  %s12 = inlined_call_operand.vmem [shape: f32[64,128], index: 12, kind: input, shape index: {}]
  %s13 = inlined_call_operand.vmem [shape: f32[1,128], index: 13, kind: input, shape index: {}]
  %s14 = inlined_call_operand.vmem [shape: f32[8,8], index: 14, kind: output, shape index: {0}]
  %s15 = inlined_call_operand.vmem [shape: f32[8,8], index: 15, kind: output, shape index: {1}]
  %s16 = inlined_call_operand.vmem [shape: f32[8,128], index: 16, kind: output, shape index: {2}]
  %17 = xla_tuple %s14, %s15, %s16
  %s18 = sld [smem:[#allocation0]]
  $region82: #{temporal_vae_forward.16} parent=0
    _
  %s20 = ssub.s32 1, %s18
  %s21 = scalar_select 0, %s20, %s18
  // Predicated region
  $region2: #{temporal_vae_forward.16} parent=0 // pred_check
    _
  $region3: #{temporal_vae_forward.16} parent=0 // pred_check_branch
    %23 = sbr.rel (0) target = $region5
  $region4: #{temporal_vae_forward.16} parent=0 // pred_region
    _
  $region5: #{temporal_vae_forward.16} parent=0 // pred_fallthru
    _
  // Predicated region
  $region6: #{temporal_vae_forward.16} parent=0 // pred_check
    _
  $region7: #{temporal_vae_forward.16} parent=0 // pred_check_branch
    %25 = sbr.rel (0) target = $region9
  $region8: #{temporal_vae_forward.16} parent=0 // pred_region
    _
  $region9: #{temporal_vae_forward.16} parent=0 // pred_fallthru
    _
  // Predicated region
  $region10: #{temporal_vae_forward.16} parent=0 // pred_check
    _
  $region11: #{temporal_vae_forward.16} parent=0 // pred_check_branch
    %27 = sbr.rel (0) target = $region13
  $region12: #{temporal_vae_forward.16} parent=0 // pred_region
    _
  $region13: #{temporal_vae_forward.16} parent=0 // pred_fallthru
    _
  // Predicated region
  $region14: #{temporal_vae_forward.16} parent=0 // pred_check
    _
  $region15: #{temporal_vae_forward.16} parent=0 // pred_check_branch
    %29 = sbr.rel (0) target = $region17
  $region16: #{temporal_vae_forward.16} parent=0 // pred_region
    _
  $region17: #{temporal_vae_forward.16} parent=0 // pred_fallthru
    _
  // Predicated region
  $region18: #{temporal_vae_forward.16} parent=0 // pred_check
    _
  $region19: #{temporal_vae_forward.16} parent=0 // pred_check_branch
    %31 = sbr.rel (0) target = $region21
  $region20: #{temporal_vae_forward.16} parent=0 // pred_region
    _
  $region21: #{temporal_vae_forward.16} parent=0 // pred_fallthru
    _
  // Predicated region
  $region22: #{temporal_vae_forward.16} parent=0 // pred_check
    _
  $region23: #{temporal_vae_forward.16} parent=0 // pred_check_branch
    %33 = sbr.rel (0) target = $region25
  $region24: #{temporal_vae_forward.16} parent=0 // pred_region
    _
  $region25: #{temporal_vae_forward.16} parent=0 // pred_fallthru
    _
  // Predicated region
  $region26: #{temporal_vae_forward.16} parent=0 // pred_check
    _
  $region27: #{temporal_vae_forward.16} parent=0 // pred_check_branch
    %35 = sbr.rel (0) target = $region29
  $region28: #{temporal_vae_forward.16} parent=0 // pred_region
    _
  $region29: #{temporal_vae_forward.16} parent=0 // pred_fallthru
    _
  // Predicated region
  $region30: #{temporal_vae_forward.16} parent=0 // pred_check
    _
  $region31: #{temporal_vae_forward.16} parent=0 // pred_check_branch
    %37 = sbr.rel (0) target = $region33
  $region32: #{temporal_vae_forward.16} parent=0 // pred_region
    _
  $region33: #{temporal_vae_forward.16} parent=0 // pred_fallthru
    _
  // Predicated region
  $region34: #{temporal_vae_forward.16} parent=0 // pred_check
    _
  $region35: #{temporal_vae_forward.16} parent=0 // pred_check_branch
    %39 = sbr.rel (0) target = $region37
  $region36: #{temporal_vae_forward.16} parent=0 // pred_region
    _
  $region37: #{temporal_vae_forward.16} parent=0 // pred_fallthru
    _
  // Predicated region
  $region38: #{temporal_vae_forward.16} parent=0 // pred_check
    _
  $region39: #{temporal_vae_forward.16} parent=0 // pred_check_branch
    %41 = sbr.rel (0) target = $region41
  $region40: #{temporal_vae_forward.16} parent=0 // pred_region
    _
  $region41: #{temporal_vae_forward.16} parent=0 // pred_fallthru
    _
  // Predicated region
  $region42: #{temporal_vae_forward.16} parent=0 // pred_check
    _
  $region43: #{temporal_vae_forward.16} parent=0 // pred_check_branch
    %43 = sbr.rel (0) target = $region45
  $region44: #{temporal_vae_forward.16} parent=0 // pred_region
    _
  $region45: #{temporal_vae_forward.16} parent=0 // pred_fallthru
    _
  // Predicated region
  $region46: #{temporal_vae_forward.16} parent=0 // pred_check
    _
  $region47: #{temporal_vae_forward.16} parent=0 // pred_check_branch
    %45 = sbr.rel (0) target = $region49
  $region48: #{temporal_vae_forward.16} parent=0 // pred_region
    _
  $region49: #{temporal_vae_forward.16} parent=0 // pred_fallthru
    _
  // Predicated region
  $region50: #{temporal_vae_forward.16} parent=0 // pred_check
    _
  $region51: #{temporal_vae_forward.16} parent=0 // pred_check_branch
    %47 = sbr.rel (0) target = $region53
  $region52: #{temporal_vae_forward.16} parent=0 // pred_region
    _
  $region53: #{temporal_vae_forward.16} parent=0 // pred_fallthru
    _
  // Predicated region
  $region54: #{temporal_vae_forward.16} parent=0 // pred_check
    _
  $region55: #{temporal_vae_forward.16} parent=0 // pred_check_branch
    %49 = sbr.rel (0) target = $region57
  $region56: #{temporal_vae_forward.16} parent=0 // pred_region
    _
  $region57: #{temporal_vae_forward.16} parent=0 // pred_fallthru
    _
  %v50 = vld [vmem:[%s0] sm:$0xff]
  %v51 = vld [vmem:[%s2] sm:$0xff]
  %v52 = vld [vmem:[%s2 + $0x8] sm:$0xff]
  %v53 = vld [vmem:[%s2 + $0x10] sm:$0xff]
  %v54 = vld [vmem:[%s2 + $0x18] sm:$0xff]
  %v55 = vld [vmem:[%s2 + $0x20] sm:$0xff]
  %v56 = vld [vmem:[%s2 + $0x28] sm:$0xff]
  %v57 = vld [vmem:[%s2 + $0x30] sm:$0xff]
  %v58 = vld [vmem:[%s2 + $0x38] sm:$0xff]
  %v59 = vld [vmem:[%s2 + $0x40] sm:$0xff]
  %v60 = vld [vmem:[%s2 + $0x48] sm:$0xff]
  %v61 = vld [vmem:[%s2 + $0x50] sm:$0xff]
  %v62 = vld [vmem:[%s2 + $0x58] sm:$0xff]
  %v63 = vld [vmem:[%s2 + $0x60] sm:$0xff]
  %v64 = vld [vmem:[%s2 + $0x68] sm:$0xff]
  %v65 = vld [vmem:[%s2 + $0x70] sm:$0xff]
  %v66 = vld [vmem:[%s2 + $0x78] sm:$0xff]
  %v67 = vld [vmem:[%s3] sm:$0x1]
  %v69 = vlaneseq
  %v70 = vshrl.u32 %v69, 7
  %v71 = vsub.s32 0, %v70
  %v72 = vrot.slane %v67, %v71
  %74 = vmatprep.subr.mxu0 0.0
  %75 = vmatpush1.msra.mxu0 %v66
  %76 = vmatprep.subr.mxu0 0.0
  %77 = vmatpush1.msra.mxu0 %v65
  %78 = vmatprep.subr.mxu0 0.0
  %79 = vmatpush1.msra.mxu0 %v64
  %80 = vmatprep.subr.mxu0 0.0
  %81 = vmatpush1.msra.mxu0 %v63
  %82 = vmatprep.subr.mxu0 0.0
  %83 = vmatpush1.msra.mxu0 %v62
  %84 = vmatprep.subr.mxu0 0.0
  %85 = vmatpush1.msra.mxu0 %v61
  %86 = vmatprep.subr.mxu0 0.0
  %87 = vmatpush1.msra.mxu0 %v60
  %88 = vmatprep.subr.mxu0 0.0
  %89 = vmatpush1.msra.mxu0 %v59
  %90 = vmatprep.subr.mxu0 0.0
  %91 = vmatpush1.msra.mxu0 %v58
  %92 = vmatprep.subr.mxu0 0.0
  %93 = vmatpush1.msra.mxu0 %v57
  %94 = vmatprep.subr.mxu0 0.0
  %95 = vmatpush1.msra.mxu0 %v56
  %96 = vmatprep.subr.mxu0 0.0
  %97 = vmatpush1.msra.mxu0 %v55
  %98 = vmatprep.subr.mxu0 0.0
  %99 = vmatpush1.msra.mxu0 %v54
  %100 = vmatprep.subr.mxu0 0.0
  %101 = vmatpush1.msra.mxu0 %v53
  %102 = vmatprep.subr.mxu0 0.0
  %103 = vmatpush1.msra.mxu0 %v52
  %104 = vmatprep.subr.mxu0 0.0
  %105 = vmatpush1.msra.mxu0 %v51
  %106 = vmatprep.subr.mxu0 0.0
  %107 = vmatpush2.msra.mxu0 0.0
  %108 = vmatprep.subr.mxu0 0.0
  %109 = vmatpush2.msra.mxu0 0.0
  %110 = vmatprep.subr.mxu0 0.0
  %111 = vmatpush2.msra.mxu0 0.0
  %112 = vmatprep.subr.mxu0 0.0
  %113 = vmatpush2.msra.mxu0 0.0
  %114 = vmatprep.subr.mxu0 0.0
  %115 = vmatpush2.msra.mxu0 0.0
  %116 = vmatprep.subr.mxu0 0.0
  %117 = vmatpush2.msra.mxu0 0.0
  %118 = vmatprep.subr.mxu0 0.0
  %119 = vmatpush2.msra.mxu0 0.0
  %120 = vmatprep.subr.mxu0 0.0
  %121 = vmatpush2.msra.mxu0 0.0
  %122 = vmatprep.subr.mxu0 0.0
  %123 = vmatpush2.msra.mxu0 0.0
  %124 = vmatprep.subr.mxu0 0.0
  %125 = vmatpush2.msra.mxu0 0.0
  %126 = vmatprep.subr.mxu0 0.0
  %127 = vmatpush2.msra.mxu0 0.0
  %128 = vmatprep.subr.mxu0 0.0
  %129 = vmatpush2.msra.mxu0 0.0
  %130 = vmatprep.subr.mxu0 0.0
  %131 = vmatpush2.msra.mxu0 0.0
  %132 = vmatprep.subr.mxu0 0.0
  %133 = vmatpush2.msra.mxu0 0.0
  %134 = vmatprep.subr.mxu0 0.0
  %135 = vmatpush2.msra.mxu0 0.0
  %136 = vmatprep.subr.mxu0 0.0
  %137 = vmatpush2.msra.mxu0 0.0
  %138 = vmatprep.mubr.f32.mxu0 0.0
  %139 = vmatmul.mubr.f32.gmra.mxu0 %v50
  %v140 = vpop.f32.mrf.mxu0
  %v141 = vadd.f32 %v72, %v140
  %v142 = vpop.f32.mrf.mxu0
  %143 = vdwg.mxu0
  %v144 = vmax.f32 %v141, 0.0
  %v145 = vld [vmem:[%s4] sm:$0xff]
  %v146 = vld [vmem:[%s4 + $0x8] sm:$0xff]
  %v147 = vld [vmem:[%s4 + $0x10] sm:$0xff]
  %v148 = vld [vmem:[%s4 + $0x18] sm:$0xff]
  %v149 = vld [vmem:[%s4 + $0x20] sm:$0xff]
  %v150 = vld [vmem:[%s4 + $0x28] sm:$0xff]
  %v151 = vld [vmem:[%s4 + $0x30] sm:$0xff]
  %v152 = vld [vmem:[%s4 + $0x38] sm:$0xff]
  %v153 = vld [vmem:[%s6] sm:$0x1]
  %v155 = vlaneseq
  %v156 = vshrl.u32 %v155, 7
  %v157 = vsub.s32 0, %v156
  %v158 = vrot.slane %v153, %v157
  %vm160 = vcmask 523264
  %v162 = vsel %vm160, %v144, 0
  %164 = vmatprep.subr.mxu0 0.0
  %165 = vmatpush1.msra.mxu0 0.0
  %166 = vmatprep.subr.mxu0 0.0
  %167 = vmatpush1.msra.mxu0 0.0
  %168 = vmatprep.subr.mxu0 0.0
  %169 = vmatpush1.msra.mxu0 0.0
  %170 = vmatprep.subr.mxu0 0.0
  %171 = vmatpush1.msra.mxu0 0.0
  %172 = vmatprep.subr.mxu0 0.0
  %173 = vmatpush1.msra.mxu0 0.0
  %174 = vmatprep.subr.mxu0 0.0
  %175 = vmatpush1.msra.mxu0 0.0
  %176 = vmatprep.subr.mxu0 0.0
  %177 = vmatpush1.msra.mxu0 0.0
  %178 = vmatprep.subr.mxu0 0.0
  %179 = vmatpush1.msra.mxu0 0.0
  %180 = vmatprep.subr.mxu0 0.0
  %181 = vmatpush1.msra.mxu0 %v152
  %182 = vmatprep.subr.mxu0 0.0
  %183 = vmatpush1.msra.mxu0 %v151
  %184 = vmatprep.subr.mxu0 0.0
  %185 = vmatpush1.msra.mxu0 %v150
  %186 = vmatprep.subr.mxu0 0.0
  %187 = vmatpush1.msra.mxu0 %v149
  %188 = vmatprep.subr.mxu0 0.0
  %189 = vmatpush1.msra.mxu0 %v148
  %190 = vmatprep.subr.mxu0 0.0
  %191 = vmatpush1.msra.mxu0 %v147
  %192 = vmatprep.subr.mxu0 0.0
  %193 = vmatpush1.msra.mxu0 %v146
  %194 = vmatprep.subr.mxu0 0.0
  %195 = vmatpush1.msra.mxu0 %v145
  %196 = vmatprep.subr.mxu0 0.0
  %197 = vmatpush2.msra.mxu0 0.0
  %198 = vmatprep.subr.mxu0 0.0
  %199 = vmatpush2.msra.mxu0 0.0
  %200 = vmatprep.subr.mxu0 0.0
  %201 = vmatpush2.msra.mxu0 0.0
  %202 = vmatprep.subr.mxu0 0.0
  %203 = vmatpush2.msra.mxu0 0.0
  %204 = vmatprep.subr.mxu0 0.0
  %205 = vmatpush2.msra.mxu0 0.0
  %206 = vmatprep.subr.mxu0 0.0
  %207 = vmatpush2.msra.mxu0 0.0
  %208 = vmatprep.subr.mxu0 0.0
  %209 = vmatpush2.msra.mxu0 0.0
  %210 = vmatprep.subr.mxu0 0.0
  %211 = vmatpush2.msra.mxu0 0.0
  %212 = vmatprep.subr.mxu0 0.0
  %213 = vmatpush2.msra.mxu0 0.0
  %214 = vmatprep.subr.mxu0 0.0
  %215 = vmatpush2.msra.mxu0 0.0
  %216 = vmatprep.subr.mxu0 0.0
  %217 = vmatpush2.msra.mxu0 0.0
  %218 = vmatprep.subr.mxu0 0.0
  %219 = vmatpush2.msra.mxu0 0.0
  %220 = vmatprep.subr.mxu0 0.0
  %221 = vmatpush2.msra.mxu0 0.0
  %222 = vmatprep.subr.mxu0 0.0
  %223 = vmatpush2.msra.mxu0 0.0
  %224 = vmatprep.subr.mxu0 0.0
  %225 = vmatpush2.msra.mxu0 0.0
  %226 = vmatprep.subr.mxu0 0.0
  %227 = vmatpush2.msra.mxu0 0.0
  %228 = vmatprep.mubr.f32.mxu0 0.0
  %229 = vmatmul.mubr.f32.gmra.mxu0 %v162
  %v230 = vpop.f32.mrf.mxu0
  %v231 = vadd.f32 %v158, %v230
  %v232 = vpop.f32.mrf.mxu0
  %233 = vdwg.mxu0
  %v234 = vld [vmem:[%s5] sm:$0xff]
  %v235 = vld [vmem:[%s5 + $0x8] sm:$0xff]
  %vm236 = vcmask 130048
  %v238 = vsel %vm236, 0.0, 0
  %240 = vmatprep.subr.mxu0 0.0
  %241 = vmatpush1.msra.mxu0 0.0
  %242 = vmatprep.subr.mxu0 0.0
  %243 = vmatpush1.msra.mxu0 0.0
  %244 = vmatprep.subr.mxu0 0.0
  %245 = vmatpush1.msra.mxu0 0.0
  %246 = vmatprep.subr.mxu0 0.0
  %247 = vmatpush1.msra.mxu0 0.0
  %248 = vmatprep.subr.mxu0 0.0
  %249 = vmatpush1.msra.mxu0 0.0
  %250 = vmatprep.subr.mxu0 0.0
  %251 = vmatpush1.msra.mxu0 0.0
  %252 = vmatprep.subr.mxu0 0.0
  %253 = vmatpush1.msra.mxu0 0.0
  %254 = vmatprep.subr.mxu0 0.0
  %255 = vmatpush1.msra.mxu0 0.0
  %256 = vmatprep.subr.mxu0 0.0
  %257 = vmatpush1.msra.mxu0 0.0
  %258 = vmatprep.subr.mxu0 0.0
  %259 = vmatpush1.msra.mxu0 0.0
  %260 = vmatprep.subr.mxu0 0.0
  %261 = vmatpush1.msra.mxu0 0.0
  %262 = vmatprep.subr.mxu0 0.0
  %263 = vmatpush1.msra.mxu0 0.0
  %264 = vmatprep.subr.mxu0 0.0
  %265 = vmatpush1.msra.mxu0 0.0
  %266 = vmatprep.subr.mxu0 0.0
  %267 = vmatpush1.msra.mxu0 0.0
  %268 = vmatprep.subr.mxu0 0.0
  %269 = vmatpush1.msra.mxu0 %v235
  %270 = vmatprep.subr.mxu0 0.0
  %271 = vmatpush1.msra.mxu0 %v234
  %272 = vmatprep.subr.mxu0 0.0
  %273 = vmatpush2.msra.mxu0 0.0
  %274 = vmatprep.subr.mxu0 0.0
  %275 = vmatpush2.msra.mxu0 0.0
  %276 = vmatprep.subr.mxu0 0.0
  %277 = vmatpush2.msra.mxu0 0.0
  %278 = vmatprep.subr.mxu0 0.0
  %279 = vmatpush2.msra.mxu0 0.0
  %280 = vmatprep.subr.mxu0 0.0
  %281 = vmatpush2.msra.mxu0 0.0
  %282 = vmatprep.subr.mxu0 0.0
  %283 = vmatpush2.msra.mxu0 0.0
  %284 = vmatprep.subr.mxu0 0.0
  %285 = vmatpush2.msra.mxu0 0.0
  %286 = vmatprep.subr.mxu0 0.0
  %287 = vmatpush2.msra.mxu0 0.0
  %288 = vmatprep.subr.mxu0 0.0
  %289 = vmatpush2.msra.mxu0 0.0
  %290 = vmatprep.subr.mxu0 0.0
  %291 = vmatpush2.msra.mxu0 0.0
  %292 = vmatprep.subr.mxu0 0.0
  %293 = vmatpush2.msra.mxu0 0.0
  %294 = vmatprep.subr.mxu0 0.0
  %295 = vmatpush2.msra.mxu0 0.0
  %296 = vmatprep.subr.mxu0 0.0
  %297 = vmatpush2.msra.mxu0 0.0
  %298 = vmatprep.subr.mxu0 0.0
  %299 = vmatpush2.msra.mxu0 0.0
  %300 = vmatprep.subr.mxu0 0.0
  %301 = vmatpush2.msra.mxu0 0.0
  %302 = vmatprep.subr.mxu0 0.0
  %303 = vmatpush2.msra.mxu0 0.0
  %304 = vmatprep.mubr.f32.mxu0 0.0
  %305 = vmatmul.mubr.f32.gmra.mxu0 %v238
  %v306 = vpop.f32.mrf.mxu0
  %v307 = vadd.f32 0.0, %v306
  %v308 = vpop.f32.mrf.mxu0
  %309 = vdwg.mxu0
  %v310 = vadd.f32 %v231, %v307
  %v311 = vtanh.pop %v310
  %v313 = vsel %vm236, %v311, 0
  %315 = vmatprep.subr.mxu0 0.0
  %316 = vmatpush1.msra.mxu0 0.0
  %317 = vmatprep.subr.mxu0 0.0
  %318 = vmatpush1.msra.mxu0 0.0
  %319 = vmatprep.subr.mxu0 0.0
  %320 = vmatpush1.msra.mxu0 0.0
  %321 = vmatprep.subr.mxu0 0.0
  %322 = vmatpush1.msra.mxu0 0.0
  %323 = vmatprep.subr.mxu0 0.0
  %324 = vmatpush1.msra.mxu0 0.0
  %325 = vmatprep.subr.mxu0 0.0
  %326 = vmatpush1.msra.mxu0 0.0
  %327 = vmatprep.subr.mxu0 0.0
  %328 = vmatpush1.msra.mxu0 0.0
  %329 = vmatprep.subr.mxu0 0.0
  %330 = vmatpush1.msra.mxu0 0.0
  %331 = vmatprep.subr.mxu0 0.0
  %332 = vmatpush1.msra.mxu0 0.0
  %333 = vmatprep.subr.mxu0 0.0
  %334 = vmatpush1.msra.mxu0 0.0
  %335 = vmatprep.subr.mxu0 0.0
  %336 = vmatpush1.msra.mxu0 0.0
  %337 = vmatprep.subr.mxu0 0.0
  %338 = vmatpush1.msra.mxu0 0.0
  %339 = vmatprep.subr.mxu0 0.0
  %340 = vmatpush1.msra.mxu0 0.0
  %341 = vmatprep.subr.mxu0 0.0
  %342 = vmatpush1.msra.mxu0 0.0
  %343 = vmatprep.subr.mxu0 0.0
  %344 = vmatpush1.msra.mxu0 %v235
  %345 = vmatprep.subr.mxu0 0.0
  %346 = vmatpush1.msra.mxu0 %v234
  %347 = vmatprep.subr.mxu0 0.0
  %348 = vmatpush2.msra.mxu0 0.0
  %349 = vmatprep.subr.mxu0 0.0
  %350 = vmatpush2.msra.mxu0 0.0
  %351 = vmatprep.subr.mxu0 0.0
  %352 = vmatpush2.msra.mxu0 0.0
  %353 = vmatprep.subr.mxu0 0.0
  %354 = vmatpush2.msra.mxu0 0.0
  %355 = vmatprep.subr.mxu0 0.0
  %356 = vmatpush2.msra.mxu0 0.0
  %357 = vmatprep.subr.mxu0 0.0
  %358 = vmatpush2.msra.mxu0 0.0
  %359 = vmatprep.subr.mxu0 0.0
  %360 = vmatpush2.msra.mxu0 0.0
  %361 = vmatprep.subr.mxu0 0.0
  %362 = vmatpush2.msra.mxu0 0.0
  %363 = vmatprep.subr.mxu0 0.0
  %364 = vmatpush2.msra.mxu0 0.0
  %365 = vmatprep.subr.mxu0 0.0
  %366 = vmatpush2.msra.mxu0 0.0
  %367 = vmatprep.subr.mxu0 0.0
  %368 = vmatpush2.msra.mxu0 0.0
  %369 = vmatprep.subr.mxu0 0.0
  %370 = vmatpush2.msra.mxu0 0.0
  %371 = vmatprep.subr.mxu0 0.0
  %372 = vmatpush2.msra.mxu0 0.0
  %373 = vmatprep.subr.mxu0 0.0
  %374 = vmatpush2.msra.mxu0 0.0
  %375 = vmatprep.subr.mxu0 0.0
  %376 = vmatpush2.msra.mxu0 0.0
  %377 = vmatprep.subr.mxu0 0.0
  %378 = vmatpush2.msra.mxu0 0.0
  %379 = vmatprep.mubr.f32.mxu0 0.0
  %380 = vmatmul.mubr.f32.gmra.mxu0 %v313
  %v381 = vpop.f32.mrf.mxu0
  %v382 = vadd.f32 0.0, %v381
  %v383 = vpop.f32.mrf.mxu0
  %384 = vdwg.mxu0
  %v386 = vrot.slane %v382, 6
  %v388 = vadd.f32 %v231, %v386
  %v389 = vtanh.pop %v388
  %v391 = vrot.slane %v389, 2
  %v392 = vsel %vm236, %v391, 0
  %394 = vmatprep.subr.mxu0 0.0
  %395 = vmatpush1.msra.mxu0 0.0
  %396 = vmatprep.subr.mxu0 0.0
  %397 = vmatpush1.msra.mxu0 0.0
  %398 = vmatprep.subr.mxu0 0.0
  %399 = vmatpush1.msra.mxu0 0.0
  %400 = vmatprep.subr.mxu0 0.0
  %401 = vmatpush1.msra.mxu0 0.0
  %402 = vmatprep.subr.mxu0 0.0
  %403 = vmatpush1.msra.mxu0 0.0
  %404 = vmatprep.subr.mxu0 0.0
  %405 = vmatpush1.msra.mxu0 0.0
  %406 = vmatprep.subr.mxu0 0.0
  %407 = vmatpush1.msra.mxu0 0.0
  %408 = vmatprep.subr.mxu0 0.0
  %409 = vmatpush1.msra.mxu0 0.0
  %410 = vmatprep.subr.mxu0 0.0
  %411 = vmatpush1.msra.mxu0 0.0
  %412 = vmatprep.subr.mxu0 0.0
  %413 = vmatpush1.msra.mxu0 0.0
  %414 = vmatprep.subr.mxu0 0.0
  %415 = vmatpush1.msra.mxu0 0.0
  %416 = vmatprep.subr.mxu0 0.0
  %417 = vmatpush1.msra.mxu0 0.0
  %418 = vmatprep.subr.mxu0 0.0
  %419 = vmatpush1.msra.mxu0 0.0
  %420 = vmatprep.subr.mxu0 0.0
  %421 = vmatpush1.msra.mxu0 0.0
  %422 = vmatprep.subr.mxu0 0.0
  %423 = vmatpush1.msra.mxu0 %v235
  %424 = vmatprep.subr.mxu0 0.0
  %425 = vmatpush1.msra.mxu0 %v234
  %426 = vmatprep.subr.mxu0 0.0
  %427 = vmatpush2.msra.mxu0 0.0
  %428 = vmatprep.subr.mxu0 0.0
  %429 = vmatpush2.msra.mxu0 0.0
  %430 = vmatprep.subr.mxu0 0.0
  %431 = vmatpush2.msra.mxu0 0.0
  %432 = vmatprep.subr.mxu0 0.0
  %433 = vmatpush2.msra.mxu0 0.0
  %434 = vmatprep.subr.mxu0 0.0
  %435 = vmatpush2.msra.mxu0 0.0
  %436 = vmatprep.subr.mxu0 0.0
  %437 = vmatpush2.msra.mxu0 0.0
  %438 = vmatprep.subr.mxu0 0.0
  %439 = vmatpush2.msra.mxu0 0.0
  %440 = vmatprep.subr.mxu0 0.0
  %441 = vmatpush2.msra.mxu0 0.0
  %442 = vmatprep.subr.mxu0 0.0
  %443 = vmatpush2.msra.mxu0 0.0
  %444 = vmatprep.subr.mxu0 0.0
  %445 = vmatpush2.msra.mxu0 0.0
  %446 = vmatprep.subr.mxu0 0.0
  %447 = vmatpush2.msra.mxu0 0.0
  %448 = vmatprep.subr.mxu0 0.0
  %449 = vmatpush2.msra.mxu0 0.0
  %450 = vmatprep.subr.mxu0 0.0
  %451 = vmatpush2.msra.mxu0 0.0
  %452 = vmatprep.subr.mxu0 0.0
  %453 = vmatpush2.msra.mxu0 0.0
  %454 = vmatprep.subr.mxu0 0.0
  %455 = vmatpush2.msra.mxu0 0.0
  %456 = vmatprep.subr.mxu0 0.0
  %457 = vmatpush2.msra.mxu0 0.0
  %458 = vmatprep.mubr.f32.mxu0 0.0
  %459 = vmatmul.mubr.f32.gmra.mxu0 %v392
  %v460 = vpop.f32.mrf.mxu0
  %v461 = vadd.f32 0.0, %v460
  %v462 = vpop.f32.mrf.mxu0
  %463 = vdwg.mxu0
  %v465 = vrot.slane %v461, 4
  %v467 = vadd.f32 %v231, %v465
  %v468 = vtanh.pop %v467
  %v470 = vrot.slane %v468, 4
  %v471 = vsel %vm236, %v470, 0
  %473 = vmatprep.subr.mxu0 0.0
  %474 = vmatpush1.msra.mxu0 0.0
  %475 = vmatprep.subr.mxu0 0.0
  %476 = vmatpush1.msra.mxu0 0.0
  %477 = vmatprep.subr.mxu0 0.0
  %478 = vmatpush1.msra.mxu0 0.0
  %479 = vmatprep.subr.mxu0 0.0
  %480 = vmatpush1.msra.mxu0 0.0
  %481 = vmatprep.subr.mxu0 0.0
  %482 = vmatpush1.msra.mxu0 0.0
  %483 = vmatprep.subr.mxu0 0.0
  %484 = vmatpush1.msra.mxu0 0.0
  %485 = vmatprep.subr.mxu0 0.0
  %486 = vmatpush1.msra.mxu0 0.0
  %487 = vmatprep.subr.mxu0 0.0
  %488 = vmatpush1.msra.mxu0 0.0
  %489 = vmatprep.subr.mxu0 0.0
  %490 = vmatpush1.msra.mxu0 0.0
  %491 = vmatprep.subr.mxu0 0.0
  %492 = vmatpush1.msra.mxu0 0.0
  %493 = vmatprep.subr.mxu0 0.0
  %494 = vmatpush1.msra.mxu0 0.0
  %495 = vmatprep.subr.mxu0 0.0
  %496 = vmatpush1.msra.mxu0 0.0
  %497 = vmatprep.subr.mxu0 0.0
  %498 = vmatpush1.msra.mxu0 0.0
  %499 = vmatprep.subr.mxu0 0.0
  %500 = vmatpush1.msra.mxu0 0.0
  %501 = vmatprep.subr.mxu0 0.0
  %502 = vmatpush1.msra.mxu0 %v235
  %503 = vmatprep.subr.mxu0 0.0
  %504 = vmatpush1.msra.mxu0 %v234
  %505 = vmatprep.subr.mxu0 0.0
  %506 = vmatpush2.msra.mxu0 0.0
  %507 = vmatprep.subr.mxu0 0.0
  %508 = vmatpush2.msra.mxu0 0.0
  %509 = vmatprep.subr.mxu0 0.0
  %510 = vmatpush2.msra.mxu0 0.0
  %511 = vmatprep.subr.mxu0 0.0
  %512 = vmatpush2.msra.mxu0 0.0
  %513 = vmatprep.subr.mxu0 0.0
  %514 = vmatpush2.msra.mxu0 0.0
  %515 = vmatprep.subr.mxu0 0.0
  %516 = vmatpush2.msra.mxu0 0.0
  %517 = vmatprep.subr.mxu0 0.0
  %518 = vmatpush2.msra.mxu0 0.0
  %519 = vmatprep.subr.mxu0 0.0
  %520 = vmatpush2.msra.mxu0 0.0
  %521 = vmatprep.subr.mxu0 0.0
  %522 = vmatpush2.msra.mxu0 0.0
  %523 = vmatprep.subr.mxu0 0.0
  %524 = vmatpush2.msra.mxu0 0.0
  %525 = vmatprep.subr.mxu0 0.0
  %526 = vmatpush2.msra.mxu0 0.0
  %527 = vmatprep.subr.mxu0 0.0
  %528 = vmatpush2.msra.mxu0 0.0
  %529 = vmatprep.subr.mxu0 0.0
  %530 = vmatpush2.msra.mxu0 0.0
  %531 = vmatprep.subr.mxu0 0.0
  %532 = vmatpush2.msra.mxu0 0.0
  %533 = vmatprep.subr.mxu0 0.0
  %534 = vmatpush2.msra.mxu0 0.0
  %535 = vmatprep.subr.mxu0 0.0
  %536 = vmatpush2.msra.mxu0 0.0
  %537 = vmatprep.mubr.f32.mxu0 0.0
  %538 = vmatmul.mubr.f32.gmra.mxu0 %v471
  %v539 = vpop.f32.mrf.mxu0
  %v540 = vadd.f32 0.0, %v539
  %v541 = vpop.f32.mrf.mxu0
  %542 = vdwg.mxu0
  %v544 = vrot.slane %v540, 2
  %v546 = vadd.f32 %v231, %v544
  %v547 = vtanh.pop %v546
  %vm548 = vcmask 1041408
  %v549 = vsel %vm548, %v311, %v389
  %vm550 = vcmask 1043456
  %v551 = vsel %vm550, %v549, %v468
  %vm552 = vcmask 1045504
  %v553 = vsel %vm552, %v551, %v547
  %vm554 = vcmask 64512
  %555 = vst.msk [vmem:[%s14] sm:$0xff] %vm554, %v553
  %557 = vrot.lane.b32.xlu0 %v553, 120
  %v558 = vpop.permute.xlu0 %557
  %560 = vst.msk [vmem:[%s15] sm:$0xff] %vm554, %v558
  %v561 = vld [vmem:[%s1] sm:$0xff]
  %v562 = vmul.f32 %v553, 0.5
  %v563 = vmul.f32 %v562, 1.442695
  %v564 = vpow.pop %v563
  %566 = vrot.lane.b32.xlu0 %v564, 120
  %v567 = vpop.permute.xlu0 %566
  %v569 = vmul.f32 %v561, %v567
  %v570 = vadd.f32 %v553, %v569
  %v571 = vld [vmem:[%s7] sm:$0xff]
  %v572 = vld [vmem:[%s9] sm:$0x1]
  %v574 = vlaneseq
  %v575 = vshrl.u32 %v574, 7
  %v576 = vsub.s32 0, %v575
  %v577 = vrot.slane %v572, %v576
  %v580 = vsel %vm554, %v570, 0
  %582 = vmatprep.subr.mxu0 0.0
  %583 = vmatpush1.msra.mxu0 0.0
  %584 = vmatprep.subr.mxu0 0.0
  %585 = vmatpush1.msra.mxu0 0.0
  %586 = vmatprep.subr.mxu0 0.0
  %587 = vmatpush1.msra.mxu0 0.0
  %588 = vmatprep.subr.mxu0 0.0
  %589 = vmatpush1.msra.mxu0 0.0
  %590 = vmatprep.subr.mxu0 0.0
  %591 = vmatpush1.msra.mxu0 0.0
  %592 = vmatprep.subr.mxu0 0.0
  %593 = vmatpush1.msra.mxu0 0.0
  %594 = vmatprep.subr.mxu0 0.0
  %595 = vmatpush1.msra.mxu0 0.0
  %596 = vmatprep.subr.mxu0 0.0
  %597 = vmatpush1.msra.mxu0 0.0
  %598 = vmatprep.subr.mxu0 0.0
  %599 = vmatpush1.msra.mxu0 0.0
  %600 = vmatprep.subr.mxu0 0.0
  %601 = vmatpush1.msra.mxu0 0.0
  %602 = vmatprep.subr.mxu0 0.0
  %603 = vmatpush1.msra.mxu0 0.0
  %604 = vmatprep.subr.mxu0 0.0
  %605 = vmatpush1.msra.mxu0 0.0
  %606 = vmatprep.subr.mxu0 0.0
  %607 = vmatpush1.msra.mxu0 0.0
  %608 = vmatprep.subr.mxu0 0.0
  %609 = vmatpush1.msra.mxu0 0.0
  %610 = vmatprep.subr.mxu0 0.0
  %611 = vmatpush1.msra.mxu0 0.0
  %612 = vmatprep.subr.mxu0 0.0
  %613 = vmatpush1.msra.mxu0 %v571
  %614 = vmatprep.subr.mxu0 0.0
  %615 = vmatpush2.msra.mxu0 0.0
  %616 = vmatprep.subr.mxu0 0.0
  %617 = vmatpush2.msra.mxu0 0.0
  %618 = vmatprep.subr.mxu0 0.0
  %619 = vmatpush2.msra.mxu0 0.0
  %620 = vmatprep.subr.mxu0 0.0
  %621 = vmatpush2.msra.mxu0 0.0
  %622 = vmatprep.subr.mxu0 0.0
  %623 = vmatpush2.msra.mxu0 0.0
  %624 = vmatprep.subr.mxu0 0.0
  %625 = vmatpush2.msra.mxu0 0.0
  %626 = vmatprep.subr.mxu0 0.0
  %627 = vmatpush2.msra.mxu0 0.0
  %628 = vmatprep.subr.mxu0 0.0
  %629 = vmatpush2.msra.mxu0 0.0
  %630 = vmatprep.subr.mxu0 0.0
  %631 = vmatpush2.msra.mxu0 0.0
  %632 = vmatprep.subr.mxu0 0.0
  %633 = vmatpush2.msra.mxu0 0.0
  %634 = vmatprep.subr.mxu0 0.0
  %635 = vmatpush2.msra.mxu0 0.0
  %636 = vmatprep.subr.mxu0 0.0
  %637 = vmatpush2.msra.mxu0 0.0
  %638 = vmatprep.subr.mxu0 0.0
  %639 = vmatpush2.msra.mxu0 0.0
  %640 = vmatprep.subr.mxu0 0.0
  %641 = vmatpush2.msra.mxu0 0.0
  %642 = vmatprep.subr.mxu0 0.0
  %643 = vmatpush2.msra.mxu0 0.0
  %644 = vmatprep.subr.mxu0 0.0
  %645 = vmatpush2.msra.mxu0 0.0
  %646 = vmatprep.mubr.f32.mxu0 0.0
  %647 = vmatmul.mubr.f32.gmra.mxu0 %v580
  %v648 = vpop.f32.mrf.mxu0
  %v649 = vadd.f32 %v577, %v648
  %v650 = vpop.f32.mrf.mxu0
  %651 = vdwg.mxu0
  %v652 = vld [vmem:[%s8] sm:$0xff]
  %v653 = vld [vmem:[%s8 + $0x8] sm:$0xff]
  %654 = vmatprep.subr.mxu0 0.0
  %655 = vmatpush1.msra.mxu0 0.0
  %656 = vmatprep.subr.mxu0 0.0
  %657 = vmatpush1.msra.mxu0 0.0
  %658 = vmatprep.subr.mxu0 0.0
  %659 = vmatpush1.msra.mxu0 0.0
  %660 = vmatprep.subr.mxu0 0.0
  %661 = vmatpush1.msra.mxu0 0.0
  %662 = vmatprep.subr.mxu0 0.0
  %663 = vmatpush1.msra.mxu0 0.0
  %664 = vmatprep.subr.mxu0 0.0
  %665 = vmatpush1.msra.mxu0 0.0
  %666 = vmatprep.subr.mxu0 0.0
  %667 = vmatpush1.msra.mxu0 0.0
  %668 = vmatprep.subr.mxu0 0.0
  %669 = vmatpush1.msra.mxu0 0.0
  %670 = vmatprep.subr.mxu0 0.0
  %671 = vmatpush1.msra.mxu0 0.0
  %672 = vmatprep.subr.mxu0 0.0
  %673 = vmatpush1.msra.mxu0 0.0
  %674 = vmatprep.subr.mxu0 0.0
  %675 = vmatpush1.msra.mxu0 0.0
  %676 = vmatprep.subr.mxu0 0.0
  %677 = vmatpush1.msra.mxu0 0.0
  %678 = vmatprep.subr.mxu0 0.0
  %679 = vmatpush1.msra.mxu0 0.0
  %680 = vmatprep.subr.mxu0 0.0
  %681 = vmatpush1.msra.mxu0 0.0
  %682 = vmatprep.subr.mxu0 0.0
  %683 = vmatpush1.msra.mxu0 %v653
  %684 = vmatprep.subr.mxu0 0.0
  %685 = vmatpush1.msra.mxu0 %v652
  %686 = vmatprep.subr.mxu0 0.0
  %687 = vmatpush2.msra.mxu0 0.0
  %688 = vmatprep.subr.mxu0 0.0
  %689 = vmatpush2.msra.mxu0 0.0
  %690 = vmatprep.subr.mxu0 0.0
  %691 = vmatpush2.msra.mxu0 0.0
  %692 = vmatprep.subr.mxu0 0.0
  %693 = vmatpush2.msra.mxu0 0.0
  %694 = vmatprep.subr.mxu0 0.0
  %695 = vmatpush2.msra.mxu0 0.0
  %696 = vmatprep.subr.mxu0 0.0
  %697 = vmatpush2.msra.mxu0 0.0
  %698 = vmatprep.subr.mxu0 0.0
  %699 = vmatpush2.msra.mxu0 0.0
  %700 = vmatprep.subr.mxu0 0.0
  %701 = vmatpush2.msra.mxu0 0.0
  %702 = vmatprep.subr.mxu0 0.0
  %703 = vmatpush2.msra.mxu0 0.0
  %704 = vmatprep.subr.mxu0 0.0
  %705 = vmatpush2.msra.mxu0 0.0
  %706 = vmatprep.subr.mxu0 0.0
  %707 = vmatpush2.msra.mxu0 0.0
  %708 = vmatprep.subr.mxu0 0.0
  %709 = vmatpush2.msra.mxu0 0.0
  %710 = vmatprep.subr.mxu0 0.0
  %711 = vmatpush2.msra.mxu0 0.0
  %712 = vmatprep.subr.mxu0 0.0
  %713 = vmatpush2.msra.mxu0 0.0
  %714 = vmatprep.subr.mxu0 0.0
  %715 = vmatpush2.msra.mxu0 0.0
  %716 = vmatprep.subr.mxu0 0.0
  %717 = vmatpush2.msra.mxu0 0.0
  %718 = vmatprep.mubr.f32.mxu0 0.0
  %719 = vmatmul.mubr.f32.gmra.mxu0 %v238
  %v720 = vpop.f32.mrf.mxu0
  %v721 = vadd.f32 0.0, %v720
  %v722 = vpop.f32.mrf.mxu0
  %723 = vdwg.mxu0
  %v724 = vadd.f32 %v649, %v721
  %v725 = vtanh.pop %v724
  %v727 = vsel %vm236, %v725, 0
  %729 = vmatprep.subr.mxu0 0.0
  %730 = vmatpush1.msra.mxu0 0.0
  %731 = vmatprep.subr.mxu0 0.0
  %732 = vmatpush1.msra.mxu0 0.0
  %733 = vmatprep.subr.mxu0 0.0
  %734 = vmatpush1.msra.mxu0 0.0
  %735 = vmatprep.subr.mxu0 0.0
  %736 = vmatpush1.msra.mxu0 0.0
  %737 = vmatprep.subr.mxu0 0.0
  %738 = vmatpush1.msra.mxu0 0.0
  %739 = vmatprep.subr.mxu0 0.0
  %740 = vmatpush1.msra.mxu0 0.0
  %741 = vmatprep.subr.mxu0 0.0
  %742 = vmatpush1.msra.mxu0 0.0
  %743 = vmatprep.subr.mxu0 0.0
  %744 = vmatpush1.msra.mxu0 0.0
  %745 = vmatprep.subr.mxu0 0.0
  %746 = vmatpush1.msra.mxu0 0.0
  %747 = vmatprep.subr.mxu0 0.0
  %748 = vmatpush1.msra.mxu0 0.0
  %749 = vmatprep.subr.mxu0 0.0
  %750 = vmatpush1.msra.mxu0 0.0
  %751 = vmatprep.subr.mxu0 0.0
  %752 = vmatpush1.msra.mxu0 0.0
  %753 = vmatprep.subr.mxu0 0.0
  %754 = vmatpush1.msra.mxu0 0.0
  %755 = vmatprep.subr.mxu0 0.0
  %756 = vmatpush1.msra.mxu0 0.0
  %757 = vmatprep.subr.mxu0 0.0
  %758 = vmatpush1.msra.mxu0 %v653
  %759 = vmatprep.subr.mxu0 0.0
  %760 = vmatpush1.msra.mxu0 %v652
  %761 = vmatprep.subr.mxu0 0.0
  %762 = vmatpush2.msra.mxu0 0.0
  %763 = vmatprep.subr.mxu0 0.0
  %764 = vmatpush2.msra.mxu0 0.0
  %765 = vmatprep.subr.mxu0 0.0
  %766 = vmatpush2.msra.mxu0 0.0
  %767 = vmatprep.subr.mxu0 0.0
  %768 = vmatpush2.msra.mxu0 0.0
  %769 = vmatprep.subr.mxu0 0.0
  %770 = vmatpush2.msra.mxu0 0.0
  %771 = vmatprep.subr.mxu0 0.0
  %772 = vmatpush2.msra.mxu0 0.0
  %773 = vmatprep.subr.mxu0 0.0
  %774 = vmatpush2.msra.mxu0 0.0
  %775 = vmatprep.subr.mxu0 0.0
  %776 = vmatpush2.msra.mxu0 0.0
  %777 = vmatprep.subr.mxu0 0.0
  %778 = vmatpush2.msra.mxu0 0.0
  %779 = vmatprep.subr.mxu0 0.0
  %780 = vmatpush2.msra.mxu0 0.0
  %781 = vmatprep.subr.mxu0 0.0
  %782 = vmatpush2.msra.mxu0 0.0
  %783 = vmatprep.subr.mxu0 0.0
  %784 = vmatpush2.msra.mxu0 0.0
  %785 = vmatprep.subr.mxu0 0.0
  %786 = vmatpush2.msra.mxu0 0.0
  %787 = vmatprep.subr.mxu0 0.0
  %788 = vmatpush2.msra.mxu0 0.0
  %789 = vmatprep.subr.mxu0 0.0
  %790 = vmatpush2.msra.mxu0 0.0
  %791 = vmatprep.subr.mxu0 0.0
  %792 = vmatpush2.msra.mxu0 0.0
  %793 = vmatprep.mubr.f32.mxu0 0.0
  %794 = vmatmul.mubr.f32.gmra.mxu0 %v727
  %v795 = vpop.f32.mrf.mxu0
  %v796 = vadd.f32 0.0, %v795
  %v797 = vpop.f32.mrf.mxu0
  %798 = vdwg.mxu0
  %v800 = vrot.slane %v796, 6
  %v802 = vadd.f32 %v649, %v800
  %v803 = vtanh.pop %v802
  %v805 = vrot.slane %v803, 2
  %v806 = vsel %vm236, %v805, 0
  %808 = vmatprep.subr.mxu0 0.0
  %809 = vmatpush1.msra.mxu0 0.0
  %810 = vmatprep.subr.mxu0 0.0
  %811 = vmatpush1.msra.mxu0 0.0
  %812 = vmatprep.subr.mxu0 0.0
  %813 = vmatpush1.msra.mxu0 0.0
  %814 = vmatprep.subr.mxu0 0.0
  %815 = vmatpush1.msra.mxu0 0.0
  %816 = vmatprep.subr.mxu0 0.0
  %817 = vmatpush1.msra.mxu0 0.0
  %818 = vmatprep.subr.mxu0 0.0
  %819 = vmatpush1.msra.mxu0 0.0
  %820 = vmatprep.subr.mxu0 0.0
  %821 = vmatpush1.msra.mxu0 0.0
  %822 = vmatprep.subr.mxu0 0.0
  %823 = vmatpush1.msra.mxu0 0.0
  %824 = vmatprep.subr.mxu0 0.0
  %825 = vmatpush1.msra.mxu0 0.0
  %826 = vmatprep.subr.mxu0 0.0
  %827 = vmatpush1.msra.mxu0 0.0
  %828 = vmatprep.subr.mxu0 0.0
  %829 = vmatpush1.msra.mxu0 0.0
  %830 = vmatprep.subr.mxu0 0.0
  %831 = vmatpush1.msra.mxu0 0.0
  %832 = vmatprep.subr.mxu0 0.0
  %833 = vmatpush1.msra.mxu0 0.0
  %834 = vmatprep.subr.mxu0 0.0
  %835 = vmatpush1.msra.mxu0 0.0
  %836 = vmatprep.subr.mxu0 0.0
  %837 = vmatpush1.msra.mxu0 %v653
  %838 = vmatprep.subr.mxu0 0.0
  %839 = vmatpush1.msra.mxu0 %v652
  %840 = vmatprep.subr.mxu0 0.0
  %841 = vmatpush2.msra.mxu0 0.0
  %842 = vmatprep.subr.mxu0 0.0
  %843 = vmatpush2.msra.mxu0 0.0
  %844 = vmatprep.subr.mxu0 0.0
  %845 = vmatpush2.msra.mxu0 0.0
  %846 = vmatprep.subr.mxu0 0.0
  %847 = vmatpush2.msra.mxu0 0.0
  %848 = vmatprep.subr.mxu0 0.0
  %849 = vmatpush2.msra.mxu0 0.0
  %850 = vmatprep.subr.mxu0 0.0
  %851 = vmatpush2.msra.mxu0 0.0
  %852 = vmatprep.subr.mxu0 0.0
  %853 = vmatpush2.msra.mxu0 0.0
  %854 = vmatprep.subr.mxu0 0.0
  %855 = vmatpush2.msra.mxu0 0.0
  %856 = vmatprep.subr.mxu0 0.0
  %857 = vmatpush2.msra.mxu0 0.0
  %858 = vmatprep.subr.mxu0 0.0
  %859 = vmatpush2.msra.mxu0 0.0
  %860 = vmatprep.subr.mxu0 0.0
  %861 = vmatpush2.msra.mxu0 0.0
  %862 = vmatprep.subr.mxu0 0.0
  %863 = vmatpush2.msra.mxu0 0.0
  %864 = vmatprep.subr.mxu0 0.0
  %865 = vmatpush2.msra.mxu0 0.0
  %866 = vmatprep.subr.mxu0 0.0
  %867 = vmatpush2.msra.mxu0 0.0
  %868 = vmatprep.subr.mxu0 0.0
  %869 = vmatpush2.msra.mxu0 0.0
  %870 = vmatprep.subr.mxu0 0.0
  %871 = vmatpush2.msra.mxu0 0.0
  %872 = vmatprep.mubr.f32.mxu0 0.0
  %873 = vmatmul.mubr.f32.gmra.mxu0 %v806
  %v874 = vpop.f32.mrf.mxu0
  %v875 = vadd.f32 0.0, %v874
  %v876 = vpop.f32.mrf.mxu0
  %877 = vdwg.mxu0
  %v879 = vrot.slane %v875, 4
  %v881 = vadd.f32 %v649, %v879
  %v882 = vtanh.pop %v881
  %v884 = vrot.slane %v882, 4
  %v885 = vsel %vm236, %v884, 0
  %887 = vmatprep.subr.mxu0 0.0
  %888 = vmatpush1.msra.mxu0 0.0
  %889 = vmatprep.subr.mxu0 0.0
  %890 = vmatpush1.msra.mxu0 0.0
  %891 = vmatprep.subr.mxu0 0.0
  %892 = vmatpush1.msra.mxu0 0.0
  %893 = vmatprep.subr.mxu0 0.0
  %894 = vmatpush1.msra.mxu0 0.0
  %895 = vmatprep.subr.mxu0 0.0
  %896 = vmatpush1.msra.mxu0 0.0
  %897 = vmatprep.subr.mxu0 0.0
  %898 = vmatpush1.msra.mxu0 0.0
  %899 = vmatprep.subr.mxu0 0.0
  %900 = vmatpush1.msra.mxu0 0.0
  %901 = vmatprep.subr.mxu0 0.0
  %902 = vmatpush1.msra.mxu0 0.0
  %903 = vmatprep.subr.mxu0 0.0
  %904 = vmatpush1.msra.mxu0 0.0
  %905 = vmatprep.subr.mxu0 0.0
  %906 = vmatpush1.msra.mxu0 0.0
  %907 = vmatprep.subr.mxu0 0.0
  %908 = vmatpush1.msra.mxu0 0.0
  %909 = vmatprep.subr.mxu0 0.0
  %910 = vmatpush1.msra.mxu0 0.0
  %911 = vmatprep.subr.mxu0 0.0
  %912 = vmatpush1.msra.mxu0 0.0
  %913 = vmatprep.subr.mxu0 0.0
  %914 = vmatpush1.msra.mxu0 0.0
  %915 = vmatprep.subr.mxu0 0.0
  %916 = vmatpush1.msra.mxu0 %v653
  %917 = vmatprep.subr.mxu0 0.0
  %918 = vmatpush1.msra.mxu0 %v652
  %919 = vmatprep.subr.mxu0 0.0
  %920 = vmatpush2.msra.mxu0 0.0
  %921 = vmatprep.subr.mxu0 0.0
  %922 = vmatpush2.msra.mxu0 0.0
  %923 = vmatprep.subr.mxu0 0.0
  %924 = vmatpush2.msra.mxu0 0.0
  %925 = vmatprep.subr.mxu0 0.0
  %926 = vmatpush2.msra.mxu0 0.0
  %927 = vmatprep.subr.mxu0 0.0
  %928 = vmatpush2.msra.mxu0 0.0
  %929 = vmatprep.subr.mxu0 0.0
  %930 = vmatpush2.msra.mxu0 0.0
  %931 = vmatprep.subr.mxu0 0.0
  %932 = vmatpush2.msra.mxu0 0.0
  %933 = vmatprep.subr.mxu0 0.0
  %934 = vmatpush2.msra.mxu0 0.0
  %935 = vmatprep.subr.mxu0 0.0
  %936 = vmatpush2.msra.mxu0 0.0
  %937 = vmatprep.subr.mxu0 0.0
  %938 = vmatpush2.msra.mxu0 0.0
  %939 = vmatprep.subr.mxu0 0.0
  %940 = vmatpush2.msra.mxu0 0.0
  %941 = vmatprep.subr.mxu0 0.0
  %942 = vmatpush2.msra.mxu0 0.0
  %943 = vmatprep.subr.mxu0 0.0
  %944 = vmatpush2.msra.mxu0 0.0
  %945 = vmatprep.subr.mxu0 0.0
  %946 = vmatpush2.msra.mxu0 0.0
  %947 = vmatprep.subr.mxu0 0.0
  %948 = vmatpush2.msra.mxu0 0.0
  %949 = vmatprep.subr.mxu0 0.0
  %950 = vmatpush2.msra.mxu0 0.0
  %951 = vmatprep.mubr.f32.mxu0 0.0
  %952 = vmatmul.mubr.f32.gmra.mxu0 %v885
  %v953 = vpop.f32.mrf.mxu0
  %v954 = vadd.f32 0.0, %v953
  %v955 = vpop.f32.mrf.mxu0
  %956 = vdwg.mxu0
  %v958 = vrot.slane %v954, 2
  %v960 = vadd.f32 %v649, %v958
  %v961 = vtanh.pop %v960
  %v962 = vsel %vm548, %v725, %v803
  %v963 = vsel %vm550, %v962, %v882
  %v964 = vsel %vm552, %v963, %v961
  %v965 = vld [vmem:[%s10] sm:$0xff]
  %v966 = vld [vmem:[%s10 + $0x8] sm:$0xff]
  %v967 = vld [vmem:[%s11] sm:$0x1]
  %v969 = vlaneseq
  %v970 = vshrl.u32 %v969, 7
  %v971 = vsub.s32 0, %v970
  %v972 = vrot.slane %v967, %v971
  %v975 = vsel %vm236, %v964, 0
  %977 = vmatprep.subr.mxu0 0.0
  %978 = vmatpush1.msra.mxu0 0.0
  %979 = vmatprep.subr.mxu0 0.0
  %980 = vmatpush1.msra.mxu0 0.0
  %981 = vmatprep.subr.mxu0 0.0
  %982 = vmatpush1.msra.mxu0 0.0
  %983 = vmatprep.subr.mxu0 0.0
  %984 = vmatpush1.msra.mxu0 0.0
  %985 = vmatprep.subr.mxu0 0.0
  %986 = vmatpush1.msra.mxu0 0.0
  %987 = vmatprep.subr.mxu0 0.0
  %988 = vmatpush1.msra.mxu0 0.0
  %989 = vmatprep.subr.mxu0 0.0
  %990 = vmatpush1.msra.mxu0 0.0
  %991 = vmatprep.subr.mxu0 0.0
  %992 = vmatpush1.msra.mxu0 0.0
  %993 = vmatprep.subr.mxu0 0.0
  %994 = vmatpush1.msra.mxu0 0.0
  %995 = vmatprep.subr.mxu0 0.0
  %996 = vmatpush1.msra.mxu0 0.0
  %997 = vmatprep.subr.mxu0 0.0
  %998 = vmatpush1.msra.mxu0 0.0
  %999 = vmatprep.subr.mxu0 0.0
  %1000 = vmatpush1.msra.mxu0 0.0
  %1001 = vmatprep.subr.mxu0 0.0
  %1002 = vmatpush1.msra.mxu0 0.0
  %1003 = vmatprep.subr.mxu0 0.0
  %1004 = vmatpush1.msra.mxu0 0.0
  %1005 = vmatprep.subr.mxu0 0.0
  %1006 = vmatpush1.msra.mxu0 %v966
  %1007 = vmatprep.subr.mxu0 0.0
  %1008 = vmatpush1.msra.mxu0 %v965
  %1009 = vmatprep.subr.mxu0 0.0
  %1010 = vmatpush2.msra.mxu0 0.0
  %1011 = vmatprep.subr.mxu0 0.0
  %1012 = vmatpush2.msra.mxu0 0.0
  %1013 = vmatprep.subr.mxu0 0.0
  %1014 = vmatpush2.msra.mxu0 0.0
  %1015 = vmatprep.subr.mxu0 0.0
  %1016 = vmatpush2.msra.mxu0 0.0
  %1017 = vmatprep.subr.mxu0 0.0
  %1018 = vmatpush2.msra.mxu0 0.0
  %1019 = vmatprep.subr.mxu0 0.0
  %1020 = vmatpush2.msra.mxu0 0.0
  %1021 = vmatprep.subr.mxu0 0.0
  %1022 = vmatpush2.msra.mxu0 0.0
  %1023 = vmatprep.subr.mxu0 0.0
  %1024 = vmatpush2.msra.mxu0 0.0
  %1025 = vmatprep.subr.mxu0 0.0
  %1026 = vmatpush2.msra.mxu0 0.0
  %1027 = vmatprep.subr.mxu0 0.0
  %1028 = vmatpush2.msra.mxu0 0.0
  %1029 = vmatprep.subr.mxu0 0.0
  %1030 = vmatpush2.msra.mxu0 0.0
  %1031 = vmatprep.subr.mxu0 0.0
  %1032 = vmatpush2.msra.mxu0 0.0
  %1033 = vmatprep.subr.mxu0 0.0
  %1034 = vmatpush2.msra.mxu0 0.0
  %1035 = vmatprep.subr.mxu0 0.0
  %1036 = vmatpush2.msra.mxu0 0.0
  %1037 = vmatprep.subr.mxu0 0.0
  %1038 = vmatpush2.msra.mxu0 0.0
  %1039 = vmatprep.subr.mxu0 0.0
  %1040 = vmatpush2.msra.mxu0 0.0
  %1041 = vmatprep.mubr.f32.mxu0 0.0
  %1042 = vmatmul.mubr.f32.gmra.mxu0 %v975
  %v1043 = vpop.f32.mrf.mxu0
  %v1044 = vadd.f32 %v972, %v1043
  %v1045 = vpop.f32.mrf.mxu0
  %1046 = vdwg.mxu0
  %v1047 = vld [vmem:[%s12] sm:$0xff]
  %v1048 = vld [vmem:[%s12 + $0x8] sm:$0xff]
  %v1049 = vld [vmem:[%s12 + $0x10] sm:$0xff]
  %v1050 = vld [vmem:[%s12 + $0x18] sm:$0xff]
  %v1051 = vld [vmem:[%s12 + $0x20] sm:$0xff]
  %v1052 = vld [vmem:[%s12 + $0x28] sm:$0xff]
  %v1053 = vld [vmem:[%s12 + $0x30] sm:$0xff]
  %v1054 = vld [vmem:[%s12 + $0x38] sm:$0xff]
  %v1055 = vld [vmem:[%s13] sm:$0x1]
  %v1057 = vlaneseq
  %v1058 = vshrl.u32 %v1057, 7
  %v1059 = vsub.s32 0, %v1058
  %v1060 = vrot.slane %v1055, %v1059
  %v1063 = vsel %vm160, %v1044, 0
  %1065 = vmatprep.subr.mxu0 0.0
  %1066 = vmatpush1.msra.mxu0 0.0
  %1067 = vmatprep.subr.mxu0 0.0
  %1068 = vmatpush1.msra.mxu0 0.0
  %1069 = vmatprep.subr.mxu0 0.0
  %1070 = vmatpush1.msra.mxu0 0.0
  %1071 = vmatprep.subr.mxu0 0.0
  %1072 = vmatpush1.msra.mxu0 0.0
  %1073 = vmatprep.subr.mxu0 0.0
  %1074 = vmatpush1.msra.mxu0 0.0
  %1075 = vmatprep.subr.mxu0 0.0
  %1076 = vmatpush1.msra.mxu0 0.0
  %1077 = vmatprep.subr.mxu0 0.0
  %1078 = vmatpush1.msra.mxu0 0.0
  %1079 = vmatprep.subr.mxu0 0.0
  %1080 = vmatpush1.msra.mxu0 0.0
  %1081 = vmatprep.subr.mxu0 0.0
  %1082 = vmatpush1.msra.mxu0 %v1054
  %1083 = vmatprep.subr.mxu0 0.0
  %1084 = vmatpush1.msra.mxu0 %v1053
  %1085 = vmatprep.subr.mxu0 0.0
  %1086 = vmatpush1.msra.mxu0 %v1052
  %1087 = vmatprep.subr.mxu0 0.0
  %1088 = vmatpush1.msra.mxu0 %v1051
  %1089 = vmatprep.subr.mxu0 0.0
  %1090 = vmatpush1.msra.mxu0 %v1050
  %1091 = vmatprep.subr.mxu0 0.0
  %1092 = vmatpush1.msra.mxu0 %v1049
  %1093 = vmatprep.subr.mxu0 0.0
  %1094 = vmatpush1.msra.mxu0 %v1048
  %1095 = vmatprep.subr.mxu0 0.0
  %1096 = vmatpush1.msra.mxu0 %v1047
  %1097 = vmatprep.subr.mxu0 0.0
  %1098 = vmatpush2.msra.mxu0 0.0
  %1099 = vmatprep.subr.mxu0 0.0
  %1100 = vmatpush2.msra.mxu0 0.0
  %1101 = vmatprep.subr.mxu0 0.0
  %1102 = vmatpush2.msra.mxu0 0.0
  %1103 = vmatprep.subr.mxu0 0.0
  %1104 = vmatpush2.msra.mxu0 0.0
  %1105 = vmatprep.subr.mxu0 0.0
  %1106 = vmatpush2.msra.mxu0 0.0
  %1107 = vmatprep.subr.mxu0 0.0
  %1108 = vmatpush2.msra.mxu0 0.0
  %1109 = vmatprep.subr.mxu0 0.0
  %1110 = vmatpush2.msra.mxu0 0.0
  %1111 = vmatprep.subr.mxu0 0.0
  %1112 = vmatpush2.msra.mxu0 0.0
  %1113 = vmatprep.subr.mxu0 0.0
  %1114 = vmatpush2.msra.mxu0 0.0
  %1115 = vmatprep.subr.mxu0 0.0
  %1116 = vmatpush2.msra.mxu0 0.0
  %1117 = vmatprep.subr.mxu0 0.0
  %1118 = vmatpush2.msra.mxu0 0.0
  %1119 = vmatprep.subr.mxu0 0.0
  %1120 = vmatpush2.msra.mxu0 0.0
  %1121 = vmatprep.subr.mxu0 0.0
  %1122 = vmatpush2.msra.mxu0 0.0
  %1123 = vmatprep.subr.mxu0 0.0
  %1124 = vmatpush2.msra.mxu0 0.0
  %1125 = vmatprep.subr.mxu0 0.0
  %1126 = vmatpush2.msra.mxu0 0.0
  %1127 = vmatprep.subr.mxu0 0.0
  %1128 = vmatpush2.msra.mxu0 0.0
  %1129 = vmatprep.mubr.f32.mxu0 0.0
  %1130 = vmatmul.mubr.f32.gmra.mxu0 %v1063
  %v1131 = vpop.f32.mrf.mxu0
  %v1132 = vadd.f32 %v1060, %v1131
  %v1133 = vpop.f32.mrf.mxu0
  %1134 = vdwg.mxu0
  %v1135 = vmax.f32 %v1132, 0.0
  %1136 = vst [vmem:[%s16] sm:$0xff] %v1135
  // Predicated region
  $region58: #{temporal_vae_forward.16} parent=0 // pred_check
    _
  $region59: #{temporal_vae_forward.16} parent=0 // pred_check_branch
    %1138 = sbr.rel (0) target = $region61
  $region60: #{temporal_vae_forward.16} parent=0 // pred_region
    _
  $region61: #{temporal_vae_forward.16} parent=0 // pred_fallthru
    _
  // Predicated region
  $region62: #{temporal_vae_forward.16} parent=0 // pred_check
    _
  $region63: #{temporal_vae_forward.16} parent=0 // pred_check_branch
    %1140 = sbr.rel (0) target = $region65
  $region64: #{temporal_vae_forward.16} parent=0 // pred_region
    _
  $region65: #{temporal_vae_forward.16} parent=0 // pred_fallthru
    _
  // Predicated region
  $region66: #{temporal_vae_forward.16} parent=0 // pred_check
    _
  $region67: #{temporal_vae_forward.16} parent=0 // pred_check_branch
    %1142 = sbr.rel (0) target = $region69
  $region68: #{temporal_vae_forward.16} parent=0 // pred_region
    _
  $region69: #{temporal_vae_forward.16} parent=0 // pred_fallthru
    _
  // Predicated region
  $region70: #{temporal_vae_forward.16} parent=0 // pred_check
    _
  $region71: #{temporal_vae_forward.16} parent=0 // pred_check_branch
    %1144 = sbr.rel (0) target = $region73
  $region72: #{temporal_vae_forward.16} parent=0 // pred_region
    _
  $region73: #{temporal_vae_forward.16} parent=0 // pred_fallthru
    _
  // Predicated region
  $region74: #{temporal_vae_forward.16} parent=0 // pred_check
    _
  $region75: #{temporal_vae_forward.16} parent=0 // pred_check_branch
    %1146 = sbr.rel (0) target = $region77
  $region76: #{temporal_vae_forward.16} parent=0 // pred_region
    _
  $region77: #{temporal_vae_forward.16} parent=0 // pred_fallthru
    _
  // Predicated region
  $region78: #{temporal_vae_forward.16} parent=0 // pred_check
    _
  $region79: #{temporal_vae_forward.16} parent=0 // pred_check_branch
    %1148 = sbr.rel (0) target = $region81
  $region80: #{temporal_vae_forward.16} parent=0 // pred_region
    _
  $region81: #{temporal_vae_forward.16} parent=0 // pred_fallthru
    _

// kernel: temporal_vae_forward.17
$region0: #{temporal_vae_forward.17}
  #allocation0 [shape = 'u32[]', space=smem, size = 0x4, offset = 0x4, fixed_abs, tag = 'smem constant byte address 0x4 - core index']
  #allocation1 [shape = 'u32[144,128]{1,0:T(1,128)}', space=vmem, size = 0x12000, scoped, tag = 'internal scratch']
  %s0 = inlined_call_operand.vmem [shape: bf16[64,288], index: 0, kind: input, shape index: {}]
  %s1 = inlined_call_operand.vmem [shape: bf16[288,32], index: 1, kind: input, shape index: {}]
  %s2 = inlined_call_operand.vmem [shape: f32[64,1], index: 2, kind: input, shape index: {}]
  %s3 = inlined_call_operand.vmem [shape: f32[64,32], index: 3, kind: output, shape index: {}]
  %s4 = sld [smem:[#allocation0]]
  $region22: #{temporal_vae_forward.17} parent=0
    _
  %s6 = ssub.s32 1, %s4
  %s7 = scalar_select 0, %s6, %s4
  // Predicated region
  $region2: #{temporal_vae_forward.17} parent=0 // pred_check
    _
  $region3: #{temporal_vae_forward.17} parent=0 // pred_check_branch
    %9 = sbr.rel (0) target = $region5
  $region4: #{temporal_vae_forward.17} parent=0 // pred_region
    _
  $region5: #{temporal_vae_forward.17} parent=0 // pred_fallthru
    _
  // Predicated region
  $region6: #{temporal_vae_forward.17} parent=0 // pred_check
    _
  $region7: #{temporal_vae_forward.17} parent=0 // pred_check_branch
    %11 = sbr.rel (0) target = $region9
  $region8: #{temporal_vae_forward.17} parent=0 // pred_region
    _
  $region9: #{temporal_vae_forward.17} parent=0 // pred_fallthru
    _
  // Predicated region
  $region10: #{temporal_vae_forward.17} parent=0 // pred_check
    _
  $region11: #{temporal_vae_forward.17} parent=0 // pred_check_branch
    %13 = sbr.rel (0) target = $region13
  $region12: #{temporal_vae_forward.17} parent=0 // pred_region
    _
  $region13: #{temporal_vae_forward.17} parent=0 // pred_fallthru
    _
  %v15 = vld [vmem:[%s0] sm:$0xff]
  %v16 = vld [vmem:[%s0 + $0x8] sm:$0xf]
  %v17 = vld [vmem:[%s0 + $0xc] sm:$0xff]
  %v18 = vld [vmem:[%s0 + $0x14] sm:$0xf]
  %v19 = vld [vmem:[%s0 + $0x18] sm:$0xff]
  %v20 = vld [vmem:[%s0 + $0x20] sm:$0xf]
  %v21 = vld [vmem:[%s0 + $0x24] sm:$0xff]
  %v22 = vld [vmem:[%s0 + $0x2c] sm:$0xf]
  %v23 = vld [vmem:[%s0 + $0x30] sm:$0xff]
  %v24 = vld [vmem:[%s0 + $0x38] sm:$0xf]
  %v25 = vld [vmem:[%s0 + $0x3c] sm:$0xff]
  %v26 = vld [vmem:[%s0 + $0x44] sm:$0xf]
  %v27 = vld [vmem:[%s0 + $0x48] sm:$0xff]
  %v28 = vld [vmem:[%s0 + $0x50] sm:$0xf]
  %v29 = vld [vmem:[%s0 + $0x54] sm:$0xff]
  %v30 = vld [vmem:[%s0 + $0x5c] sm:$0xf]
  %v31 = vld [vmem:[%s1] sm:$0xf]
  %v32 = vld [vmem:[%s1 + $0x4] sm:$0xf]
  %v33 = vld [vmem:[%s1 + $0x8] sm:$0xf]
  %v34 = vld [vmem:[%s1 + $0xc] sm:$0xf]
  %v35 = vld [vmem:[%s1 + $0x10] sm:$0xf]
  %v36 = vld [vmem:[%s1 + $0x14] sm:$0xf]
  %v37 = vld [vmem:[%s1 + $0x18] sm:$0xf]
  %v38 = vld [vmem:[%s1 + $0x1c] sm:$0xf]
  %v39 = vld [vmem:[%s1 + $0x20] sm:$0xf]
  %v40 = vld [vmem:[%s1 + $0x24] sm:$0xf]
  %v41 = vld [vmem:[%s1 + $0x28] sm:$0xf]
  %v42 = vld [vmem:[%s1 + $0x2c] sm:$0xf]
  %v43 = vld [vmem:[%s1 + $0x30] sm:$0xf]
  %v44 = vld [vmem:[%s1 + $0x34] sm:$0xf]
  %v45 = vld [vmem:[%s1 + $0x38] sm:$0xf]
  %v46 = vld [vmem:[%s1 + $0x3c] sm:$0xf]
  %v47 = vld [vmem:[%s1 + $0x40] sm:$0xf]
  %v48 = vld [vmem:[%s1 + $0x44] sm:$0xf]
  %v49 = vld [vmem:[%s1 + $0x48] sm:$0xf]
  %v50 = vld [vmem:[%s1 + $0x4c] sm:$0xf]
  %v51 = vld [vmem:[%s1 + $0x50] sm:$0xf]
  %v52 = vld [vmem:[%s1 + $0x54] sm:$0xf]
  %v53 = vld [vmem:[%s1 + $0x58] sm:$0xf]
  %v54 = vld [vmem:[%s1 + $0x5c] sm:$0xf]
  %v55 = vld [vmem:[%s1 + $0x60] sm:$0xf]
  %v56 = vld [vmem:[%s1 + $0x64] sm:$0xf]
  %v57 = vld [vmem:[%s1 + $0x68] sm:$0xf]
  %v58 = vld [vmem:[%s1 + $0x6c] sm:$0xf]
  %v59 = vld [vmem:[%s1 + $0x70] sm:$0xf]
  %v60 = vld [vmem:[%s1 + $0x74] sm:$0xf]
  %v61 = vld [vmem:[%s1 + $0x78] sm:$0xf]
  %v62 = vld [vmem:[%s1 + $0x7c] sm:$0xf]
  %v63 = vld [vmem:[%s1 + $0x80] sm:$0xf]
  %v64 = vld [vmem:[%s1 + $0x84] sm:$0xf]
  %v65 = vld [vmem:[%s1 + $0x88] sm:$0xf]
  %v66 = vld [vmem:[%s1 + $0x8c] sm:$0xf]
  %v67 = vld [vmem:[%s2] sm:$0xff]
  %v68 = vld [vmem:[%s2 + $0x8] sm:$0xff]
  %v69 = vld [vmem:[%s2 + $0x10] sm:$0xff]
  %v70 = vld [vmem:[%s2 + $0x18] sm:$0xff]
  %v71 = vld [vmem:[%s2 + $0x20] sm:$0xff]
  %v72 = vld [vmem:[%s2 + $0x28] sm:$0xff]
  %v73 = vld [vmem:[%s2 + $0x30] sm:$0xff]
  %v74 = vld [vmem:[%s2 + $0x38] sm:$0xff]
  %76 = vset.pattern.permute.xlu0 0
  %77 = vperm.xlu0 %76, %v67
  %v78 = vpop.permute.xlu0 %77
  %81 = vset.pattern.permute.xlu0 0
  %82 = vperm.xlu0 %81, %v68
  %v83 = vpop.permute.xlu0 %82
  %86 = vset.pattern.permute.xlu0 0
  %87 = vperm.xlu0 %86, %v69
  %v88 = vpop.permute.xlu0 %87
  %91 = vset.pattern.permute.xlu0 0
  %92 = vperm.xlu0 %91, %v70
  %v93 = vpop.permute.xlu0 %92
  %96 = vset.pattern.permute.xlu0 0
  %97 = vperm.xlu0 %96, %v71
  %v98 = vpop.permute.xlu0 %97
  %101 = vset.pattern.permute.xlu0 0
  %102 = vperm.xlu0 %101, %v72
  %v103 = vpop.permute.xlu0 %102
  %106 = vset.pattern.permute.xlu0 0
  %107 = vperm.xlu0 %106, %v73
  %v108 = vpop.permute.xlu0 %107
  %111 = vset.pattern.permute.xlu0 0
  %112 = vperm.xlu0 %111, %v74
  %v113 = vpop.permute.xlu0 %112
  %v131 = vunpack.c.l.b16 %v15
  %v132 = vunpack.c.h.b16 %v15
  %v133 = vunpack.c.l.b16 %v16
  %v134 = vunpack.c.l.b16 %v17
  %v135 = vunpack.c.h.b16 %v17
  %v136 = vunpack.c.l.b16 %v18
  %v137 = vunpack.c.l.b16 %v19
  %v138 = vunpack.c.h.b16 %v19
  %v139 = vunpack.c.l.b16 %v20
  %v140 = vunpack.c.l.b16 %v21
  %v141 = vunpack.c.h.b16 %v21
  %v142 = vunpack.c.l.b16 %v22
  %v143 = vunpack.c.l.b16 %v23
  %v144 = vunpack.c.h.b16 %v23
  %v145 = vunpack.c.l.b16 %v24
  %v146 = vunpack.c.l.b16 %v25
  %v147 = vunpack.c.h.b16 %v25
  %v148 = vunpack.c.l.b16 %v26
  %v149 = vunpack.c.l.b16 %v27
  %v150 = vunpack.c.h.b16 %v27
  %v151 = vunpack.c.l.b16 %v28
  %v152 = vunpack.c.l.b16 %v29
  %v153 = vunpack.c.h.b16 %v29
  %v154 = vunpack.c.l.b16 %v30
  %v155 = vpack.c.b16 %v134, %v131
  %v156 = vpack.c.b16 %v135, %v132
  %v157 = vpack.c.b16 %v136, %v133
  %v158 = vpack.c.b16 %v140, %v137
  %v159 = vpack.c.b16 %v141, %v138
  %v160 = vpack.c.b16 %v142, %v139
  %v161 = vpack.c.b16 %v146, %v143
  %v162 = vpack.c.b16 %v147, %v144
  %v163 = vpack.c.b16 %v148, %v145
  %v164 = vpack.c.b16 %v152, %v149
  %v165 = vpack.c.b16 %v153, %v150
  %v166 = vpack.c.b16 %v154, %v151
  %v211 = vunpack.c.l.b16 %v31
  %v212 = vunpack.c.l.b16 %v32
  %v213 = vunpack.c.l.b16 %v33
  %v214 = vunpack.c.l.b16 %v34
  %v215 = vunpack.c.l.b16 %v35
  %v216 = vunpack.c.l.b16 %v36
  %v217 = vunpack.c.l.b16 %v37
  %v218 = vunpack.c.l.b16 %v38
  %v219 = vunpack.c.l.b16 %v39
  %v220 = vunpack.c.l.b16 %v40
  %v221 = vunpack.c.l.b16 %v41
  %v222 = vunpack.c.l.b16 %v42
  %v223 = vunpack.c.l.b16 %v43
  %v224 = vunpack.c.l.b16 %v44
  %v225 = vunpack.c.l.b16 %v45
  %v226 = vunpack.c.l.b16 %v46
  %v227 = vunpack.c.l.b16 %v47
  %v228 = vunpack.c.l.b16 %v48
  %v229 = vunpack.c.l.b16 %v49
  %v230 = vunpack.c.l.b16 %v50
  %v231 = vunpack.c.l.b16 %v51
  %v232 = vunpack.c.l.b16 %v52
  %v233 = vunpack.c.l.b16 %v53
  %v234 = vunpack.c.l.b16 %v54
  %v235 = vunpack.c.l.b16 %v55
  %v236 = vunpack.c.l.b16 %v56
  %v237 = vunpack.c.l.b16 %v57
  %v238 = vunpack.c.l.b16 %v58
  %v239 = vunpack.c.l.b16 %v59
  %v240 = vunpack.c.l.b16 %v60
  %v241 = vunpack.c.l.b16 %v61
  %v242 = vunpack.c.l.b16 %v62
  %v243 = vunpack.c.l.b16 %v63
  %v244 = vunpack.c.l.b16 %v64
  %v245 = vunpack.c.l.b16 %v65
  %v246 = vunpack.c.l.b16 %v66
  %v247 = vpack.c.b16 %v212, %v211
  %v248 = vpack.c.b16 %v214, %v213
  %v249 = vpack.c.b16 %v216, %v215
  %v250 = vpack.c.b16 %v218, %v217
  %v251 = vpack.c.b16 %v220, %v219
  %v252 = vpack.c.b16 %v222, %v221
  %v253 = vpack.c.b16 %v224, %v223
  %v254 = vpack.c.b16 %v226, %v225
  %v255 = vpack.c.b16 %v228, %v227
  %v256 = vpack.c.b16 %v230, %v229
  %v257 = vpack.c.b16 %v232, %v231
  %v258 = vpack.c.b16 %v234, %v233
  %v259 = vpack.c.b16 %v236, %v235
  %v260 = vpack.c.b16 %v238, %v237
  %v261 = vpack.c.b16 %v240, %v239
  %v262 = vpack.c.b16 %v242, %v241
  %v263 = vpack.c.b16 %v244, %v243
  %v264 = vpack.c.b16 %v246, %v245
  %vm283 = vcmask 261120
  %v285 = vsel %vm283, %v157, 0
  %v288 = vsel %vm283, %v160, 0
  %v291 = vsel %vm283, %v163, 0
  %v294 = vsel %vm283, %v166, 0
  %296 = vmatprep.subr.bf16.mxu0 0
  %297 = vmatpush1.bf16.msra.mxu0 %v254
  %298 = vmatprep.subr.bf16.mxu0 0
  %299 = vmatpush1.bf16.msra.mxu0 %v253
  %300 = vmatprep.subr.bf16.mxu0 0
  %301 = vmatpush1.bf16.msra.mxu0 %v252
  %302 = vmatprep.subr.bf16.mxu0 0
  %303 = vmatpush1.bf16.msra.mxu0 %v251
  %304 = vmatprep.subr.bf16.mxu0 0
  %305 = vmatpush1.bf16.msra.mxu0 %v250
  %306 = vmatprep.subr.bf16.mxu0 0
  %307 = vmatpush1.bf16.msra.mxu0 %v249
  %308 = vmatprep.subr.bf16.mxu0 0
  %309 = vmatpush1.bf16.msra.mxu0 %v248
  %310 = vmatprep.subr.bf16.mxu0 0
  %311 = vmatpush1.bf16.msra.mxu0 %v247
  %312 = vmatprep.subr.bf16.mxu0 0
  %313 = vmatpush2.bf16.msra.mxu0 %v262
  %314 = vmatprep.subr.bf16.mxu0 0
  %315 = vmatpush2.bf16.msra.mxu0 %v261
  %316 = vmatprep.subr.bf16.mxu0 0
  %317 = vmatpush2.bf16.msra.mxu0 %v260
  %318 = vmatprep.subr.bf16.mxu0 0
  %319 = vmatpush2.bf16.msra.mxu0 %v259
  %320 = vmatprep.subr.bf16.mxu0 0
  %321 = vmatpush2.bf16.msra.mxu0 %v258
  %322 = vmatprep.subr.bf16.mxu0 0
  %323 = vmatpush2.bf16.msra.mxu0 %v257
  %324 = vmatprep.subr.bf16.mxu0 0
  %325 = vmatpush2.bf16.msra.mxu0 %v256
  %326 = vmatprep.subr.bf16.mxu0 0
  %327 = vmatpush2.bf16.msra.mxu0 %v255
  %328 = vmatprep.mubr.bf16.mxu0 %v156
  %329 = vmatmul.mubr.bf16.gmra.mxu0 %v155
  %v330 = vpop.f32.mrf.mxu0
  %v331 = vadd.f32 %v78, %v330
  %v332 = vpop.f32.mrf.mxu0
  %v333 = vpop.f32.mrf.mxu0
  %v334 = vadd.f32 %v83, %v333
  %v335 = vpop.f32.mrf.mxu0
  %336 = vmatprep.mubr.bf16.mxu0 %v159
  %337 = vmatmul.mubr.bf16.gmra.mxu0 %v158
  %v338 = vpop.f32.mrf.mxu0
  %v339 = vadd.f32 %v88, %v338
  %v340 = vpop.f32.mrf.mxu0
  %v341 = vpop.f32.mrf.mxu0
  %v342 = vadd.f32 %v93, %v341
  %v343 = vpop.f32.mrf.mxu0
  %344 = vmatprep.mubr.bf16.mxu0 %v162
  %345 = vmatmul.mubr.bf16.gmra.mxu0 %v161
  %v346 = vpop.f32.mrf.mxu0
  %v347 = vadd.f32 %v98, %v346
  %v348 = vpop.f32.mrf.mxu0
  %v349 = vpop.f32.mrf.mxu0
  %v350 = vadd.f32 %v103, %v349
  %v351 = vpop.f32.mrf.mxu0
  %352 = vmatprep.mubr.bf16.mxu0 %v165
  %353 = vmatmul.mubr.bf16.gmra.mxu0 %v164
  %v354 = vpop.f32.mrf.mxu0
  %v355 = vadd.f32 %v108, %v354
  %v356 = vpop.f32.mrf.mxu0
  %v357 = vpop.f32.mrf.mxu0
  %v358 = vadd.f32 %v113, %v357
  %v359 = vpop.f32.mrf.mxu0
  %360 = vdwg.mxu0
  %361 = vmatprep.subr.bf16.mxu0 0
  %362 = vmatpush1.bf16.msra.mxu0 0
  %363 = vmatprep.subr.bf16.mxu0 0
  %364 = vmatpush1.bf16.msra.mxu0 0
  %365 = vmatprep.subr.bf16.mxu0 0
  %366 = vmatpush1.bf16.msra.mxu0 0
  %367 = vmatprep.subr.bf16.mxu0 0
  %368 = vmatpush1.bf16.msra.mxu0 0
  %369 = vmatprep.subr.bf16.mxu0 0
  %370 = vmatpush1.bf16.msra.mxu0 0
  %371 = vmatprep.subr.bf16.mxu0 0
  %372 = vmatpush1.bf16.msra.mxu0 0
  %373 = vmatprep.subr.bf16.mxu0 0
  %374 = vmatpush1.bf16.msra.mxu0 %v264
  %375 = vmatprep.subr.bf16.mxu0 0
  %376 = vmatpush1.bf16.msra.mxu0 %v263
  %377 = vmatprep.subr.bf16.mxu0 0
  %378 = vmatpush2.bf16.msra.mxu0 0
  %379 = vmatprep.subr.bf16.mxu0 0
  %380 = vmatpush2.bf16.msra.mxu0 0
  %381 = vmatprep.subr.bf16.mxu0 0
  %382 = vmatpush2.bf16.msra.mxu0 0
  %383 = vmatprep.subr.bf16.mxu0 0
  %384 = vmatpush2.bf16.msra.mxu0 0
  %385 = vmatprep.subr.bf16.mxu0 0
  %386 = vmatpush2.bf16.msra.mxu0 0
  %387 = vmatprep.subr.bf16.mxu0 0
  %388 = vmatpush2.bf16.msra.mxu0 0
  %389 = vmatprep.subr.bf16.mxu0 0
  %390 = vmatpush2.bf16.msra.mxu0 0
  %391 = vmatprep.subr.bf16.mxu0 0
  %392 = vmatpush2.bf16.msra.mxu0 0
  %393 = vmatprep.mubr.bf16.mxu0 0
  %394 = vmatmul.mubr.bf16.gmra.mxu0 %v285
  %v395 = vpop.f32.mrf.mxu0
  %v396 = vadd.f32 %v331, %v395
  %v397 = vpop.f32.mrf.mxu0
  %v398 = vpop.f32.mrf.mxu0
  %v399 = vadd.f32 %v334, %v398
  %v400 = vpop.f32.mrf.mxu0
  %401 = vmatprep.mubr.bf16.mxu0 0
  %402 = vmatmul.mubr.bf16.gmra.mxu0 %v288
  %v403 = vpop.f32.mrf.mxu0
  %v404 = vadd.f32 %v339, %v403
  %v405 = vpop.f32.mrf.mxu0
  %v406 = vpop.f32.mrf.mxu0
  %v407 = vadd.f32 %v342, %v406
  %v408 = vpop.f32.mrf.mxu0
  %409 = vmatprep.mubr.bf16.mxu0 0
  %410 = vmatmul.mubr.bf16.gmra.mxu0 %v291
  %v411 = vpop.f32.mrf.mxu0
  %v412 = vadd.f32 %v347, %v411
  %v413 = vpop.f32.mrf.mxu0
  %v414 = vpop.f32.mrf.mxu0
  %v415 = vadd.f32 %v350, %v414
  %v416 = vpop.f32.mrf.mxu0
  %417 = vmatprep.mubr.bf16.mxu0 0
  %418 = vmatmul.mubr.bf16.gmra.mxu0 %v294
  %v419 = vpop.f32.mrf.mxu0
  %v420 = vadd.f32 %v355, %v419
  %v421 = vpop.f32.mrf.mxu0
  %v422 = vpop.f32.mrf.mxu0
  %v423 = vadd.f32 %v358, %v422
  %v424 = vpop.f32.mrf.mxu0
  %425 = vdwg.mxu0
  %v426 = vmax.f32 %v396, 0.0
  %v427 = vmax.f32 %v399, 0.0
  %v428 = vmax.f32 %v404, 0.0
  %v429 = vmax.f32 %v407, 0.0
  %v430 = vmax.f32 %v412, 0.0
  %v431 = vmax.f32 %v415, 0.0
  %v432 = vmax.f32 %v420, 0.0
  %v433 = vmax.f32 %v423, 0.0
  %434 = vst.msk [vmem:[%s3] sm:$0xff] %vm283, %v426
  %435 = vst.msk [vmem:[%s3 + $0x8] sm:$0xff] %vm283, %v427
  %436 = vst.msk [vmem:[%s3 + $0x10] sm:$0xff] %vm283, %v428
  %437 = vst.msk [vmem:[%s3 + $0x18] sm:$0xff] %vm283, %v429
  %438 = vst.msk [vmem:[%s3 + $0x20] sm:$0xff] %vm283, %v430
  %439 = vst.msk [vmem:[%s3 + $0x28] sm:$0xff] %vm283, %v431
  %440 = vst.msk [vmem:[%s3 + $0x30] sm:$0xff] %vm283, %v432
  %441 = vst.msk [vmem:[%s3 + $0x38] sm:$0xff] %vm283, %v433
  // Predicated region
  $region14: #{temporal_vae_forward.17} parent=0 // pred_check
    _
  $region15: #{temporal_vae_forward.17} parent=0 // pred_check_branch
    %443 = sbr.rel (0) target = $region17
  $region16: #{temporal_vae_forward.17} parent=0 // pred_region
    _
  $region17: #{temporal_vae_forward.17} parent=0 // pred_fallthru
    _
  // Predicated region
  $region18: #{temporal_vae_forward.17} parent=0 // pred_check
    _
  $region19: #{temporal_vae_forward.17} parent=0 // pred_check_branch
    %445 = sbr.rel (0) target = $region21
  $region20: #{temporal_vae_forward.17} parent=0 // pred_region
    _
  $region21: #{temporal_vae_forward.17} parent=0 // pred_fallthru
    _

// kernel: temporal_vae_forward.18
$region0: #{temporal_vae_forward.18}
  #allocation0 [shape = 'u32[]', space=smem, size = 0x4, offset = 0x4, fixed_abs, tag = 'smem constant byte address 0x4 - core index']
  #allocation1 [shape = 'u32[144,128]{1,0:T(1,128)}', space=vmem, size = 0x12000, scoped, tag = 'internal scratch']
  %s0 = inlined_call_operand.vmem [shape: bf16[16,144], index: 0, kind: input, shape index: {}]
  %s1 = inlined_call_operand.vmem [shape: bf16[144,128], index: 1, kind: input, shape index: {}]
  %s2 = inlined_call_operand.vmem [shape: f32[16,1], index: 2, kind: input, shape index: {}]
  %s3 = inlined_call_operand.vmem [shape: f32[16,128], index: 3, kind: output, shape index: {}]
  %s4 = sld [smem:[#allocation0]]
  $region22: #{temporal_vae_forward.18} parent=0
    _
  %s6 = ssub.s32 1, %s4
  %s7 = scalar_select 0, %s6, %s4
  // Predicated region
  $region2: #{temporal_vae_forward.18} parent=0 // pred_check
    _
  $region3: #{temporal_vae_forward.18} parent=0 // pred_check_branch
    %9 = sbr.rel (0) target = $region5
  $region4: #{temporal_vae_forward.18} parent=0 // pred_region
    _
  $region5: #{temporal_vae_forward.18} parent=0 // pred_fallthru
    _
  // Predicated region
  $region6: #{temporal_vae_forward.18} parent=0 // pred_check
    _
  $region7: #{temporal_vae_forward.18} parent=0 // pred_check_branch
    %11 = sbr.rel (0) target = $region9
  $region8: #{temporal_vae_forward.18} parent=0 // pred_region
    _
  $region9: #{temporal_vae_forward.18} parent=0 // pred_fallthru
    _
  // Predicated region
  $region10: #{temporal_vae_forward.18} parent=0 // pred_check
    _
  $region11: #{temporal_vae_forward.18} parent=0 // pred_check_branch
    %13 = sbr.rel (0) target = $region13
  $region12: #{temporal_vae_forward.18} parent=0 // pred_region
    _
  $region13: #{temporal_vae_forward.18} parent=0 // pred_fallthru
    _
  %v15 = vld [vmem:[%s0] sm:$0xff]
  %v16 = vld [vmem:[%s0 + $0x8] sm:$0xff]
  %v17 = vld [vmem:[%s1] sm:$0xf]
  %v18 = vld [vmem:[%s1 + $0x4] sm:$0xf]
  %v19 = vld [vmem:[%s1 + $0x8] sm:$0xf]
  %v20 = vld [vmem:[%s1 + $0xc] sm:$0xf]
  %v21 = vld [vmem:[%s1 + $0x10] sm:$0xf]
  %v22 = vld [vmem:[%s1 + $0x14] sm:$0xf]
  %v23 = vld [vmem:[%s1 + $0x18] sm:$0xf]
  %v24 = vld [vmem:[%s1 + $0x1c] sm:$0xf]
  %v25 = vld [vmem:[%s1 + $0x20] sm:$0xf]
  %v26 = vld [vmem:[%s1 + $0x24] sm:$0xf]
  %v27 = vld [vmem:[%s1 + $0x28] sm:$0xf]
  %v28 = vld [vmem:[%s1 + $0x2c] sm:$0xf]
  %v29 = vld [vmem:[%s1 + $0x30] sm:$0xf]
  %v30 = vld [vmem:[%s1 + $0x34] sm:$0xf]
  %v31 = vld [vmem:[%s1 + $0x38] sm:$0xf]
  %v32 = vld [vmem:[%s1 + $0x3c] sm:$0xf]
  %v33 = vld [vmem:[%s1 + $0x40] sm:$0xf]
  %v34 = vld [vmem:[%s1 + $0x44] sm:$0xf]
  %v35 = vld [vmem:[%s2] sm:$0xff]
  %v36 = vld [vmem:[%s2 + $0x8] sm:$0xff]
  %38 = vset.pattern.permute.xlu0 0
  %39 = vperm.xlu0 %38, %v35
  %v40 = vpop.permute.xlu0 %39
  %43 = vset.pattern.permute.xlu0 0
  %44 = vperm.xlu0 %43, %v36
  %v45 = vpop.permute.xlu0 %44
  %v49 = vunpack.c.l.b16 %v15
  %v50 = vunpack.c.h.b16 %v15
  %v51 = vunpack.c.l.b16 %v16
  %v52 = vunpack.c.h.b16 %v16
  %v53 = vpack.c.b16 %v51, %v49
  %v54 = vpack.c.b16 %v52, %v50
  %v74 = vunpack.c.l.b16 %v17
  %v75 = vunpack.c.l.b16 %v18
  %v76 = vunpack.c.l.b16 %v19
  %v77 = vunpack.c.l.b16 %v20
  %v78 = vunpack.c.l.b16 %v21
  %v79 = vunpack.c.l.b16 %v22
  %v80 = vunpack.c.l.b16 %v23
  %v81 = vunpack.c.l.b16 %v24
  %v82 = vunpack.c.l.b16 %v25
  %v83 = vunpack.c.l.b16 %v26
  %v84 = vunpack.c.l.b16 %v27
  %v85 = vunpack.c.l.b16 %v28
  %v86 = vunpack.c.l.b16 %v29
  %v87 = vunpack.c.l.b16 %v30
  %v88 = vunpack.c.l.b16 %v31
  %v89 = vunpack.c.l.b16 %v32
  %v90 = vunpack.c.l.b16 %v33
  %v91 = vunpack.c.l.b16 %v34
  %v92 = vpack.c.b16 %v75, %v74
  %v93 = vpack.c.b16 %v77, %v76
  %v94 = vpack.c.b16 %v79, %v78
  %v95 = vpack.c.b16 %v81, %v80
  %v96 = vpack.c.b16 %v83, %v82
  %v97 = vpack.c.b16 %v85, %v84
  %v98 = vpack.c.b16 %v87, %v86
  %v99 = vpack.c.b16 %v89, %v88
  %v100 = vpack.c.b16 %v91, %v90
  %vm110 = vcmask 130048
  %v112 = vsel %vm110, %v54, 0
  %114 = vmatprep.subr.bf16.mxu0 0
  %115 = vmatpush1.bf16.msra.mxu0 %v99
  %116 = vmatprep.subr.bf16.mxu0 0
  %117 = vmatpush1.bf16.msra.mxu0 %v98
  %118 = vmatprep.subr.bf16.mxu0 0
  %119 = vmatpush1.bf16.msra.mxu0 %v97
  %120 = vmatprep.subr.bf16.mxu0 0
  %121 = vmatpush1.bf16.msra.mxu0 %v96
  %122 = vmatprep.subr.bf16.mxu0 0
  %123 = vmatpush1.bf16.msra.mxu0 %v95
  %124 = vmatprep.subr.bf16.mxu0 0
  %125 = vmatpush1.bf16.msra.mxu0 %v94
  %126 = vmatprep.subr.bf16.mxu0 0
  %127 = vmatpush1.bf16.msra.mxu0 %v93
  %128 = vmatprep.subr.bf16.mxu0 0
  %129 = vmatpush1.bf16.msra.mxu0 %v92
  %130 = vmatprep.subr.bf16.mxu0 0
  %131 = vmatpush2.bf16.msra.mxu0 0
  %132 = vmatprep.subr.bf16.mxu0 0
  %133 = vmatpush2.bf16.msra.mxu0 0
  %134 = vmatprep.subr.bf16.mxu0 0
  %135 = vmatpush2.bf16.msra.mxu0 0
  %136 = vmatprep.subr.bf16.mxu0 0
  %137 = vmatpush2.bf16.msra.mxu0 0
  %138 = vmatprep.subr.bf16.mxu0 0
  %139 = vmatpush2.bf16.msra.mxu0 0
  %140 = vmatprep.subr.bf16.mxu0 0
  %141 = vmatpush2.bf16.msra.mxu0 0
  %142 = vmatprep.subr.bf16.mxu0 0
  %143 = vmatpush2.bf16.msra.mxu0 0
  %144 = vmatprep.subr.bf16.mxu0 0
  %145 = vmatpush2.bf16.msra.mxu0 %v100
  %146 = vmatprep.mubr.bf16.mxu0 %v112
  %147 = vmatmul.mubr.bf16.gmra.mxu0 %v53
  %v148 = vpop.f32.mrf.mxu0
  %v149 = vadd.f32 %v40, %v148
  %v150 = vpop.f32.mrf.mxu0
  %v151 = vpop.f32.mrf.mxu0
  %v152 = vadd.f32 %v45, %v151
  %v153 = vpop.f32.mrf.mxu0
  %154 = vdwg.mxu0
  %v155 = vmax.f32 %v149, 0.0
  %v156 = vmax.f32 %v152, 0.0
  %157 = vst [vmem:[%s3] sm:$0xff] %v155
  %158 = vst [vmem:[%s3 + $0x8] sm:$0xff] %v156
  // Predicated region
  $region14: #{temporal_vae_forward.18} parent=0 // pred_check
    _
  $region15: #{temporal_vae_forward.18} parent=0 // pred_check_branch
    %160 = sbr.rel (0) target = $region17
  $region16: #{temporal_vae_forward.18} parent=0 // pred_region
    _
  $region17: #{temporal_vae_forward.18} parent=0 // pred_fallthru
    _
  // Predicated region
  $region18: #{temporal_vae_forward.18} parent=0 // pred_check
    _
  $region19: #{temporal_vae_forward.18} parent=0 // pred_check_branch
    %162 = sbr.rel (0) target = $region21
  $region20: #{temporal_vae_forward.18} parent=0 // pred_region
    _
  $region21: #{temporal_vae_forward.18} parent=0 // pred_fallthru
    _

// kernel: temporal_vae_forward.19
$region0: #{temporal_vae_forward.19}
  #allocation0 [shape = 'u32[]', space=smem, size = 0x4, offset = 0x4, fixed_abs, tag = 'smem constant byte address 0x4 - core index']
  #allocation1 [shape = 'u32[144,128]{1,0:T(1,128)}', space=vmem, size = 0x12000, scoped, tag = 'internal scratch']
  %s0 = inlined_call_operand.vmem [shape: bf16[34,144], index: 0, kind: input, shape index: {}]
  %s1 = inlined_call_operand.vmem [shape: bf16[144,128], index: 1, kind: input, shape index: {}]
  %s2 = inlined_call_operand.vmem [shape: f32[34,1], index: 2, kind: input, shape index: {}]
  %s3 = inlined_call_operand.vmem [shape: f32[2,128], index: 3, kind: output, shape index: {0}]
  %s4 = inlined_call_operand.vmem [shape: f32[32,128], index: 4, kind: output, shape index: {1}]
  %5 = xla_tuple %s3, %s4
  %s6 = sld [smem:[#allocation0]]
  $region30: #{temporal_vae_forward.19} parent=0
    _
  %s8 = ssub.s32 1, %s6
  %s9 = scalar_select 0, %s8, %s6
  // Predicated region
  $region2: #{temporal_vae_forward.19} parent=0 // pred_check
    _
  $region3: #{temporal_vae_forward.19} parent=0 // pred_check_branch
    %11 = sbr.rel (0) target = $region5
  $region4: #{temporal_vae_forward.19} parent=0 // pred_region
    _
  $region5: #{temporal_vae_forward.19} parent=0 // pred_fallthru
    _
  // Predicated region
  $region6: #{temporal_vae_forward.19} parent=0 // pred_check
    _
  $region7: #{temporal_vae_forward.19} parent=0 // pred_check_branch
    %13 = sbr.rel (0) target = $region9
  $region8: #{temporal_vae_forward.19} parent=0 // pred_region
    _
  $region9: #{temporal_vae_forward.19} parent=0 // pred_fallthru
    _
  // Predicated region
  $region10: #{temporal_vae_forward.19} parent=0 // pred_check
    _
  $region11: #{temporal_vae_forward.19} parent=0 // pred_check_branch
    %15 = sbr.rel (0) target = $region13
  $region12: #{temporal_vae_forward.19} parent=0 // pred_region
    _
  $region13: #{temporal_vae_forward.19} parent=0 // pred_fallthru
    _
  %v17 = vld [vmem:[%s0] sm:$0xff]
  %v18 = vld [vmem:[%s0 + $0x8] sm:$0xff]
  %v19 = vld [vmem:[%s0 + $0x10] sm:$0xff]
  %v20 = vld [vmem:[%s0 + $0x18] sm:$0xff]
  %v21 = vld [vmem:[%s0 + $0x20] sm:$0x11]
  %v22 = vld [vmem:[%s1] sm:$0xf]
  %v23 = vld [vmem:[%s1 + $0x4] sm:$0xf]
  %v24 = vld [vmem:[%s1 + $0x8] sm:$0xf]
  %v25 = vld [vmem:[%s1 + $0xc] sm:$0xf]
  %v26 = vld [vmem:[%s1 + $0x10] sm:$0xf]
  %v27 = vld [vmem:[%s1 + $0x14] sm:$0xf]
  %v28 = vld [vmem:[%s1 + $0x18] sm:$0xf]
  %v29 = vld [vmem:[%s1 + $0x1c] sm:$0xf]
  %v30 = vld [vmem:[%s1 + $0x20] sm:$0xf]
  %v31 = vld [vmem:[%s1 + $0x24] sm:$0xf]
  %v32 = vld [vmem:[%s1 + $0x28] sm:$0xf]
  %v33 = vld [vmem:[%s1 + $0x2c] sm:$0xf]
  %v34 = vld [vmem:[%s1 + $0x30] sm:$0xf]
  %v35 = vld [vmem:[%s1 + $0x34] sm:$0xf]
  %v36 = vld [vmem:[%s1 + $0x38] sm:$0xf]
  %v37 = vld [vmem:[%s1 + $0x3c] sm:$0xf]
  %v38 = vld [vmem:[%s1 + $0x40] sm:$0xf]
  %v39 = vld [vmem:[%s1 + $0x44] sm:$0xf]
  %v40 = vld [vmem:[%s2] sm:$0xff]
  %v41 = vld [vmem:[%s2 + $0x8] sm:$0xff]
  %v42 = vld [vmem:[%s2 + $0x10] sm:$0xff]
  %v43 = vld [vmem:[%s2 + $0x18] sm:$0xff]
  %v44 = vld [vmem:[%s2 + $0x20] sm:$0x3]
  %46 = vset.pattern.permute.xlu0 0
  %47 = vperm.xlu0 %46, %v40
  %v48 = vpop.permute.xlu0 %47
  %51 = vset.pattern.permute.xlu0 0
  %52 = vperm.xlu0 %51, %v41
  %v53 = vpop.permute.xlu0 %52
  %56 = vset.pattern.permute.xlu0 0
  %57 = vperm.xlu0 %56, %v42
  %v58 = vpop.permute.xlu0 %57
  %61 = vset.pattern.permute.xlu0 0
  %62 = vperm.xlu0 %61, %v43
  %v63 = vpop.permute.xlu0 %62
  %66 = vset.pattern.permute.xlu0 0
  %67 = vperm.xlu0 %66, %v44
  %v68 = vpop.permute.xlu0 %67
  %v75 = vunpack.c.l.b16 %v17
  %v76 = vunpack.c.h.b16 %v17
  %v77 = vunpack.c.l.b16 %v18
  %v78 = vunpack.c.h.b16 %v18
  %v79 = vunpack.c.l.b16 %v19
  %v80 = vunpack.c.h.b16 %v19
  %v81 = vunpack.c.l.b16 %v20
  %v82 = vunpack.c.h.b16 %v20
  %v83 = vunpack.c.l.b16 %v21
  %v84 = vunpack.c.h.b16 %v21
  %v85 = vpack.c.b16 %v77, %v75
  %v86 = vpack.c.b16 %v78, %v76
  %v87 = vpack.c.b16 %v81, %v79
  %v88 = vpack.c.b16 %v82, %v80
  %v89 = vpack.c.b16 %v83, %v83
  %v90 = vpack.c.b16 %v84, %v84
  %v112 = vunpack.c.l.b16 %v22
  %v113 = vunpack.c.l.b16 %v23
  %v114 = vunpack.c.l.b16 %v24
  %v115 = vunpack.c.l.b16 %v25
  %v116 = vunpack.c.l.b16 %v26
  %v117 = vunpack.c.l.b16 %v27
  %v118 = vunpack.c.l.b16 %v28
  %v119 = vunpack.c.l.b16 %v29
  %v120 = vunpack.c.l.b16 %v30
  %v121 = vunpack.c.l.b16 %v31
  %v122 = vunpack.c.l.b16 %v32
  %v123 = vunpack.c.l.b16 %v33
  %v124 = vunpack.c.l.b16 %v34
  %v125 = vunpack.c.l.b16 %v35
  %v126 = vunpack.c.l.b16 %v36
  %v127 = vunpack.c.l.b16 %v37
  %v128 = vunpack.c.l.b16 %v38
  %v129 = vunpack.c.l.b16 %v39
  %v130 = vpack.c.b16 %v113, %v112
  %v131 = vpack.c.b16 %v115, %v114
  %v132 = vpack.c.b16 %v117, %v116
  %v133 = vpack.c.b16 %v119, %v118
  %v134 = vpack.c.b16 %v121, %v120
  %v135 = vpack.c.b16 %v123, %v122
  %v136 = vpack.c.b16 %v125, %v124
  %v137 = vpack.c.b16 %v127, %v126
  %v138 = vpack.c.b16 %v129, %v128
  %vm148 = vcmask 130048
  %v150 = vsel %vm148, %v86, 0
  %v153 = vsel %vm148, %v88, 0
  %v156 = vsel %vm148, %v90, 0
  %158 = vmatprep.subr.bf16.mxu0 0
  %159 = vmatpush1.bf16.msra.mxu0 %v137
  %160 = vmatprep.subr.bf16.mxu0 0
  %161 = vmatpush1.bf16.msra.mxu0 %v136
  %162 = vmatprep.subr.bf16.mxu0 0
  %163 = vmatpush1.bf16.msra.mxu0 %v135
  %164 = vmatprep.subr.bf16.mxu0 0
  %165 = vmatpush1.bf16.msra.mxu0 %v134
  %166 = vmatprep.subr.bf16.mxu0 0
  %167 = vmatpush1.bf16.msra.mxu0 %v133
  %168 = vmatprep.subr.bf16.mxu0 0
  %169 = vmatpush1.bf16.msra.mxu0 %v132
  %170 = vmatprep.subr.bf16.mxu0 0
  %171 = vmatpush1.bf16.msra.mxu0 %v131
  %172 = vmatprep.subr.bf16.mxu0 0
  %173 = vmatpush1.bf16.msra.mxu0 %v130
  %174 = vmatprep.subr.bf16.mxu0 0
  %175 = vmatpush2.bf16.msra.mxu0 0
  %176 = vmatprep.subr.bf16.mxu0 0
  %177 = vmatpush2.bf16.msra.mxu0 0
  %178 = vmatprep.subr.bf16.mxu0 0
  %179 = vmatpush2.bf16.msra.mxu0 0
  %180 = vmatprep.subr.bf16.mxu0 0
  %181 = vmatpush2.bf16.msra.mxu0 0
  %182 = vmatprep.subr.bf16.mxu0 0
  %183 = vmatpush2.bf16.msra.mxu0 0
  %184 = vmatprep.subr.bf16.mxu0 0
  %185 = vmatpush2.bf16.msra.mxu0 0
  %186 = vmatprep.subr.bf16.mxu0 0
  %187 = vmatpush2.bf16.msra.mxu0 0
  %188 = vmatprep.subr.bf16.mxu0 0
  %189 = vmatpush2.bf16.msra.mxu0 %v138
  %190 = vmatprep.mubr.bf16.mxu0 %v150
  %191 = vmatmul.mubr.bf16.gmra.mxu0 %v85
  %v192 = vpop.f32.mrf.mxu0
  %v193 = vadd.f32 %v48, %v192
  %v194 = vpop.f32.mrf.mxu0
  %v195 = vpop.f32.mrf.mxu0
  %v196 = vadd.f32 %v53, %v195
  %v197 = vpop.f32.mrf.mxu0
  %198 = vmatprep.mubr.bf16.mxu0 %v153
  %199 = vmatmul.mubr.bf16.gmra.mxu0 %v87
  %v200 = vpop.f32.mrf.mxu0
  %v201 = vadd.f32 %v58, %v200
  %v202 = vpop.f32.mrf.mxu0
  %v203 = vpop.f32.mrf.mxu0
  %v204 = vadd.f32 %v63, %v203
  %v205 = vpop.f32.mrf.mxu0
  %206 = vmatprep.mubr.bf16.mxu0 %v156
  %207 = vmatmul.mubr.bf16.gmra.mxu0 %v89
  %v208 = vpop.f32.mrf.mxu0
  %v209 = vadd.f32 %v68, %v208
  %v210 = vpop.f32.mrf.mxu0
  %v211 = vpop.f32.mrf.mxu0
  %v212 = vpop.f32.mrf.mxu0
  %213 = vdwg.mxu0
  %v214 = vtanh.pop %v193
  %v215 = vmax.f32 %v193, 0.0
  %v216 = vmax.f32 %v196, 0.0
  %v217 = vmax.f32 %v201, 0.0
  %v218 = vmax.f32 %v204, 0.0
  %v219 = vmax.f32 %v209, 0.0
  %220 = vst [vmem:[%s3] sm:$0x3] %v214
  %221 = vst [vmem:[%s4 - $0x2] sm:$0xfc] %v215
  %222 = vst [vmem:[%s4 + $0x6] sm:$0xff] %v216
  %223 = vst [vmem:[%s4 + $0xe] sm:$0xff] %v217
  %224 = vst [vmem:[%s4 + $0x16] sm:$0xff] %v218
  %225 = vst [vmem:[%s4 + $0x1e] sm:$0x3] %v219
  // Predicated region
  $region14: #{temporal_vae_forward.19} parent=0 // pred_check
    _
  $region15: #{temporal_vae_forward.19} parent=0 // pred_check_branch
    %227 = sbr.rel (0) target = $region17
  $region16: #{temporal_vae_forward.19} parent=0 // pred_region
    _
  $region17: #{temporal_vae_forward.19} parent=0 // pred_fallthru
    _
  // Predicated region
  $region18: #{temporal_vae_forward.19} parent=0 // pred_check
    _
  $region19: #{temporal_vae_forward.19} parent=0 // pred_check_branch
    %229 = sbr.rel (0) target = $region21
  $region20: #{temporal_vae_forward.19} parent=0 // pred_region
    _
  $region21: #{temporal_vae_forward.19} parent=0 // pred_fallthru
    _
  // Predicated region
  $region22: #{temporal_vae_forward.19} parent=0 // pred_check
    _
  $region23: #{temporal_vae_forward.19} parent=0 // pred_check_branch
    %231 = sbr.rel (0) target = $region25
  $region24: #{temporal_vae_forward.19} parent=0 // pred_region
    _
  $region25: #{temporal_vae_forward.19} parent=0 // pred_fallthru
    _
  // Predicated region
  $region26: #{temporal_vae_forward.19} parent=0 // pred_check
    _
  $region27: #{temporal_vae_forward.19} parent=0 // pred_check_branch
    %233 = sbr.rel (0) target = $region29
  $region28: #{temporal_vae_forward.19} parent=0 // pred_region
    _
  $region29: #{temporal_vae_forward.19} parent=0 // pred_fallthru
    _

// kernel: temporal_vae_forward.20
$region0: #{temporal_vae_forward.20}
  #allocation0 [shape = 'u32[]', space=smem, size = 0x4, offset = 0x4, fixed_abs, tag = 'smem constant byte address 0x4 - core index']
  #allocation1 [shape = 'u32[144,128]{1,0:T(1,128)}', space=vmem, size = 0x12000, scoped, tag = 'internal scratch']
  %s0 = inlined_call_operand.vmem [shape: bf16[8,72], index: 0, kind: input, shape index: {}]
  %s1 = inlined_call_operand.vmem [shape: bf16[72,512], index: 1, kind: input, shape index: {}]
  %s2 = inlined_call_operand.vmem [shape: f32[8,1], index: 2, kind: input, shape index: {}]
  %s3 = inlined_call_operand.vmem [shape: f32[8,512], index: 3, kind: output, shape index: {}]
  %s4 = sld [smem:[#allocation0]]
  $region22: #{temporal_vae_forward.20} parent=0
    _
  %s6 = ssub.s32 1, %s4
  %s7 = scalar_select 0, %s6, %s4
  // Predicated region
  $region2: #{temporal_vae_forward.20} parent=0 // pred_check
    _
  $region3: #{temporal_vae_forward.20} parent=0 // pred_check_branch
    %9 = sbr.rel (0) target = $region5
  $region4: #{temporal_vae_forward.20} parent=0 // pred_region
    _
  $region5: #{temporal_vae_forward.20} parent=0 // pred_fallthru
    _
  // Predicated region
  $region6: #{temporal_vae_forward.20} parent=0 // pred_check
    _
  $region7: #{temporal_vae_forward.20} parent=0 // pred_check_branch
    %11 = sbr.rel (0) target = $region9
  $region8: #{temporal_vae_forward.20} parent=0 // pred_region
    _
  $region9: #{temporal_vae_forward.20} parent=0 // pred_fallthru
    _
  // Predicated region
  $region10: #{temporal_vae_forward.20} parent=0 // pred_check
    _
  $region11: #{temporal_vae_forward.20} parent=0 // pred_check_branch
    %13 = sbr.rel (0) target = $region13
  $region12: #{temporal_vae_forward.20} parent=0 // pred_region
    _
  $region13: #{temporal_vae_forward.20} parent=0 // pred_fallthru
    _
  %v15 = vld [vmem:[%s0] sm:$0xf]
  %v16 = vld [vmem:[%s1] sm:$0xff]
  %v17 = vld [vmem:[%s1 + $0x8] sm:$0xff]
  %v18 = vld [vmem:[%s1 + $0x10] sm:$0xff]
  %v19 = vld [vmem:[%s1 + $0x18] sm:$0xff]
  %v20 = vld [vmem:[%s1 + $0x20] sm:$0xff]
  %v21 = vld [vmem:[%s1 + $0x28] sm:$0xff]
  %v22 = vld [vmem:[%s1 + $0x30] sm:$0xff]
  %v23 = vld [vmem:[%s1 + $0x38] sm:$0xff]
  %v24 = vld [vmem:[%s1 + $0x40] sm:$0xff]
  %v25 = vld [vmem:[%s1 + $0x48] sm:$0xff]
  %v26 = vld [vmem:[%s1 + $0x50] sm:$0xff]
  %v27 = vld [vmem:[%s1 + $0x58] sm:$0xff]
  %v28 = vld [vmem:[%s1 + $0x60] sm:$0xff]
  %v29 = vld [vmem:[%s1 + $0x68] sm:$0xff]
  %v30 = vld [vmem:[%s1 + $0x70] sm:$0xff]
  %v31 = vld [vmem:[%s1 + $0x78] sm:$0xff]
  %v32 = vld [vmem:[%s1 + $0x80] sm:$0xff]
  %v33 = vld [vmem:[%s1 + $0x88] sm:$0xff]
  %v34 = vld [vmem:[%s2] sm:$0xff]
  %36 = vset.pattern.permute.xlu0 0
  %37 = vperm.xlu0 %36, %v34
  %v38 = vpop.permute.xlu0 %37
  %v58 = vunpack.c.l.b16 %v16
  %v59 = vunpack.c.h.b16 %v16
  %v60 = vunpack.c.l.b16 %v17
  %v61 = vunpack.c.h.b16 %v17
  %v62 = vunpack.c.l.b16 %v18
  %v63 = vunpack.c.h.b16 %v18
  %v64 = vunpack.c.l.b16 %v19
  %v65 = vunpack.c.h.b16 %v19
  %v66 = vunpack.c.l.b16 %v20
  %v67 = vunpack.c.h.b16 %v20
  %v68 = vunpack.c.l.b16 %v21
  %v69 = vunpack.c.h.b16 %v21
  %v70 = vunpack.c.l.b16 %v22
  %v71 = vunpack.c.h.b16 %v22
  %v72 = vunpack.c.l.b16 %v23
  %v73 = vunpack.c.h.b16 %v23
  %v74 = vunpack.c.l.b16 %v24
  %v75 = vunpack.c.h.b16 %v24
  %v76 = vunpack.c.l.b16 %v25
  %v77 = vunpack.c.h.b16 %v25
  %v78 = vunpack.c.l.b16 %v26
  %v79 = vunpack.c.h.b16 %v26
  %v80 = vunpack.c.l.b16 %v27
  %v81 = vunpack.c.h.b16 %v27
  %v82 = vunpack.c.l.b16 %v28
  %v83 = vunpack.c.h.b16 %v28
  %v84 = vunpack.c.l.b16 %v29
  %v85 = vunpack.c.h.b16 %v29
  %v86 = vunpack.c.l.b16 %v30
  %v87 = vunpack.c.h.b16 %v30
  %v88 = vunpack.c.l.b16 %v31
  %v89 = vunpack.c.h.b16 %v31
  %v90 = vunpack.c.l.b16 %v32
  %v91 = vunpack.c.h.b16 %v32
  %v92 = vunpack.c.l.b16 %v33
  %v93 = vunpack.c.h.b16 %v33
  %v94 = vpack.c.b16 %v62, %v58
  %v95 = vpack.c.b16 %v63, %v59
  %v96 = vpack.c.b16 %v64, %v60
  %v97 = vpack.c.b16 %v65, %v61
  %v98 = vpack.c.b16 %v70, %v66
  %v99 = vpack.c.b16 %v71, %v67
  %v100 = vpack.c.b16 %v72, %v68
  %v101 = vpack.c.b16 %v73, %v69
  %v102 = vpack.c.b16 %v78, %v74
  %v103 = vpack.c.b16 %v79, %v75
  %v104 = vpack.c.b16 %v80, %v76
  %v105 = vpack.c.b16 %v81, %v77
  %v106 = vpack.c.b16 %v86, %v82
  %v107 = vpack.c.b16 %v87, %v83
  %v108 = vpack.c.b16 %v88, %v84
  %v109 = vpack.c.b16 %v89, %v85
  %v110 = vpack.c.b16 %v90, %v90
  %v111 = vpack.c.b16 %v91, %v91
  %v112 = vpack.c.b16 %v92, %v92
  %v113 = vpack.c.b16 %v93, %v93
  %vm130 = vcmask 588800
  %v132 = vsel %vm130, %v15, 0
  %vm134 = vcmask 1043456
  %v136 = vsel %vm134, %v110, 0
  %v139 = vsel %vm134, %v111, 0
  %v142 = vsel %vm134, %v112, 0
  %v145 = vsel %vm134, %v113, 0
  %147 = vmatprep.subr.bf16.mxu0 0
  %148 = vmatpush1.bf16.msra.mxu0 0
  %149 = vmatprep.subr.bf16.mxu0 0
  %150 = vmatpush1.bf16.msra.mxu0 0
  %151 = vmatprep.subr.bf16.mxu0 0
  %152 = vmatpush1.bf16.msra.mxu0 0
  %153 = vmatprep.subr.bf16.mxu0 %v139
  %154 = vmatpush1.bf16.msra.mxu0 %v136
  %155 = vmatprep.subr.bf16.mxu0 %v107
  %156 = vmatpush1.bf16.msra.mxu0 %v106
  %157 = vmatprep.subr.bf16.mxu0 %v103
  %158 = vmatpush1.bf16.msra.mxu0 %v102
  %159 = vmatprep.subr.bf16.mxu0 %v99
  %160 = vmatpush1.bf16.msra.mxu0 %v98
  %161 = vmatprep.subr.bf16.mxu0 %v95
  %162 = vmatpush1.bf16.msra.mxu0 %v94
  %163 = vmatprep.subr.bf16.mxu0 0
  %164 = vmatpush2.bf16.msra.mxu0 0
  %165 = vmatprep.subr.bf16.mxu0 0
  %166 = vmatpush2.bf16.msra.mxu0 0
  %167 = vmatprep.subr.bf16.mxu0 0
  %168 = vmatpush2.bf16.msra.mxu0 0
  %169 = vmatprep.subr.bf16.mxu0 0
  %170 = vmatpush2.bf16.msra.mxu0 0
  %171 = vmatprep.subr.bf16.mxu0 0
  %172 = vmatpush2.bf16.msra.mxu0 0
  %173 = vmatprep.subr.bf16.mxu0 0
  %174 = vmatpush2.bf16.msra.mxu0 0
  %175 = vmatprep.subr.bf16.mxu0 0
  %176 = vmatpush2.bf16.msra.mxu0 0
  %177 = vmatprep.subr.bf16.mxu0 0
  %178 = vmatpush2.bf16.msra.mxu0 0
  %179 = vmatprep.mubr.bf16.mxu0 0
  %180 = vmatmul.mubr.bf16.gmra.mxu0 %v132
  %v181 = vpop.f32.mrf.mxu0
  %v182 = vadd.f32 %v38, %v181
  %v183 = vpop.f32.mrf.mxu0
  %v184 = vadd.f32 %v38, %v183
  %v185 = vpop.f32.mrf.mxu0
  %v186 = vpop.f32.mrf.mxu0
  %187 = vdwg.mxu0
  %188 = vmatprep.subr.bf16.mxu0 0
  %189 = vmatpush1.bf16.msra.mxu0 0
  %190 = vmatprep.subr.bf16.mxu0 0
  %191 = vmatpush1.bf16.msra.mxu0 0
  %192 = vmatprep.subr.bf16.mxu0 0
  %193 = vmatpush1.bf16.msra.mxu0 0
  %194 = vmatprep.subr.bf16.mxu0 %v145
  %195 = vmatpush1.bf16.msra.mxu0 %v142
  %196 = vmatprep.subr.bf16.mxu0 %v109
  %197 = vmatpush1.bf16.msra.mxu0 %v108
  %198 = vmatprep.subr.bf16.mxu0 %v105
  %199 = vmatpush1.bf16.msra.mxu0 %v104
  %200 = vmatprep.subr.bf16.mxu0 %v101
  %201 = vmatpush1.bf16.msra.mxu0 %v100
  %202 = vmatprep.subr.bf16.mxu0 %v97
  %203 = vmatpush1.bf16.msra.mxu0 %v96
  %204 = vmatprep.subr.bf16.mxu0 0
  %205 = vmatpush2.bf16.msra.mxu0 0
  %206 = vmatprep.subr.bf16.mxu0 0
  %207 = vmatpush2.bf16.msra.mxu0 0
  %208 = vmatprep.subr.bf16.mxu0 0
  %209 = vmatpush2.bf16.msra.mxu0 0
  %210 = vmatprep.subr.bf16.mxu0 0
  %211 = vmatpush2.bf16.msra.mxu0 0
  %212 = vmatprep.subr.bf16.mxu0 0
  %213 = vmatpush2.bf16.msra.mxu0 0
  %214 = vmatprep.subr.bf16.mxu0 0
  %215 = vmatpush2.bf16.msra.mxu0 0
  %216 = vmatprep.subr.bf16.mxu0 0
  %217 = vmatpush2.bf16.msra.mxu0 0
  %218 = vmatprep.subr.bf16.mxu0 0
  %219 = vmatpush2.bf16.msra.mxu0 0
  %220 = vmatprep.mubr.bf16.mxu0 0
  %221 = vmatmul.mubr.bf16.gmra.mxu0 %v132
  %v222 = vpop.f32.mrf.mxu0
  %v223 = vadd.f32 %v38, %v222
  %v224 = vpop.f32.mrf.mxu0
  %v225 = vadd.f32 %v38, %v224
  %v226 = vpop.f32.mrf.mxu0
  %v227 = vpop.f32.mrf.mxu0
  %228 = vdwg.mxu0
  %v229 = vmax.f32 %v182, 0.0
  %v230 = vmax.f32 %v184, 0.0
  %v231 = vmax.f32 %v223, 0.0
  %v232 = vmax.f32 %v225, 0.0
  %233 = vst [vmem:[%s3] sm:$0xff] %v229
  %234 = vst [vmem:[%s3 + $0x8] sm:$0xff] %v230
  %235 = vst [vmem:[%s3 + $0x10] sm:$0xff] %v231
  %236 = vst [vmem:[%s3 + $0x18] sm:$0xff] %v232
  // Predicated region
  $region14: #{temporal_vae_forward.20} parent=0 // pred_check
    _
  $region15: #{temporal_vae_forward.20} parent=0 // pred_check_branch
    %238 = sbr.rel (0) target = $region17
  $region16: #{temporal_vae_forward.20} parent=0 // pred_region
    _
  $region17: #{temporal_vae_forward.20} parent=0 // pred_fallthru
    _
  // Predicated region
  $region18: #{temporal_vae_forward.20} parent=0 // pred_check
    _
  $region19: #{temporal_vae_forward.20} parent=0 // pred_check_branch
    %240 = sbr.rel (0) target = $region21
  $region20: #{temporal_vae_forward.20} parent=0 // pred_region
    _
  $region21: #{temporal_vae_forward.20} parent=0 // pred_fallthru
    _

// kernel: temporal_vae_forward.21
$region0: #{temporal_vae_forward.21}
  #allocation0 [shape = 'u32[]', space=smem, size = 0x4, offset = 0x4, fixed_abs, tag = 'smem constant byte address 0x4 - core index']
  #allocation1 [shape = 'u32[144,128]{1,0:T(1,128)}', space=vmem, size = 0x12000, scoped, tag = 'internal scratch']
  %s0 = inlined_call_operand.vmem [shape: bf16[34,72], index: 0, kind: input, shape index: {}]
  %s1 = inlined_call_operand.vmem [shape: bf16[72,512], index: 1, kind: input, shape index: {}]
  %s2 = inlined_call_operand.vmem [shape: f32[34,1], index: 2, kind: input, shape index: {}]
  %s3 = inlined_call_operand.vmem [shape: f32[2,512], index: 3, kind: input, shape index: {}]
  %s4 = inlined_call_operand.vmem [shape: f32[2,512], index: 4, kind: output, shape index: {0}]
  %s5 = inlined_call_operand.vmem [shape: f32[32,512], index: 5, kind: output, shape index: {1}]
  %6 = xla_tuple %s4, %s5
  %s7 = sld [smem:[#allocation0]]
  $region34: #{temporal_vae_forward.21} parent=0
    _
  %s9 = ssub.s32 1, %s7
  %s10 = scalar_select 0, %s9, %s7
  // Predicated region
  $region2: #{temporal_vae_forward.21} parent=0 // pred_check
    _
  $region3: #{temporal_vae_forward.21} parent=0 // pred_check_branch
    %12 = sbr.rel (0) target = $region5
  $region4: #{temporal_vae_forward.21} parent=0 // pred_region
    _
  $region5: #{temporal_vae_forward.21} parent=0 // pred_fallthru
    _
  // Predicated region
  $region6: #{temporal_vae_forward.21} parent=0 // pred_check
    _
  $region7: #{temporal_vae_forward.21} parent=0 // pred_check_branch
    %14 = sbr.rel (0) target = $region9
  $region8: #{temporal_vae_forward.21} parent=0 // pred_region
    _
  $region9: #{temporal_vae_forward.21} parent=0 // pred_fallthru
    _
  // Predicated region
  $region10: #{temporal_vae_forward.21} parent=0 // pred_check
    _
  $region11: #{temporal_vae_forward.21} parent=0 // pred_check_branch
    %16 = sbr.rel (0) target = $region13
  $region12: #{temporal_vae_forward.21} parent=0 // pred_region
    _
  $region13: #{temporal_vae_forward.21} parent=0 // pred_fallthru
    _
  // Predicated region
  $region14: #{temporal_vae_forward.21} parent=0 // pred_check
    _
  $region15: #{temporal_vae_forward.21} parent=0 // pred_check_branch
    %18 = sbr.rel (0) target = $region17
  $region16: #{temporal_vae_forward.21} parent=0 // pred_region
    _
  $region17: #{temporal_vae_forward.21} parent=0 // pred_fallthru
    _
  %v20 = vld [vmem:[%s0] sm:$0xf]
  %v21 = vld [vmem:[%s0 + $0x4] sm:$0xf]
  %v22 = vld [vmem:[%s0 + $0x8] sm:$0xf]
  %v23 = vld [vmem:[%s0 + $0xc] sm:$0xf]
  %v24 = vld [vmem:[%s0 + $0x10] sm:$0x1]
  %v25 = vld [vmem:[%s1] sm:$0xff]
  %v26 = vld [vmem:[%s1 + $0x8] sm:$0xff]
  %v27 = vld [vmem:[%s1 + $0x10] sm:$0xff]
  %v28 = vld [vmem:[%s1 + $0x18] sm:$0xff]
  %v29 = vld [vmem:[%s1 + $0x20] sm:$0xff]
  %v30 = vld [vmem:[%s1 + $0x28] sm:$0xff]
  %v31 = vld [vmem:[%s1 + $0x30] sm:$0xff]
  %v32 = vld [vmem:[%s1 + $0x38] sm:$0xff]
  %v33 = vld [vmem:[%s1 + $0x40] sm:$0xff]
  %v34 = vld [vmem:[%s1 + $0x48] sm:$0xff]
  %v35 = vld [vmem:[%s1 + $0x50] sm:$0xff]
  %v36 = vld [vmem:[%s1 + $0x58] sm:$0xff]
  %v37 = vld [vmem:[%s1 + $0x60] sm:$0xff]
  %v38 = vld [vmem:[%s1 + $0x68] sm:$0xff]
  %v39 = vld [vmem:[%s1 + $0x70] sm:$0xff]
  %v40 = vld [vmem:[%s1 + $0x78] sm:$0xff]
  %v41 = vld [vmem:[%s1 + $0x80] sm:$0xff]
  %v42 = vld [vmem:[%s1 + $0x88] sm:$0xff]
  %v43 = vld [vmem:[%s2] sm:$0xff]
  %v44 = vld [vmem:[%s2 + $0x8] sm:$0xff]
  %v45 = vld [vmem:[%s2 + $0x10] sm:$0xff]
  %v46 = vld [vmem:[%s2 + $0x18] sm:$0xff]
  %v47 = vld [vmem:[%s2 + $0x20] sm:$0x3]
  %49 = vset.pattern.permute.xlu0 0
  %50 = vperm.xlu0 %49, %v43
  %v51 = vpop.permute.xlu0 %50
  %54 = vset.pattern.permute.xlu0 0
  %55 = vperm.xlu0 %54, %v44
  %v56 = vpop.permute.xlu0 %55
  %59 = vset.pattern.permute.xlu0 0
  %60 = vperm.xlu0 %59, %v45
  %v61 = vpop.permute.xlu0 %60
  %64 = vset.pattern.permute.xlu0 0
  %65 = vperm.xlu0 %64, %v46
  %v66 = vpop.permute.xlu0 %65
  %69 = vset.pattern.permute.xlu0 0
  %70 = vperm.xlu0 %69, %v47
  %v71 = vpop.permute.xlu0 %70
  %v78 = vunpack.c.l.b16 %v20
  %v79 = vunpack.c.l.b16 %v21
  %v80 = vunpack.c.l.b16 %v22
  %v81 = vunpack.c.l.b16 %v23
  %v82 = vunpack.c.l.b16 %v24
  %v83 = vpack.c.b16 %v79, %v78
  %v84 = vpack.c.b16 %v81, %v80
  %v85 = vpack.c.b16 %v82, %v82
  %v104 = vunpack.c.l.b16 %v25
  %v105 = vunpack.c.h.b16 %v25
  %v106 = vunpack.c.l.b16 %v26
  %v107 = vunpack.c.h.b16 %v26
  %v108 = vunpack.c.l.b16 %v27
  %v109 = vunpack.c.h.b16 %v27
  %v110 = vunpack.c.l.b16 %v28
  %v111 = vunpack.c.h.b16 %v28
  %v112 = vunpack.c.l.b16 %v29
  %v113 = vunpack.c.h.b16 %v29
  %v114 = vunpack.c.l.b16 %v30
  %v115 = vunpack.c.h.b16 %v30
  %v116 = vunpack.c.l.b16 %v31
  %v117 = vunpack.c.h.b16 %v31
  %v118 = vunpack.c.l.b16 %v32
  %v119 = vunpack.c.h.b16 %v32
  %v120 = vunpack.c.l.b16 %v33
  %v121 = vunpack.c.h.b16 %v33
  %v122 = vunpack.c.l.b16 %v34
  %v123 = vunpack.c.h.b16 %v34
  %v124 = vunpack.c.l.b16 %v35
  %v125 = vunpack.c.h.b16 %v35
  %v126 = vunpack.c.l.b16 %v36
  %v127 = vunpack.c.h.b16 %v36
  %v128 = vunpack.c.l.b16 %v37
  %v129 = vunpack.c.h.b16 %v37
  %v130 = vunpack.c.l.b16 %v38
  %v131 = vunpack.c.h.b16 %v38
  %v132 = vunpack.c.l.b16 %v39
  %v133 = vunpack.c.h.b16 %v39
  %v134 = vunpack.c.l.b16 %v40
  %v135 = vunpack.c.h.b16 %v40
  %v136 = vunpack.c.l.b16 %v41
  %v137 = vunpack.c.h.b16 %v41
  %v138 = vunpack.c.l.b16 %v42
  %v139 = vunpack.c.h.b16 %v42
  %v140 = vpack.c.b16 %v108, %v104
  %v141 = vpack.c.b16 %v109, %v105
  %v142 = vpack.c.b16 %v110, %v106
  %v143 = vpack.c.b16 %v111, %v107
  %v144 = vpack.c.b16 %v116, %v112
  %v145 = vpack.c.b16 %v117, %v113
  %v146 = vpack.c.b16 %v118, %v114
  %v147 = vpack.c.b16 %v119, %v115
  %v148 = vpack.c.b16 %v124, %v120
  %v149 = vpack.c.b16 %v125, %v121
  %v150 = vpack.c.b16 %v126, %v122
  %v151 = vpack.c.b16 %v127, %v123
  %v152 = vpack.c.b16 %v132, %v128
  %v153 = vpack.c.b16 %v133, %v129
  %v154 = vpack.c.b16 %v134, %v130
  %v155 = vpack.c.b16 %v135, %v131
  %v156 = vpack.c.b16 %v136, %v136
  %v157 = vpack.c.b16 %v137, %v137
  %v158 = vpack.c.b16 %v138, %v138
  %v159 = vpack.c.b16 %v139, %v139
  %vm176 = vcmask 588800
  %v178 = vsel %vm176, %v83, 0
  %v181 = vsel %vm176, %v84, 0
  %v184 = vsel %vm176, %v85, 0
  %vm186 = vcmask 1043456
  %v188 = vsel %vm186, %v156, 0
  %v191 = vsel %vm186, %v157, 0
  %v194 = vsel %vm186, %v158, 0
  %v197 = vsel %vm186, %v159, 0
  %199 = vmatprep.subr.bf16.mxu0 0
  %200 = vmatpush1.bf16.msra.mxu0 0
  %201 = vmatprep.subr.bf16.mxu0 0
  %202 = vmatpush1.bf16.msra.mxu0 0
  %203 = vmatprep.subr.bf16.mxu0 0
  %204 = vmatpush1.bf16.msra.mxu0 0
  %205 = vmatprep.subr.bf16.mxu0 %v191
  %206 = vmatpush1.bf16.msra.mxu0 %v188
  %207 = vmatprep.subr.bf16.mxu0 %v153
  %208 = vmatpush1.bf16.msra.mxu0 %v152
  %209 = vmatprep.subr.bf16.mxu0 %v149
  %210 = vmatpush1.bf16.msra.mxu0 %v148
  %211 = vmatprep.subr.bf16.mxu0 %v145
  %212 = vmatpush1.bf16.msra.mxu0 %v144
  %213 = vmatprep.subr.bf16.mxu0 %v141
  %214 = vmatpush1.bf16.msra.mxu0 %v140
  %215 = vmatprep.subr.bf16.mxu0 0
  %216 = vmatpush2.bf16.msra.mxu0 0
  %217 = vmatprep.subr.bf16.mxu0 0
  %218 = vmatpush2.bf16.msra.mxu0 0
  %219 = vmatprep.subr.bf16.mxu0 0
  %220 = vmatpush2.bf16.msra.mxu0 0
  %221 = vmatprep.subr.bf16.mxu0 0
  %222 = vmatpush2.bf16.msra.mxu0 0
  %223 = vmatprep.subr.bf16.mxu0 0
  %224 = vmatpush2.bf16.msra.mxu0 0
  %225 = vmatprep.subr.bf16.mxu0 0
  %226 = vmatpush2.bf16.msra.mxu0 0
  %227 = vmatprep.subr.bf16.mxu0 0
  %228 = vmatpush2.bf16.msra.mxu0 0
  %229 = vmatprep.subr.bf16.mxu0 0
  %230 = vmatpush2.bf16.msra.mxu0 0
  %231 = vmatprep.mubr.bf16.mxu0 0
  %232 = vmatmul.mubr.bf16.gmra.mxu0 %v178
  %v233 = vpop.f32.mrf.mxu0
  %v234 = vadd.f32 %v51, %v233
  %v235 = vpop.f32.mrf.mxu0
  %v236 = vadd.f32 %v51, %v235
  %v237 = vpop.f32.mrf.mxu0
  %v238 = vadd.f32 %v56, %v237
  %v239 = vpop.f32.mrf.mxu0
  %v240 = vadd.f32 %v56, %v239
  %241 = vmatprep.mubr.bf16.mxu0 0
  %242 = vmatmul.mubr.bf16.gmra.mxu0 %v181
  %v243 = vpop.f32.mrf.mxu0
  %v244 = vadd.f32 %v61, %v243
  %v245 = vpop.f32.mrf.mxu0
  %v246 = vadd.f32 %v61, %v245
  %v247 = vpop.f32.mrf.mxu0
  %v248 = vadd.f32 %v66, %v247
  %v249 = vpop.f32.mrf.mxu0
  %v250 = vadd.f32 %v66, %v249
  %251 = vmatprep.mubr.bf16.mxu0 0
  %252 = vmatmul.mubr.bf16.gmra.mxu0 %v184
  %v253 = vpop.f32.mrf.mxu0
  %v254 = vadd.f32 %v71, %v253
  %v255 = vpop.f32.mrf.mxu0
  %v256 = vadd.f32 %v71, %v255
  %v257 = vpop.f32.mrf.mxu0
  %v258 = vpop.f32.mrf.mxu0
  %259 = vdwg.mxu0
  %260 = vmatprep.subr.bf16.mxu0 0
  %261 = vmatpush1.bf16.msra.mxu0 0
  %262 = vmatprep.subr.bf16.mxu0 0
  %263 = vmatpush1.bf16.msra.mxu0 0
  %264 = vmatprep.subr.bf16.mxu0 0
  %265 = vmatpush1.bf16.msra.mxu0 0
  %266 = vmatprep.subr.bf16.mxu0 %v197
  %267 = vmatpush1.bf16.msra.mxu0 %v194
  %268 = vmatprep.subr.bf16.mxu0 %v155
  %269 = vmatpush1.bf16.msra.mxu0 %v154
  %270 = vmatprep.subr.bf16.mxu0 %v151
  %271 = vmatpush1.bf16.msra.mxu0 %v150
  %272 = vmatprep.subr.bf16.mxu0 %v147
  %273 = vmatpush1.bf16.msra.mxu0 %v146
  %274 = vmatprep.subr.bf16.mxu0 %v143
  %275 = vmatpush1.bf16.msra.mxu0 %v142
  %276 = vmatprep.subr.bf16.mxu0 0
  %277 = vmatpush2.bf16.msra.mxu0 0
  %278 = vmatprep.subr.bf16.mxu0 0
  %279 = vmatpush2.bf16.msra.mxu0 0
  %280 = vmatprep.subr.bf16.mxu0 0
  %281 = vmatpush2.bf16.msra.mxu0 0
  %282 = vmatprep.subr.bf16.mxu0 0
  %283 = vmatpush2.bf16.msra.mxu0 0
  %284 = vmatprep.subr.bf16.mxu0 0
  %285 = vmatpush2.bf16.msra.mxu0 0
  %286 = vmatprep.subr.bf16.mxu0 0
  %287 = vmatpush2.bf16.msra.mxu0 0
  %288 = vmatprep.subr.bf16.mxu0 0
  %289 = vmatpush2.bf16.msra.mxu0 0
  %290 = vmatprep.subr.bf16.mxu0 0
  %291 = vmatpush2.bf16.msra.mxu0 0
  %292 = vmatprep.mubr.bf16.mxu0 0
  %293 = vmatmul.mubr.bf16.gmra.mxu0 %v178
  %v294 = vpop.f32.mrf.mxu0
  %v295 = vadd.f32 %v51, %v294
  %v296 = vpop.f32.mrf.mxu0
  %v297 = vadd.f32 %v51, %v296
  %v298 = vpop.f32.mrf.mxu0
  %v299 = vadd.f32 %v56, %v298
  %v300 = vpop.f32.mrf.mxu0
  %v301 = vadd.f32 %v56, %v300
  %302 = vmatprep.mubr.bf16.mxu0 0
  %303 = vmatmul.mubr.bf16.gmra.mxu0 %v181
  %v304 = vpop.f32.mrf.mxu0
  %v305 = vadd.f32 %v61, %v304
  %v306 = vpop.f32.mrf.mxu0
  %v307 = vadd.f32 %v61, %v306
  %v308 = vpop.f32.mrf.mxu0
  %v309 = vadd.f32 %v66, %v308
  %v310 = vpop.f32.mrf.mxu0
  %v311 = vadd.f32 %v66, %v310
  %312 = vmatprep.mubr.bf16.mxu0 0
  %313 = vmatmul.mubr.bf16.gmra.mxu0 %v184
  %v314 = vpop.f32.mrf.mxu0
  %v315 = vadd.f32 %v71, %v314
  %v316 = vpop.f32.mrf.mxu0
  %v317 = vadd.f32 %v71, %v316
  %v318 = vpop.f32.mrf.mxu0
  %v319 = vpop.f32.mrf.mxu0
  %320 = vdwg.mxu0
  %v321 = vtanh.pop %v234
  %v322 = vtanh.pop %v236
  %v323 = vtanh.pop %v295
  %v324 = vtanh.pop %v297
  %v325 = vmax.f32 %v234, 0.0
  %v326 = vmax.f32 %v236, 0.0
  %v327 = vmax.f32 %v295, 0.0
  %v328 = vmax.f32 %v297, 0.0
  %v329 = vmax.f32 %v238, 0.0
  %v330 = vmax.f32 %v240, 0.0
  %v331 = vmax.f32 %v299, 0.0
  %v332 = vmax.f32 %v301, 0.0
  %v333 = vmax.f32 %v244, 0.0
  %v334 = vmax.f32 %v246, 0.0
  %v335 = vmax.f32 %v305, 0.0
  %v336 = vmax.f32 %v307, 0.0
  %v337 = vmax.f32 %v248, 0.0
  %v338 = vmax.f32 %v250, 0.0
  %v339 = vmax.f32 %v309, 0.0
  %v340 = vmax.f32 %v311, 0.0
  %v341 = vmax.f32 %v254, 0.0
  %v342 = vmax.f32 %v256, 0.0
  %v343 = vmax.f32 %v315, 0.0
  %v344 = vmax.f32 %v317, 0.0
  %v345 = vld [vmem:[%s3] sm:$0xff]
  %v347 = vcombine.high %v345, %v345
  %v349 = vunpack.c.l.s4 1983009808
  %v350 = vunpack.c.0.s8 %v349
  %v351 = vlaneseq
  %v352 = vshrl.u32 %v351, 7
  %v353 = vsub.s32 %v350, %v352
  %v354 = vrot.slane %v345, %v353
  %v356 = vunpack.c.l.s4 1983009808
  %v357 = vunpack.c.0.s8 %v356
  %v358 = vlaneseq
  %v359 = vshrl.u32 %v358, 7
  %v360 = vsub.s32 %v357, %v359
  %v361 = vrot.slane %v347, %v360
  %v362 = vcombine.high %v354, %v354
  %v363 = vcombine.high %v361, %v361
  %v368 = vadd.f32 %v321, %v354
  %v369 = vadd.f32 %v322, %v362
  %v370 = vadd.f32 %v323, %v361
  %v371 = vadd.f32 %v324, %v363
  %v376 = vcombine.low %v368, %v369
  %v377 = vcombine.low %v370, %v371
  %v379 = vunpack.c.l.s4 1983009808
  %v380 = vunpack.c.0.s8 %v379
  %v381 = vlaneseq
  %v382 = vshrl.u32 %v381, 7
  %v383 = vsub.s32 %v380, %v382
  %v384 = vrot.slane %v376, %v383
  %v386 = vunpack.c.l.s4 1983009808
  %v387 = vunpack.c.0.s8 %v386
  %v388 = vlaneseq
  %v389 = vshrl.u32 %v388, 7
  %v390 = vsub.s32 %v387, %v389
  %v391 = vrot.slane %v377, %v390
  %v392 = vcombine.low %v384, %v391
  %394 = vst [vmem:[%s4] sm:$0xff] %v392
  %vm415 = vcmask 1045504
  %v416 = vrot.slane %v325, 2
  %v417 = vrot.slane %v329, 2
  %v418 = vsel %vm415, %v416, %v417
  %v419 = vrot.slane %v326, 2
  %v420 = vrot.slane %v330, 2
  %v421 = vsel %vm415, %v419, %v420
  %v422 = vrot.slane %v327, 2
  %v423 = vrot.slane %v331, 2
  %v424 = vsel %vm415, %v422, %v423
  %v425 = vrot.slane %v328, 2
  %v426 = vrot.slane %v332, 2
  %v427 = vsel %vm415, %v425, %v426
  %v428 = vrot.slane %v333, 2
  %v429 = vsel %vm415, %v417, %v428
  %v430 = vrot.slane %v334, 2
  %v431 = vsel %vm415, %v420, %v430
  %v432 = vrot.slane %v335, 2
  %v433 = vsel %vm415, %v423, %v432
  %v434 = vrot.slane %v336, 2
  %v435 = vsel %vm415, %v426, %v434
  %v436 = vrot.slane %v337, 2
  %v437 = vsel %vm415, %v428, %v436
  %v438 = vrot.slane %v338, 2
  %v439 = vsel %vm415, %v430, %v438
  %v440 = vrot.slane %v339, 2
  %v441 = vsel %vm415, %v432, %v440
  %v442 = vrot.slane %v340, 2
  %v443 = vsel %vm415, %v434, %v442
  %v444 = vrot.slane %v341, 2
  %v445 = vsel %vm415, %v436, %v444
  %v446 = vrot.slane %v342, 2
  %v447 = vsel %vm415, %v438, %v446
  %v448 = vrot.slane %v343, 2
  %v449 = vsel %vm415, %v440, %v448
  %v450 = vrot.slane %v344, 2
  %v451 = vsel %vm415, %v442, %v450
  %468 = vst [vmem:[%s5] sm:$0xff] %v418
  %469 = vst [vmem:[%s5 + $0x8] sm:$0xff] %v421
  %470 = vst [vmem:[%s5 + $0x10] sm:$0xff] %v424
  %471 = vst [vmem:[%s5 + $0x18] sm:$0xff] %v427
  %472 = vst [vmem:[%s5 + $0x20] sm:$0xff] %v429
  %473 = vst [vmem:[%s5 + $0x28] sm:$0xff] %v431
  %474 = vst [vmem:[%s5 + $0x30] sm:$0xff] %v433
  %475 = vst [vmem:[%s5 + $0x38] sm:$0xff] %v435
  %476 = vst [vmem:[%s5 + $0x40] sm:$0xff] %v437
  %477 = vst [vmem:[%s5 + $0x48] sm:$0xff] %v439
  %478 = vst [vmem:[%s5 + $0x50] sm:$0xff] %v441
  %479 = vst [vmem:[%s5 + $0x58] sm:$0xff] %v443
  %480 = vst [vmem:[%s5 + $0x60] sm:$0xff] %v445
  %481 = vst [vmem:[%s5 + $0x68] sm:$0xff] %v447
  %482 = vst [vmem:[%s5 + $0x70] sm:$0xff] %v449
  %483 = vst [vmem:[%s5 + $0x78] sm:$0xff] %v451
  // Predicated region
  $region18: #{temporal_vae_forward.21} parent=0 // pred_check
    _
  $region19: #{temporal_vae_forward.21} parent=0 // pred_check_branch
    %485 = sbr.rel (0) target = $region21
  $region20: #{temporal_vae_forward.21} parent=0 // pred_region
    _
  $region21: #{temporal_vae_forward.21} parent=0 // pred_fallthru
    _
  // Predicated region
  $region22: #{temporal_vae_forward.21} parent=0 // pred_check
    _
  $region23: #{temporal_vae_forward.21} parent=0 // pred_check_branch
    %487 = sbr.rel (0) target = $region25
  $region24: #{temporal_vae_forward.21} parent=0 // pred_region
    _
  $region25: #{temporal_vae_forward.21} parent=0 // pred_fallthru
    _
  // Predicated region
  $region26: #{temporal_vae_forward.21} parent=0 // pred_check
    _
  $region27: #{temporal_vae_forward.21} parent=0 // pred_check_branch
    %489 = sbr.rel (0) target = $region29
  $region28: #{temporal_vae_forward.21} parent=0 // pred_region
    _
  $region29: #{temporal_vae_forward.21} parent=0 // pred_fallthru
    _
  // Predicated region
  $region30: #{temporal_vae_forward.21} parent=0 // pred_check
    _
  $region31: #{temporal_vae_forward.21} parent=0 // pred_check_branch
    %491 = sbr.rel (0) target = $region33
  $region32: #{temporal_vae_forward.21} parent=0 // pred_region
    _
  $region33: #{temporal_vae_forward.21} parent=0 // pred_fallthru
    _

// kernel: temporal_vae_forward.22
$region0: #{temporal_vae_forward.22}
  #allocation0 [shape = 'u32[]', space=smem, size = 0x4, offset = 0x4, fixed_abs, tag = 'smem constant byte address 0x4 - core index']
  #allocation1 [shape = 'u32[144,128]{1,0:T(1,128)}', space=vmem, size = 0x12000, scoped, tag = 'internal scratch']
  %s0 = inlined_call_operand.vmem [shape: bf16[8,72], index: 0, kind: input, shape index: {}]
  %s1 = inlined_call_operand.vmem [shape: bf16[72,2048], index: 1, kind: input, shape index: {}]
  %s2 = inlined_call_operand.vmem [shape: f32[8,1], index: 2, kind: input, shape index: {}]
  %s3 = inlined_call_operand.vmem [shape: f32[8,2048], index: 3, kind: output, shape index: {}]
  %s4 = sld [smem:[#allocation0]]
  $region68: #{temporal_vae_forward.22} parent=0
    _
  %s6 = ssub.s32 1, %s4
  %s7 = scalar_select 0, %s6, %s4
  $region1: #{temporal_vae_forward.22} parent=0
    #allocation2 [shape = 'u8[294912]{0}', space=vmem, size = 0x48000, scoped, tag = 'input window, operand 1']
    loop: start=0, step=1, limit=4
    $region2: #{temporal_vae_forward.22} parent=1 // loop_pre_header
      _
    $region3: #{temporal_vae_forward.22} parent=1 // loop_header
      %s9 = sphi 0, %s13
      %p10 = scmp.ge.s32.totalorder %s9, 4
      %s17 = sphi 0, %s17
      %s19 = sphi 0, %s17
      %s20 = sphi 0, %s19
      %s34 = sphi 0, %s20
      %s40 = sphi 0, %s42
      %s43 = sphi 0, %s40
      %s44 = sphi 0, %s43
      %s60 = sphi 0, %s44
      %s64 = sphi 0, %s64
      %s66 = sphi 0, %s64
      %s67 = sphi 0, %s66
      %s81 = sphi 0, %s67
      %s87 = sphi 0, %s89
      %s90 = sphi 0, %s87
      %s91 = sphi 0, %s90
      %s107 = sphi 0, %s91
    $region4: #{temporal_vae_forward.22} parent=1 // loop_header_branch
      %12 = sbr.rel (%p10) target = $region8
    $region5: #{temporal_vae_forward.22} parent=1 // loop_body
      %s14 = ssub.s32 %s9, 1
      %s15 = ssub.s32 %s9, 2
      %s16 = sadd.s32 %s9, 1
      %s18 = sadd.s32 %s17, 1
      %p21 = scmp.eq.s32.totalorder %s9, 1
      %p22 = scmp.ne.s32.totalorder %s17, %s19
      %p23 = scmp.eq.s32.totalorder %s9, 0
      %p24 = por %p22, %p23
      %p25 = scmp.ne.s32.totalorder %s17, %s19
      %p26 = scmp.eq.s32.totalorder %s14, 1
      %p27 = por %p25, %p26
      %p28 = scmp.ne.s32.totalorder %s19, %s20
      %p29 = scmp.eq.s32.totalorder %s14, 0
      %p30 = por %p28, %p29
      %p31 = scmp.ne.s32.totalorder %s19, %s20
      %p32 = scmp.eq.s32.totalorder %s15, 1
      %p33 = por %p31, %p32
      %p35 = scmp.ne.s32.totalorder %s20, %s34
      %p36 = scmp.eq.s32.totalorder %s15, 0
      %p37 = por %p35, %p36
      %s38 = ssub.s32 %s9, %s16
      %p39 = scmp.eq.s32.totalorder %s38, 0
      %s41 = sadd.s32 %s40, 1
      %s42 = scalar_select %p39, %s40, %s41
      %p45 = pneg %p39
      %p46 = scmp.eq.s32.totalorder %s9, 1
      %p47 = por %p45, %p46
      %p48 = scmp.ne.s32.totalorder %s40, %s43
      %p49 = scmp.eq.s32.totalorder %s9, 0
      %p50 = por %p48, %p49
      %p51 = scmp.ne.s32.totalorder %s40, %s43
      %p52 = scmp.eq.s32.totalorder %s14, 1
      %p53 = por %p51, %p52
      %p54 = scmp.ne.s32.totalorder %s43, %s44
      %p55 = scmp.eq.s32.totalorder %s14, 0
      %p56 = por %p54, %p55
      %p57 = scmp.ne.s32.totalorder %s43, %s44
      %p58 = scmp.eq.s32.totalorder %s15, 1
      %p59 = por %p57, %p58
      %p61 = scmp.ne.s32.totalorder %s44, %s60
      %p62 = scmp.eq.s32.totalorder %s15, 0
      %p63 = por %p61, %p62
      %s65 = sadd.s32 %s64, 1
      %p68 = scmp.eq.s32.totalorder %s9, 1
      %p69 = scmp.ne.s32.totalorder %s64, %s66
      %p70 = scmp.eq.s32.totalorder %s9, 0
      %p71 = por %p69, %p70
      %p72 = scmp.ne.s32.totalorder %s64, %s66
      %p73 = scmp.eq.s32.totalorder %s14, 1
      %p74 = por %p72, %p73
      %p75 = scmp.ne.s32.totalorder %s66, %s67
      %p76 = scmp.eq.s32.totalorder %s14, 0
      %p77 = por %p75, %p76
      %p78 = scmp.ne.s32.totalorder %s66, %s67
      %p79 = scmp.eq.s32.totalorder %s15, 1
      %p80 = por %p78, %p79
      %p82 = scmp.ne.s32.totalorder %s67, %s81
      %p83 = scmp.eq.s32.totalorder %s15, 0
      %p84 = por %p82, %p83
      %s85 = ssub.s32 %s9, %s16
      %p86 = scmp.eq.s32.totalorder %s85, 0
      %s88 = sadd.s32 %s87, 1
      %s89 = scalar_select %p86, %s87, %s88
      %p92 = pneg %p86
      %p93 = scmp.eq.s32.totalorder %s9, 1
      %p94 = por %p92, %p93
      %p95 = scmp.ne.s32.totalorder %s87, %s90
      %p96 = scmp.eq.s32.totalorder %s9, 0
      %p97 = por %p95, %p96
      %p98 = scmp.ne.s32.totalorder %s87, %s90
      %p99 = scmp.eq.s32.totalorder %s14, 1
      %p100 = por %p98, %p99
      %p101 = scmp.ne.s32.totalorder %s90, %s91
      %p102 = scmp.eq.s32.totalorder %s14, 0
      %p103 = por %p101, %p102
      %p104 = scmp.ne.s32.totalorder %s90, %s91
      %p105 = scmp.eq.s32.totalorder %s15, 1
      %p106 = por %p104, %p105
      %p108 = scmp.ne.s32.totalorder %s91, %s107
      %p109 = scmp.eq.s32.totalorder %s15, 0
      %p110 = por %p108, %p109
      %p111 = scmp.le.s32.totalorder 1, %s9
      %p112 = scmp.lt.s32.totalorder %s9, 3
      %p113 = pnand %p111, %p112
      %p114 = pneg %p113
      // Predicated region
      $region9: #{temporal_vae_forward.22} parent=5 // pred_check
        _
      $region10: #{temporal_vae_forward.22} parent=5 // pred_check_branch
        %116 = sbr.rel (%p113) target = $region12
      $region11: #{temporal_vae_forward.22} parent=5 // pred_region
        %s117 = ssub.s32 %s9, 1
        // Predicated region
        $region13: #{temporal_vae_forward.22} parent=11 // pred_check
          %p118 = pneg %p30
        $region14: #{temporal_vae_forward.22} parent=11 // pred_check_branch
          %120 = sbr.rel (%p118) target = $region16
        $region15: #{temporal_vae_forward.22} parent=11 // pred_region
          _
        $region16: #{temporal_vae_forward.22} parent=11 // pred_fallthru
          _
        // Predicated region
        $region17: #{temporal_vae_forward.22} parent=11 // pred_check
          %p121 = pneg %p77
        $region18: #{temporal_vae_forward.22} parent=11 // pred_check_branch
          %123 = sbr.rel (%p121) target = $region20
        $region19: #{temporal_vae_forward.22} parent=11 // pred_region
          _
        $region20: #{temporal_vae_forward.22} parent=11 // pred_fallthru
          _
      $region12: #{temporal_vae_forward.22} parent=5 // pred_fallthru
        _
      %p124 = scmp.lt.s32.totalorder %s9, 2
      // Predicated region
      $region21: #{temporal_vae_forward.22} parent=5 // pred_check
        %p125 = pneg %p124
      $region22: #{temporal_vae_forward.22} parent=5 // pred_check_branch
        %127 = sbr.rel (%p125) target = $region24
      $region23: #{temporal_vae_forward.22} parent=5 // pred_region
        // Predicated region
        $region25: #{temporal_vae_forward.22} parent=23 // pred_check
          %p128 = pneg %p50
        $region26: #{temporal_vae_forward.22} parent=23 // pred_check_branch
          %130 = sbr.rel (%p128) target = $region28
        $region27: #{temporal_vae_forward.22} parent=23 // pred_region
          %s131 = sand.u32 %s40, 1
          %s132 = sand.u32 %s40, 1
          %s133 = smul.addr %s132, 288
          %s134 = scalar_lea.vmem [#allocation2], %s133
          %s135 = smul.u32 8, %s9
          %s136 = smul.addr %s135, 4
          %s137 = scalar_lea.vmem %s1, %s136
          // Predicated region
          $region29: #{temporal_vae_forward.22} parent=27 // pred_check
            _
          $region30: #{temporal_vae_forward.22} parent=27 // pred_check_branch
            %139 = sbr.rel (0) target = $region32
          $region31: #{temporal_vae_forward.22} parent=27 // pred_region
            // Predicated region
            $region33: #{temporal_vae_forward.22} parent=31 // pred_check
              _
            $region34: #{temporal_vae_forward.22} parent=31 // pred_check_branch
              %141 = sbr.rel (0) target = $region36
            $region35: #{temporal_vae_forward.22} parent=31 // pred_region
              loop: start=0, step=1, limit=1
              $region37: #{temporal_vae_forward.22} parent=35 // loop_pre_header
                _
              $region38: #{temporal_vae_forward.22} parent=35 // loop_header
                %s143 = sphi 0, %s147
                %p144 = scmp.ge.s32.totalorder %s143, 1
                %s148 = sphi %s137, %s137
                %s149 = sphi %s134, %s134
              $region39: #{temporal_vae_forward.22} parent=35 // loop_header_branch
                %146 = sbr.rel (%p144) target = $region43
              $region40: #{temporal_vae_forward.22} parent=35 // loop_body
                %v150 = vld [vmem:[%s148] sm:$0xff]
                %151 = vst [vmem:[%s149] sm:$0xff] %v150
                %v152 = vld [vmem:[%s148 + $0x8] sm:$0xff]
                %153 = vst [vmem:[%s149 + $0x8] sm:$0xff] %v152
                %v154 = vld [vmem:[%s148 + $0x10] sm:$0xff]
                %155 = vst [vmem:[%s149 + $0x10] sm:$0xff] %v154
                %v156 = vld [vmem:[%s148 + $0x18] sm:$0xff]
                %157 = vst [vmem:[%s149 + $0x18] sm:$0xff] %v156
                %v158 = vld [vmem:[%s148 + $0x40] sm:$0xff]
                %159 = vst [vmem:[%s149 + $0x20] sm:$0xff] %v158
                %v160 = vld [vmem:[%s148 + $0x48] sm:$0xff]
                %161 = vst [vmem:[%s149 + $0x28] sm:$0xff] %v160
                %v162 = vld [vmem:[%s148 + $0x50] sm:$0xff]
                %163 = vst [vmem:[%s149 + $0x30] sm:$0xff] %v162
                %v164 = vld [vmem:[%s148 + $0x58] sm:$0xff]
                %165 = vst [vmem:[%s149 + $0x38] sm:$0xff] %v164
                %v166 = vld [vmem:[%s148 + $0x80] sm:$0xff]
                %167 = vst [vmem:[%s149 + $0x40] sm:$0xff] %v166
                %v168 = vld [vmem:[%s148 + $0x88] sm:$0xff]
                %169 = vst [vmem:[%s149 + $0x48] sm:$0xff] %v168
                %v170 = vld [vmem:[%s148 + $0x90] sm:$0xff]
                %171 = vst [vmem:[%s149 + $0x50] sm:$0xff] %v170
                %v172 = vld [vmem:[%s148 + $0x98] sm:$0xff]
                %173 = vst [vmem:[%s149 + $0x58] sm:$0xff] %v172
                %v174 = vld [vmem:[%s148 + $0xc0] sm:$0xff]
                %175 = vst [vmem:[%s149 + $0x60] sm:$0xff] %v174
                %v176 = vld [vmem:[%s148 + $0xc8] sm:$0xff]
                %177 = vst [vmem:[%s149 + $0x68] sm:$0xff] %v176
                %v178 = vld [vmem:[%s148 + $0xd0] sm:$0xff]
                %179 = vst [vmem:[%s149 + $0x70] sm:$0xff] %v178
                %v180 = vld [vmem:[%s148 + $0xd8] sm:$0xff]
                %181 = vst [vmem:[%s149 + $0x78] sm:$0xff] %v180
                %v182 = vld [vmem:[%s148 + $0x100] sm:$0xff]
                %183 = vst [vmem:[%s149 + $0x80] sm:$0xff] %v182
                %v184 = vld [vmem:[%s148 + $0x108] sm:$0xff]
                %185 = vst [vmem:[%s149 + $0x88] sm:$0xff] %v184
                %v186 = vld [vmem:[%s148 + $0x110] sm:$0xff]
                %187 = vst [vmem:[%s149 + $0x90] sm:$0xff] %v186
                %v188 = vld [vmem:[%s148 + $0x118] sm:$0xff]
                %189 = vst [vmem:[%s149 + $0x98] sm:$0xff] %v188
                %v190 = vld [vmem:[%s148 + $0x140] sm:$0xff]
                %191 = vst [vmem:[%s149 + $0xa0] sm:$0xff] %v190
                %v192 = vld [vmem:[%s148 + $0x148] sm:$0xff]
                %193 = vst [vmem:[%s149 + $0xa8] sm:$0xff] %v192
                %v194 = vld [vmem:[%s148 + $0x150] sm:$0xff]
                %195 = vst [vmem:[%s149 + $0xb0] sm:$0xff] %v194
                %v196 = vld [vmem:[%s148 + $0x158] sm:$0xff]
                %197 = vst [vmem:[%s149 + $0xb8] sm:$0xff] %v196
                %v198 = vld [vmem:[%s148 + $0x180] sm:$0xff]
                %199 = vst [vmem:[%s149 + $0xc0] sm:$0xff] %v198
                %v200 = vld [vmem:[%s148 + $0x188] sm:$0xff]
                %201 = vst [vmem:[%s149 + $0xc8] sm:$0xff] %v200
                %v202 = vld [vmem:[%s148 + $0x190] sm:$0xff]
                %203 = vst [vmem:[%s149 + $0xd0] sm:$0xff] %v202
                %v204 = vld [vmem:[%s148 + $0x198] sm:$0xff]
                %205 = vst [vmem:[%s149 + $0xd8] sm:$0xff] %v204
                %v206 = vld [vmem:[%s148 + $0x1c0] sm:$0xff]
                %207 = vst [vmem:[%s149 + $0xe0] sm:$0xff] %v206
                %v208 = vld [vmem:[%s148 + $0x1c8] sm:$0xff]
                %209 = vst [vmem:[%s149 + $0xe8] sm:$0xff] %v208
                %v210 = vld [vmem:[%s148 + $0x1d0] sm:$0xff]
                %211 = vst [vmem:[%s149 + $0xf0] sm:$0xff] %v210
                %v212 = vld [vmem:[%s148 + $0x1d8] sm:$0xff]
                %213 = vst [vmem:[%s149 + $0xf8] sm:$0xff] %v212
                %v214 = vld [vmem:[%s148 + $0x200] sm:$0xff]
                %215 = vst [vmem:[%s149 + $0x100] sm:$0xff] %v214
                %v216 = vld [vmem:[%s148 + $0x208] sm:$0xff]
                %217 = vst [vmem:[%s149 + $0x108] sm:$0xff] %v216
                %v218 = vld [vmem:[%s148 + $0x210] sm:$0xff]
                %219 = vst [vmem:[%s149 + $0x110] sm:$0xff] %v218
                %v220 = vld [vmem:[%s148 + $0x218] sm:$0xff]
                %221 = vst [vmem:[%s149 + $0x118] sm:$0xff] %v220
              $region41: #{temporal_vae_forward.22} parent=35 // loop_footer
                %s147 = sadd.s32 1, %s143
              $region42: #{temporal_vae_forward.22} parent=35 // loop_footer_branch
                %142 = sbr.rel target = $region38
              $region43: #{temporal_vae_forward.22} parent=35 // loop_exit
                _
            $region36: #{temporal_vae_forward.22} parent=31 // pred_fallthru
              _
            // Predicated region
            $region44: #{temporal_vae_forward.22} parent=31 // pred_check
              _
            $region45: #{temporal_vae_forward.22} parent=31 // pred_check_branch
              %223 = sbr.rel target = $region47
            $region46: #{temporal_vae_forward.22} parent=31 // pred_region
              _
            $region47: #{temporal_vae_forward.22} parent=31 // pred_fallthru
              _
          $region32: #{temporal_vae_forward.22} parent=27 // pred_fallthru
            _
          %224 = vnop
        $region28: #{temporal_vae_forward.22} parent=23 // pred_fallthru
          _
      $region24: #{temporal_vae_forward.22} parent=5 // pred_fallthru
        _
      %p225 = scmp.le.s32.totalorder 1, %s9
      %p226 = scmp.lt.s32.totalorder %s9, 3
      %p227 = pnand %p225, %p226
      %p228 = pneg %p227
      // Predicated region
      $region48: #{temporal_vae_forward.22} parent=5 // pred_check
        _
      $region49: #{temporal_vae_forward.22} parent=5 // pred_check_branch
        %230 = sbr.rel (%p227) target = $region51
      $region50: #{temporal_vae_forward.22} parent=5 // pred_region
        %s231 = ssub.s32 %s9, 1
        %s232 = sand.u32 %s43, 1
        %s233 = sand.u32 %s43, 1
        %s234 = smul.addr %s233, 288
        %s235 = scalar_lea.vmem [#allocation2], %s234
        // Predicated region
        $region52: #{temporal_vae_forward.22} parent=50 // pred_check
          %p236 = pneg %p56
        $region53: #{temporal_vae_forward.22} parent=50 // pred_check_branch
          %238 = sbr.rel (%p236) target = $region55
        $region54: #{temporal_vae_forward.22} parent=50 // pred_region
          _
        $region55: #{temporal_vae_forward.22} parent=50 // pred_fallthru
          _
        %p239 = pneg %p30
        %p240 = pneg %p27
        %s241 = sand.u32 %s43, 1
        %s242 = sand.u32 %s43, 1
        %s243 = smul.addr %s242, 288
        %s244 = scalar_lea.vmem [#allocation2], %s243
        %p245 = pneg %p56
        %p246 = pneg %p53
        %p247 = pneg %p77
        %p248 = pneg %p74
        %p249 = pneg %p103
        %p250 = pneg %p100
        %s251 = smul.u32 8, %s14
        %p252 = scmp.lt.s32.totalorder %s251, 15
        %s253 = scalar_select %p252, %s251, 15
        %s254 = smul.addr %s253, 8
        %s255 = scalar_lea.vmem %s3, %s254
        %s256 = smul.u32 8, %s14
        %s257 = smul.u32 8, %s14
        %p258 = scmp.lt.s32.totalorder %s257, 15
        %s259 = scalar_select %p258, %s257, 15
        %s260 = smul.addr %s259, 8
        %s261 = scalar_lea.vmem %s3, %s260
        %s262 = smul.u32 8, %s14
        %v264 = vld [vmem:[%s0] sm:$0xf]
        %v265 = vld [vmem:[%s235] sm:$0xff]
        %v266 = vld [vmem:[%s235 + $0x8] sm:$0xff]
        %v267 = vld [vmem:[%s235 + $0x10] sm:$0xff]
        %v268 = vld [vmem:[%s235 + $0x18] sm:$0xff]
        %v269 = vld [vmem:[%s235 + $0x20] sm:$0xff]
        %v270 = vld [vmem:[%s235 + $0x28] sm:$0xff]
        %v271 = vld [vmem:[%s235 + $0x30] sm:$0xff]
        %v272 = vld [vmem:[%s235 + $0x38] sm:$0xff]
        %v273 = vld [vmem:[%s235 + $0x40] sm:$0xff]
        %v274 = vld [vmem:[%s235 + $0x48] sm:$0xff]
        %v275 = vld [vmem:[%s235 + $0x50] sm:$0xff]
        %v276 = vld [vmem:[%s235 + $0x58] sm:$0xff]
        %v277 = vld [vmem:[%s235 + $0x60] sm:$0xff]
        %v278 = vld [vmem:[%s235 + $0x68] sm:$0xff]
        %v279 = vld [vmem:[%s235 + $0x70] sm:$0xff]
        %v280 = vld [vmem:[%s235 + $0x78] sm:$0xff]
        %v281 = vld [vmem:[%s235 + $0x80] sm:$0xff]
        %v282 = vld [vmem:[%s235 + $0x88] sm:$0xff]
        %v283 = vld [vmem:[%s235 + $0x90] sm:$0xff]
        %v284 = vld [vmem:[%s235 + $0x98] sm:$0xff]
        %v285 = vld [vmem:[%s235 + $0xa0] sm:$0xff]
        %v286 = vld [vmem:[%s235 + $0xa8] sm:$0xff]
        %v287 = vld [vmem:[%s235 + $0xb0] sm:$0xff]
        %v288 = vld [vmem:[%s235 + $0xb8] sm:$0xff]
        %v289 = vld [vmem:[%s235 + $0xc0] sm:$0xff]
        %v290 = vld [vmem:[%s235 + $0xc8] sm:$0xff]
        %v291 = vld [vmem:[%s235 + $0xd0] sm:$0xff]
        %v292 = vld [vmem:[%s235 + $0xd8] sm:$0xff]
        %v293 = vld [vmem:[%s235 + $0xe0] sm:$0xff]
        %v294 = vld [vmem:[%s235 + $0xe8] sm:$0xff]
        %v295 = vld [vmem:[%s235 + $0xf0] sm:$0xff]
        %v296 = vld [vmem:[%s235 + $0xf8] sm:$0xff]
        %v297 = vld [vmem:[%s235 + $0x100] sm:$0xff]
        %v298 = vld [vmem:[%s235 + $0x108] sm:$0xff]
        %v299 = vld [vmem:[%s235 + $0x110] sm:$0xff]
        %v300 = vld [vmem:[%s235 + $0x118] sm:$0xff]
        %v301 = vld [vmem:[%s2] sm:$0xff]
        %303 = vset.pattern.permute.xlu0 0
        %304 = vperm.xlu0 %303, %v301
        %v305 = vpop.permute.xlu0 %304
        %v343 = vunpack.c.l.b16 %v265
        %v344 = vunpack.c.h.b16 %v265
        %v345 = vunpack.c.l.b16 %v266
        %v346 = vunpack.c.h.b16 %v266
        %v347 = vunpack.c.l.b16 %v267
        %v348 = vunpack.c.h.b16 %v267
        %v349 = vunpack.c.l.b16 %v268
        %v350 = vunpack.c.h.b16 %v268
        %v351 = vunpack.c.l.b16 %v269
        %v352 = vunpack.c.h.b16 %v269
        %v353 = vunpack.c.l.b16 %v270
        %v354 = vunpack.c.h.b16 %v270
        %v355 = vunpack.c.l.b16 %v271
        %v356 = vunpack.c.h.b16 %v271
        %v357 = vunpack.c.l.b16 %v272
        %v358 = vunpack.c.h.b16 %v272
        %v359 = vunpack.c.l.b16 %v273
        %v360 = vunpack.c.h.b16 %v273
        %v361 = vunpack.c.l.b16 %v274
        %v362 = vunpack.c.h.b16 %v274
        %v363 = vunpack.c.l.b16 %v275
        %v364 = vunpack.c.h.b16 %v275
        %v365 = vunpack.c.l.b16 %v276
        %v366 = vunpack.c.h.b16 %v276
        %v367 = vunpack.c.l.b16 %v277
        %v368 = vunpack.c.h.b16 %v277
        %v369 = vunpack.c.l.b16 %v278
        %v370 = vunpack.c.h.b16 %v278
        %v371 = vunpack.c.l.b16 %v279
        %v372 = vunpack.c.h.b16 %v279
        %v373 = vunpack.c.l.b16 %v280
        %v374 = vunpack.c.h.b16 %v280
        %v375 = vunpack.c.l.b16 %v281
        %v376 = vunpack.c.h.b16 %v281
        %v377 = vunpack.c.l.b16 %v282
        %v378 = vunpack.c.h.b16 %v282
        %v379 = vunpack.c.l.b16 %v283
        %v380 = vunpack.c.h.b16 %v283
        %v381 = vunpack.c.l.b16 %v284
        %v382 = vunpack.c.h.b16 %v284
        %v383 = vunpack.c.l.b16 %v285
        %v384 = vunpack.c.h.b16 %v285
        %v385 = vunpack.c.l.b16 %v286
        %v386 = vunpack.c.h.b16 %v286
        %v387 = vunpack.c.l.b16 %v287
        %v388 = vunpack.c.h.b16 %v287
        %v389 = vunpack.c.l.b16 %v288
        %v390 = vunpack.c.h.b16 %v288
        %v391 = vunpack.c.l.b16 %v289
        %v392 = vunpack.c.h.b16 %v289
        %v393 = vunpack.c.l.b16 %v290
        %v394 = vunpack.c.h.b16 %v290
        %v395 = vunpack.c.l.b16 %v291
        %v396 = vunpack.c.h.b16 %v291
        %v397 = vunpack.c.l.b16 %v292
        %v398 = vunpack.c.h.b16 %v292
        %v399 = vunpack.c.l.b16 %v293
        %v400 = vunpack.c.h.b16 %v293
        %v401 = vunpack.c.l.b16 %v294
        %v402 = vunpack.c.h.b16 %v294
        %v403 = vunpack.c.l.b16 %v295
        %v404 = vunpack.c.h.b16 %v295
        %v405 = vunpack.c.l.b16 %v296
        %v406 = vunpack.c.h.b16 %v296
        %v407 = vunpack.c.l.b16 %v297
        %v408 = vunpack.c.h.b16 %v297
        %v409 = vunpack.c.l.b16 %v298
        %v410 = vunpack.c.h.b16 %v298
        %v411 = vunpack.c.l.b16 %v299
        %v412 = vunpack.c.h.b16 %v299
        %v413 = vunpack.c.l.b16 %v300
        %v414 = vunpack.c.h.b16 %v300
        %v415 = vpack.c.b16 %v351, %v343
        %v416 = vpack.c.b16 %v352, %v344
        %v417 = vpack.c.b16 %v353, %v345
        %v418 = vpack.c.b16 %v354, %v346
        %v419 = vpack.c.b16 %v355, %v347
        %v420 = vpack.c.b16 %v356, %v348
        %v421 = vpack.c.b16 %v357, %v349
        %v422 = vpack.c.b16 %v358, %v350
        %v423 = vpack.c.b16 %v367, %v359
        %v424 = vpack.c.b16 %v368, %v360
        %v425 = vpack.c.b16 %v369, %v361
        %v426 = vpack.c.b16 %v370, %v362
        %v427 = vpack.c.b16 %v371, %v363
        %v428 = vpack.c.b16 %v372, %v364
        %v429 = vpack.c.b16 %v373, %v365
        %v430 = vpack.c.b16 %v374, %v366
        %v431 = vpack.c.b16 %v383, %v375
        %v432 = vpack.c.b16 %v384, %v376
        %v433 = vpack.c.b16 %v385, %v377
        %v434 = vpack.c.b16 %v386, %v378
        %v435 = vpack.c.b16 %v387, %v379
        %v436 = vpack.c.b16 %v388, %v380
        %v437 = vpack.c.b16 %v389, %v381
        %v438 = vpack.c.b16 %v390, %v382
        %v439 = vpack.c.b16 %v399, %v391
        %v440 = vpack.c.b16 %v400, %v392
        %v441 = vpack.c.b16 %v401, %v393
        %v442 = vpack.c.b16 %v402, %v394
        %v443 = vpack.c.b16 %v403, %v395
        %v444 = vpack.c.b16 %v404, %v396
        %v445 = vpack.c.b16 %v405, %v397
        %v446 = vpack.c.b16 %v406, %v398
        %v447 = vpack.c.b16 %v407, %v407
        %v448 = vpack.c.b16 %v408, %v408
        %v449 = vpack.c.b16 %v409, %v409
        %v450 = vpack.c.b16 %v410, %v410
        %v451 = vpack.c.b16 %v411, %v411
        %v452 = vpack.c.b16 %v412, %v412
        %v453 = vpack.c.b16 %v413, %v413
        %v454 = vpack.c.b16 %v414, %v414
        %vm487 = vcmask 588800
        %v489 = vsel %vm487, %v264, 0
        %vm491 = vcmask 1043456
        %v493 = vsel %vm491, %v447, 0
        %v496 = vsel %vm491, %v448, 0
        %v499 = vsel %vm491, %v449, 0
        %v502 = vsel %vm491, %v450, 0
        %v505 = vsel %vm491, %v451, 0
        %v508 = vsel %vm491, %v452, 0
        %v511 = vsel %vm491, %v453, 0
        %v514 = vsel %vm491, %v454, 0
        %516 = vmatprep.subr.bf16.mxu0 0
        %517 = vmatpush1.bf16.msra.mxu0 0
        %518 = vmatprep.subr.bf16.mxu0 0
        %519 = vmatpush1.bf16.msra.mxu0 0
        %520 = vmatprep.subr.bf16.mxu0 0
        %521 = vmatpush1.bf16.msra.mxu0 0
        %522 = vmatprep.subr.bf16.mxu0 %v496
        %523 = vmatpush1.bf16.msra.mxu0 %v493
        %524 = vmatprep.subr.bf16.mxu0 %v440
        %525 = vmatpush1.bf16.msra.mxu0 %v439
        %526 = vmatprep.subr.bf16.mxu0 %v432
        %527 = vmatpush1.bf16.msra.mxu0 %v431
        %528 = vmatprep.subr.bf16.mxu0 %v424
        %529 = vmatpush1.bf16.msra.mxu0 %v423
        %530 = vmatprep.subr.bf16.mxu0 %v416
        %531 = vmatpush1.bf16.msra.mxu0 %v415
        %532 = vmatprep.subr.bf16.mxu0 0
        %533 = vmatpush2.bf16.msra.mxu0 0
        %534 = vmatprep.subr.bf16.mxu0 0
        %535 = vmatpush2.bf16.msra.mxu0 0
        %536 = vmatprep.subr.bf16.mxu0 0
        %537 = vmatpush2.bf16.msra.mxu0 0
        %538 = vmatprep.subr.bf16.mxu0 0
        %539 = vmatpush2.bf16.msra.mxu0 0
        %540 = vmatprep.subr.bf16.mxu0 0
        %541 = vmatpush2.bf16.msra.mxu0 0
        %542 = vmatprep.subr.bf16.mxu0 0
        %543 = vmatpush2.bf16.msra.mxu0 0
        %544 = vmatprep.subr.bf16.mxu0 0
        %545 = vmatpush2.bf16.msra.mxu0 0
        %546 = vmatprep.subr.bf16.mxu0 0
        %547 = vmatpush2.bf16.msra.mxu0 0
        %548 = vmatprep.mubr.bf16.mxu0 0
        %549 = vmatmul.mubr.bf16.gmra.mxu0 %v489
        %v550 = vpop.f32.mrf.mxu0
        %v551 = vadd.f32 %v305, %v550
        %v552 = vpop.f32.mrf.mxu0
        %v553 = vadd.f32 %v305, %v552
        %v554 = vpop.f32.mrf.mxu0
        %v555 = vpop.f32.mrf.mxu0
        %556 = vdwg.mxu0
        %557 = vmatprep.subr.bf16.mxu0 0
        %558 = vmatpush1.bf16.msra.mxu0 0
        %559 = vmatprep.subr.bf16.mxu0 0
        %560 = vmatpush1.bf16.msra.mxu0 0
        %561 = vmatprep.subr.bf16.mxu0 0
        %562 = vmatpush1.bf16.msra.mxu0 0
        %563 = vmatprep.subr.bf16.mxu0 %v502
        %564 = vmatpush1.bf16.msra.mxu0 %v499
        %565 = vmatprep.subr.bf16.mxu0 %v442
        %566 = vmatpush1.bf16.msra.mxu0 %v441
        %567 = vmatprep.subr.bf16.mxu0 %v434
        %568 = vmatpush1.bf16.msra.mxu0 %v433
        %569 = vmatprep.subr.bf16.mxu0 %v426
        %570 = vmatpush1.bf16.msra.mxu0 %v425
        %571 = vmatprep.subr.bf16.mxu0 %v418
        %572 = vmatpush1.bf16.msra.mxu0 %v417
        %573 = vmatprep.subr.bf16.mxu0 0
        %574 = vmatpush2.bf16.msra.mxu0 0
        %575 = vmatprep.subr.bf16.mxu0 0
        %576 = vmatpush2.bf16.msra.mxu0 0
        %577 = vmatprep.subr.bf16.mxu0 0
        %578 = vmatpush2.bf16.msra.mxu0 0
        %579 = vmatprep.subr.bf16.mxu0 0
        %580 = vmatpush2.bf16.msra.mxu0 0
        %581 = vmatprep.subr.bf16.mxu0 0
        %582 = vmatpush2.bf16.msra.mxu0 0
        %583 = vmatprep.subr.bf16.mxu0 0
        %584 = vmatpush2.bf16.msra.mxu0 0
        %585 = vmatprep.subr.bf16.mxu0 0
        %586 = vmatpush2.bf16.msra.mxu0 0
        %587 = vmatprep.subr.bf16.mxu0 0
        %588 = vmatpush2.bf16.msra.mxu0 0
        %589 = vmatprep.mubr.bf16.mxu0 0
        %590 = vmatmul.mubr.bf16.gmra.mxu0 %v489
        %v591 = vpop.f32.mrf.mxu0
        %v592 = vadd.f32 %v305, %v591
        %v593 = vpop.f32.mrf.mxu0
        %v594 = vadd.f32 %v305, %v593
        %v595 = vpop.f32.mrf.mxu0
        %v596 = vpop.f32.mrf.mxu0
        %597 = vdwg.mxu0
        %598 = vmatprep.subr.bf16.mxu0 0
        %599 = vmatpush1.bf16.msra.mxu0 0
        %600 = vmatprep.subr.bf16.mxu0 0
        %601 = vmatpush1.bf16.msra.mxu0 0
        %602 = vmatprep.subr.bf16.mxu0 0
        %603 = vmatpush1.bf16.msra.mxu0 0
        %604 = vmatprep.subr.bf16.mxu0 %v508
        %605 = vmatpush1.bf16.msra.mxu0 %v505
        %606 = vmatprep.subr.bf16.mxu0 %v444
        %607 = vmatpush1.bf16.msra.mxu0 %v443
        %608 = vmatprep.subr.bf16.mxu0 %v436
        %609 = vmatpush1.bf16.msra.mxu0 %v435
        %610 = vmatprep.subr.bf16.mxu0 %v428
        %611 = vmatpush1.bf16.msra.mxu0 %v427
        %612 = vmatprep.subr.bf16.mxu0 %v420
        %613 = vmatpush1.bf16.msra.mxu0 %v419
        %614 = vmatprep.subr.bf16.mxu0 0
        %615 = vmatpush2.bf16.msra.mxu0 0
        %616 = vmatprep.subr.bf16.mxu0 0
        %617 = vmatpush2.bf16.msra.mxu0 0
        %618 = vmatprep.subr.bf16.mxu0 0
        %619 = vmatpush2.bf16.msra.mxu0 0
        %620 = vmatprep.subr.bf16.mxu0 0
        %621 = vmatpush2.bf16.msra.mxu0 0
        %622 = vmatprep.subr.bf16.mxu0 0
        %623 = vmatpush2.bf16.msra.mxu0 0
        %624 = vmatprep.subr.bf16.mxu0 0
        %625 = vmatpush2.bf16.msra.mxu0 0
        %626 = vmatprep.subr.bf16.mxu0 0
        %627 = vmatpush2.bf16.msra.mxu0 0
        %628 = vmatprep.subr.bf16.mxu0 0
        %629 = vmatpush2.bf16.msra.mxu0 0
        %630 = vmatprep.mubr.bf16.mxu0 0
        %631 = vmatmul.mubr.bf16.gmra.mxu0 %v489
        %v632 = vpop.f32.mrf.mxu0
        %v633 = vadd.f32 %v305, %v632
        %v634 = vpop.f32.mrf.mxu0
        %v635 = vadd.f32 %v305, %v634
        %v636 = vpop.f32.mrf.mxu0
        %v637 = vpop.f32.mrf.mxu0
        %638 = vdwg.mxu0
        %639 = vmatprep.subr.bf16.mxu0 0
        %640 = vmatpush1.bf16.msra.mxu0 0
        %641 = vmatprep.subr.bf16.mxu0 0
        %642 = vmatpush1.bf16.msra.mxu0 0
        %643 = vmatprep.subr.bf16.mxu0 0
        %644 = vmatpush1.bf16.msra.mxu0 0
        %645 = vmatprep.subr.bf16.mxu0 %v514
        %646 = vmatpush1.bf16.msra.mxu0 %v511
        %647 = vmatprep.subr.bf16.mxu0 %v446
        %648 = vmatpush1.bf16.msra.mxu0 %v445
        %649 = vmatprep.subr.bf16.mxu0 %v438
        %650 = vmatpush1.bf16.msra.mxu0 %v437
        %651 = vmatprep.subr.bf16.mxu0 %v430
        %652 = vmatpush1.bf16.msra.mxu0 %v429
        %653 = vmatprep.subr.bf16.mxu0 %v422
        %654 = vmatpush1.bf16.msra.mxu0 %v421
        %655 = vmatprep.subr.bf16.mxu0 0
        %656 = vmatpush2.bf16.msra.mxu0 0
        %657 = vmatprep.subr.bf16.mxu0 0
        %658 = vmatpush2.bf16.msra.mxu0 0
        %659 = vmatprep.subr.bf16.mxu0 0
        %660 = vmatpush2.bf16.msra.mxu0 0
        %661 = vmatprep.subr.bf16.mxu0 0
        %662 = vmatpush2.bf16.msra.mxu0 0
        %663 = vmatprep.subr.bf16.mxu0 0
        %664 = vmatpush2.bf16.msra.mxu0 0
        %665 = vmatprep.subr.bf16.mxu0 0
        %666 = vmatpush2.bf16.msra.mxu0 0
        %667 = vmatprep.subr.bf16.mxu0 0
        %668 = vmatpush2.bf16.msra.mxu0 0
        %669 = vmatprep.subr.bf16.mxu0 0
        %670 = vmatpush2.bf16.msra.mxu0 0
        %671 = vmatprep.mubr.bf16.mxu0 0
        %672 = vmatmul.mubr.bf16.gmra.mxu0 %v489
        %v673 = vpop.f32.mrf.mxu0
        %v674 = vadd.f32 %v305, %v673
        %v675 = vpop.f32.mrf.mxu0
        %v676 = vadd.f32 %v305, %v675
        %v677 = vpop.f32.mrf.mxu0
        %v678 = vpop.f32.mrf.mxu0
        %679 = vdwg.mxu0
        %v680 = vmax.f32 %v551, 0.0
        %v681 = vmax.f32 %v553, 0.0
        %v682 = vmax.f32 %v592, 0.0
        %v683 = vmax.f32 %v594, 0.0
        %v684 = vmax.f32 %v633, 0.0
        %v685 = vmax.f32 %v635, 0.0
        %v686 = vmax.f32 %v674, 0.0
        %v687 = vmax.f32 %v676, 0.0
        %688 = vst [vmem:[%s261] sm:$0xff] %v680
        %689 = vst [vmem:[%s261 + $0x8] sm:$0xff] %v681
        %690 = vst [vmem:[%s261 + $0x10] sm:$0xff] %v682
        %691 = vst [vmem:[%s261 + $0x18] sm:$0xff] %v683
        %692 = vst [vmem:[%s261 + $0x20] sm:$0xff] %v684
        %693 = vst [vmem:[%s261 + $0x28] sm:$0xff] %v685
        %694 = vst [vmem:[%s261 + $0x30] sm:$0xff] %v686
        %695 = vst [vmem:[%s261 + $0x38] sm:$0xff] %v687
        %s696 = smul.u32 8, %s14
        %p697 = scmp.lt.s32.totalorder %s696, 15
        %s698 = scalar_select %p697, %s696, 15
        %s699 = smul.addr %s698, 8
        %s700 = scalar_lea.vmem %s3, %s699
        // Predicated region
        $region56: #{temporal_vae_forward.22} parent=50 // pred_check
          %p701 = pneg %p100
        $region57: #{temporal_vae_forward.22} parent=50 // pred_check_branch
          %703 = sbr.rel (%p701) target = $region59
        $region58: #{temporal_vae_forward.22} parent=50 // pred_region
          %s704 = smul.u32 8, %s14
        $region59: #{temporal_vae_forward.22} parent=50 // pred_fallthru
          _
      $region51: #{temporal_vae_forward.22} parent=5 // pred_fallthru
        _
      %p705 = scmp.le.s32.totalorder 2, %s9
      // Predicated region
      $region60: #{temporal_vae_forward.22} parent=5 // pred_check
        %p706 = pneg %p705
      $region61: #{temporal_vae_forward.22} parent=5 // pred_check_branch
        %708 = sbr.rel (%p706) target = $region63
      $region62: #{temporal_vae_forward.22} parent=5 // pred_region
        %s709 = ssub.s32 %s9, 2
        // Predicated region
        $region64: #{temporal_vae_forward.22} parent=62 // pred_check
          %p710 = pneg %p106
        $region65: #{temporal_vae_forward.22} parent=62 // pred_check_branch
          %712 = sbr.rel (%p710) target = $region67
        $region66: #{temporal_vae_forward.22} parent=62 // pred_region
          %s713 = smul.u32 8, %s15
          %p714 = scmp.lt.s32.totalorder %s713, 15
          %s715 = scalar_select %p714, %s713, 15
          %s716 = smul.addr %s715, 8
          %s717 = scalar_lea.vmem %s3, %s716
        $region67: #{temporal_vae_forward.22} parent=62 // pred_fallthru
          _
      $region63: #{temporal_vae_forward.22} parent=5 // pred_fallthru
        _
    $region6: #{temporal_vae_forward.22} parent=1 // loop_footer
      %s13 = sadd.s32 1, %s9
    $region7: #{temporal_vae_forward.22} parent=1 // loop_footer_branch
      %8 = sbr.rel target = $region3
    $region8: #{temporal_vae_forward.22} parent=1 // loop_exit
      _

// kernel: temporal_vae_forward.23
$region0: #{temporal_vae_forward.23}
  #allocation0 [shape = 'u32[]', space=smem, size = 0x4, offset = 0x4, fixed_abs, tag = 'smem constant byte address 0x4 - core index']
  #allocation1 [shape = 'u32[144,128]{1,0:T(1,128)}', space=vmem, size = 0x12000, scoped, tag = 'internal scratch']
  #allocation2 [shape = 'f32[1]{0:T(128)S(6)}', space=smem, size = 0x200, scoped, tag = 'scoped memory for temporal_vae_forward.23']
  %s0 = inlined_call_operand.vmem [shape: bf16[2,72], index: 0, kind: input, shape index: {}]
  %s1 = inlined_call_operand.vmem [shape: bf16[72,2048], index: 1, kind: input, shape index: {}]
  %s2 = inlined_call_operand.vmem [shape: f32[2,1], index: 2, kind: input, shape index: {}]
  %s3 = inlined_call_operand.vmem [shape: f32[2,2048], index: 3, kind: input, shape index: {}]
  %s4 = inlined_call_operand.<no memory space> [shape: f32[1], index: 4, kind: input, shape index: {}]
  %s5 = inlined_call_operand.vmem [shape: f32[2,2048], index: 5, kind: output, shape index: {}]
  %s6 = sld [smem:[#allocation0]]
  $region76: #{temporal_vae_forward.23} parent=0
    _
  %s8 = ssub.s32 1, %s6
  %s9 = scalar_select 0, %s8, %s6
  %10 = sst [smem:[#allocation2]] %s4
  $region1: #{temporal_vae_forward.23} parent=0
    #allocation3 [shape = 'u8[294912]{0}', space=vmem, size = 0x48000, scoped, tag = 'input window, operand 1']
    loop: start=0, step=1, limit=4
    $region2: #{temporal_vae_forward.23} parent=1 // loop_pre_header
      _
    $region3: #{temporal_vae_forward.23} parent=1 // loop_header
      %s12 = sphi 0, %s16
      %p13 = scmp.ge.s32.totalorder %s12, 4
      %s20 = sphi 0, %s20
      %s22 = sphi 0, %s20
      %s23 = sphi 0, %s22
      %s37 = sphi 0, %s23
      %s43 = sphi 0, %s45
      %s46 = sphi 0, %s43
      %s47 = sphi 0, %s46
      %s63 = sphi 0, %s47
      %s67 = sphi 0, %s67
      %s69 = sphi 0, %s67
      %s70 = sphi 0, %s69
      %s84 = sphi 0, %s70
      %s90 = sphi 0, %s92
      %s93 = sphi 0, %s90
      %s94 = sphi 0, %s93
      %s110 = sphi 0, %s94
      %s114 = sphi 0, %s114
      %s116 = sphi 0, %s114
      %s117 = sphi 0, %s116
      %s131 = sphi 0, %s117
      %s137 = sphi 0, %s139
      %s140 = sphi 0, %s137
      %s141 = sphi 0, %s140
      %s157 = sphi 0, %s141
    $region4: #{temporal_vae_forward.23} parent=1 // loop_header_branch
      %15 = sbr.rel (%p13) target = $region8
    $region5: #{temporal_vae_forward.23} parent=1 // loop_body
      %s17 = ssub.s32 %s12, 1
      %s18 = ssub.s32 %s12, 2
      %s19 = sadd.s32 %s12, 1
      %s21 = sadd.s32 %s20, 1
      %p24 = scmp.eq.s32.totalorder %s12, 1
      %p25 = scmp.ne.s32.totalorder %s20, %s22
      %p26 = scmp.eq.s32.totalorder %s12, 0
      %p27 = por %p25, %p26
      %p28 = scmp.ne.s32.totalorder %s20, %s22
      %p29 = scmp.eq.s32.totalorder %s17, 1
      %p30 = por %p28, %p29
      %p31 = scmp.ne.s32.totalorder %s22, %s23
      %p32 = scmp.eq.s32.totalorder %s17, 0
      %p33 = por %p31, %p32
      %p34 = scmp.ne.s32.totalorder %s22, %s23
      %p35 = scmp.eq.s32.totalorder %s18, 1
      %p36 = por %p34, %p35
      %p38 = scmp.ne.s32.totalorder %s23, %s37
      %p39 = scmp.eq.s32.totalorder %s18, 0
      %p40 = por %p38, %p39
      %s41 = ssub.s32 %s12, %s19
      %p42 = scmp.eq.s32.totalorder %s41, 0
      %s44 = sadd.s32 %s43, 1
      %s45 = scalar_select %p42, %s43, %s44
      %p48 = pneg %p42
      %p49 = scmp.eq.s32.totalorder %s12, 1
      %p50 = por %p48, %p49
      %p51 = scmp.ne.s32.totalorder %s43, %s46
      %p52 = scmp.eq.s32.totalorder %s12, 0
      %p53 = por %p51, %p52
      %p54 = scmp.ne.s32.totalorder %s43, %s46
      %p55 = scmp.eq.s32.totalorder %s17, 1
      %p56 = por %p54, %p55
      %p57 = scmp.ne.s32.totalorder %s46, %s47
      %p58 = scmp.eq.s32.totalorder %s17, 0
      %p59 = por %p57, %p58
      %p60 = scmp.ne.s32.totalorder %s46, %s47
      %p61 = scmp.eq.s32.totalorder %s18, 1
      %p62 = por %p60, %p61
      %p64 = scmp.ne.s32.totalorder %s47, %s63
      %p65 = scmp.eq.s32.totalorder %s18, 0
      %p66 = por %p64, %p65
      %s68 = sadd.s32 %s67, 1
      %p71 = scmp.eq.s32.totalorder %s12, 1
      %p72 = scmp.ne.s32.totalorder %s67, %s69
      %p73 = scmp.eq.s32.totalorder %s12, 0
      %p74 = por %p72, %p73
      %p75 = scmp.ne.s32.totalorder %s67, %s69
      %p76 = scmp.eq.s32.totalorder %s17, 1
      %p77 = por %p75, %p76
      %p78 = scmp.ne.s32.totalorder %s69, %s70
      %p79 = scmp.eq.s32.totalorder %s17, 0
      %p80 = por %p78, %p79
      %p81 = scmp.ne.s32.totalorder %s69, %s70
      %p82 = scmp.eq.s32.totalorder %s18, 1
      %p83 = por %p81, %p82
      %p85 = scmp.ne.s32.totalorder %s70, %s84
      %p86 = scmp.eq.s32.totalorder %s18, 0
      %p87 = por %p85, %p86
      %s88 = ssub.s32 %s12, %s19
      %p89 = scmp.eq.s32.totalorder %s88, 0
      %s91 = sadd.s32 %s90, 1
      %s92 = scalar_select %p89, %s90, %s91
      %p95 = pneg %p89
      %p96 = scmp.eq.s32.totalorder %s12, 1
      %p97 = por %p95, %p96
      %p98 = scmp.ne.s32.totalorder %s90, %s93
      %p99 = scmp.eq.s32.totalorder %s12, 0
      %p100 = por %p98, %p99
      %p101 = scmp.ne.s32.totalorder %s90, %s93
      %p102 = scmp.eq.s32.totalorder %s17, 1
      %p103 = por %p101, %p102
      %p104 = scmp.ne.s32.totalorder %s93, %s94
      %p105 = scmp.eq.s32.totalorder %s17, 0
      %p106 = por %p104, %p105
      %p107 = scmp.ne.s32.totalorder %s93, %s94
      %p108 = scmp.eq.s32.totalorder %s18, 1
      %p109 = por %p107, %p108
      %p111 = scmp.ne.s32.totalorder %s94, %s110
      %p112 = scmp.eq.s32.totalorder %s18, 0
      %p113 = por %p111, %p112
      %s115 = sadd.s32 %s114, 1
      %p118 = scmp.eq.s32.totalorder %s12, 1
      %p119 = scmp.ne.s32.totalorder %s114, %s116
      %p120 = scmp.eq.s32.totalorder %s12, 0
      %p121 = por %p119, %p120
      %p122 = scmp.ne.s32.totalorder %s114, %s116
      %p123 = scmp.eq.s32.totalorder %s17, 1
      %p124 = por %p122, %p123
      %p125 = scmp.ne.s32.totalorder %s116, %s117
      %p126 = scmp.eq.s32.totalorder %s17, 0
      %p127 = por %p125, %p126
      %p128 = scmp.ne.s32.totalorder %s116, %s117
      %p129 = scmp.eq.s32.totalorder %s18, 1
      %p130 = por %p128, %p129
      %p132 = scmp.ne.s32.totalorder %s117, %s131
      %p133 = scmp.eq.s32.totalorder %s18, 0
      %p134 = por %p132, %p133
      %s135 = ssub.s32 %s12, %s19
      %p136 = scmp.eq.s32.totalorder %s135, 0
      %s138 = sadd.s32 %s137, 1
      %s139 = scalar_select %p136, %s137, %s138
      %p142 = pneg %p136
      %p143 = scmp.eq.s32.totalorder %s12, 1
      %p144 = por %p142, %p143
      %p145 = scmp.ne.s32.totalorder %s137, %s140
      %p146 = scmp.eq.s32.totalorder %s12, 0
      %p147 = por %p145, %p146
      %p148 = scmp.ne.s32.totalorder %s137, %s140
      %p149 = scmp.eq.s32.totalorder %s17, 1
      %p150 = por %p148, %p149
      %p151 = scmp.ne.s32.totalorder %s140, %s141
      %p152 = scmp.eq.s32.totalorder %s17, 0
      %p153 = por %p151, %p152
      %p154 = scmp.ne.s32.totalorder %s140, %s141
      %p155 = scmp.eq.s32.totalorder %s18, 1
      %p156 = por %p154, %p155
      %p158 = scmp.ne.s32.totalorder %s141, %s157
      %p159 = scmp.eq.s32.totalorder %s18, 0
      %p160 = por %p158, %p159
      %p161 = scmp.le.s32.totalorder 1, %s12
      %p162 = scmp.lt.s32.totalorder %s12, 3
      %p163 = pnand %p161, %p162
      %p164 = pneg %p163
      // Predicated region
      $region9: #{temporal_vae_forward.23} parent=5 // pred_check
        _
      $region10: #{temporal_vae_forward.23} parent=5 // pred_check_branch
        %166 = sbr.rel (%p163) target = $region12
      $region11: #{temporal_vae_forward.23} parent=5 // pred_region
        %s167 = ssub.s32 %s12, 1
        // Predicated region
        $region13: #{temporal_vae_forward.23} parent=11 // pred_check
          %p168 = pneg %p33
        $region14: #{temporal_vae_forward.23} parent=11 // pred_check_branch
          %170 = sbr.rel (%p168) target = $region16
        $region15: #{temporal_vae_forward.23} parent=11 // pred_region
          _
        $region16: #{temporal_vae_forward.23} parent=11 // pred_fallthru
          _
        // Predicated region
        $region17: #{temporal_vae_forward.23} parent=11 // pred_check
          %p171 = pneg %p80
        $region18: #{temporal_vae_forward.23} parent=11 // pred_check_branch
          %173 = sbr.rel (%p171) target = $region20
        $region19: #{temporal_vae_forward.23} parent=11 // pred_region
          _
        $region20: #{temporal_vae_forward.23} parent=11 // pred_fallthru
          _
        // Predicated region
        $region21: #{temporal_vae_forward.23} parent=11 // pred_check
          %p174 = pneg %p127
        $region22: #{temporal_vae_forward.23} parent=11 // pred_check_branch
          %176 = sbr.rel (%p174) target = $region24
        $region23: #{temporal_vae_forward.23} parent=11 // pred_region
          _
        $region24: #{temporal_vae_forward.23} parent=11 // pred_fallthru
          _
      $region12: #{temporal_vae_forward.23} parent=5 // pred_fallthru
        _
      %p177 = scmp.lt.s32.totalorder %s12, 2
      // Predicated region
      $region25: #{temporal_vae_forward.23} parent=5 // pred_check
        %p178 = pneg %p177
      $region26: #{temporal_vae_forward.23} parent=5 // pred_check_branch
        %180 = sbr.rel (%p178) target = $region28
      $region27: #{temporal_vae_forward.23} parent=5 // pred_region
        // Predicated region
        $region29: #{temporal_vae_forward.23} parent=27 // pred_check
          %p181 = pneg %p53
        $region30: #{temporal_vae_forward.23} parent=27 // pred_check_branch
          %183 = sbr.rel (%p181) target = $region32
        $region31: #{temporal_vae_forward.23} parent=27 // pred_region
          %s184 = sand.u32 %s43, 1
          %s185 = sand.u32 %s43, 1
          %s186 = smul.addr %s185, 288
          %s187 = scalar_lea.vmem [#allocation3], %s186
          %s188 = smul.u32 8, %s12
          %s189 = smul.addr %s188, 4
          %s190 = scalar_lea.vmem %s1, %s189
          // Predicated region
          $region33: #{temporal_vae_forward.23} parent=31 // pred_check
            _
          $region34: #{temporal_vae_forward.23} parent=31 // pred_check_branch
            %192 = sbr.rel (0) target = $region36
          $region35: #{temporal_vae_forward.23} parent=31 // pred_region
            // Predicated region
            $region37: #{temporal_vae_forward.23} parent=35 // pred_check
              _
            $region38: #{temporal_vae_forward.23} parent=35 // pred_check_branch
              %194 = sbr.rel (0) target = $region40
            $region39: #{temporal_vae_forward.23} parent=35 // pred_region
              loop: start=0, step=1, limit=1
              $region41: #{temporal_vae_forward.23} parent=39 // loop_pre_header
                _
              $region42: #{temporal_vae_forward.23} parent=39 // loop_header
                %s196 = sphi 0, %s200
                %p197 = scmp.ge.s32.totalorder %s196, 1
                %s201 = sphi %s190, %s190
                %s202 = sphi %s187, %s187
              $region43: #{temporal_vae_forward.23} parent=39 // loop_header_branch
                %199 = sbr.rel (%p197) target = $region47
              $region44: #{temporal_vae_forward.23} parent=39 // loop_body
                %v203 = vld [vmem:[%s201] sm:$0xff]
                %204 = vst [vmem:[%s202] sm:$0xff] %v203
                %v205 = vld [vmem:[%s201 + $0x8] sm:$0xff]
                %206 = vst [vmem:[%s202 + $0x8] sm:$0xff] %v205
                %v207 = vld [vmem:[%s201 + $0x10] sm:$0xff]
                %208 = vst [vmem:[%s202 + $0x10] sm:$0xff] %v207
                %v209 = vld [vmem:[%s201 + $0x18] sm:$0xff]
                %210 = vst [vmem:[%s202 + $0x18] sm:$0xff] %v209
                %v211 = vld [vmem:[%s201 + $0x40] sm:$0xff]
                %212 = vst [vmem:[%s202 + $0x20] sm:$0xff] %v211
                %v213 = vld [vmem:[%s201 + $0x48] sm:$0xff]
                %214 = vst [vmem:[%s202 + $0x28] sm:$0xff] %v213
                %v215 = vld [vmem:[%s201 + $0x50] sm:$0xff]
                %216 = vst [vmem:[%s202 + $0x30] sm:$0xff] %v215
                %v217 = vld [vmem:[%s201 + $0x58] sm:$0xff]
                %218 = vst [vmem:[%s202 + $0x38] sm:$0xff] %v217
                %v219 = vld [vmem:[%s201 + $0x80] sm:$0xff]
                %220 = vst [vmem:[%s202 + $0x40] sm:$0xff] %v219
                %v221 = vld [vmem:[%s201 + $0x88] sm:$0xff]
                %222 = vst [vmem:[%s202 + $0x48] sm:$0xff] %v221
                %v223 = vld [vmem:[%s201 + $0x90] sm:$0xff]
                %224 = vst [vmem:[%s202 + $0x50] sm:$0xff] %v223
                %v225 = vld [vmem:[%s201 + $0x98] sm:$0xff]
                %226 = vst [vmem:[%s202 + $0x58] sm:$0xff] %v225
                %v227 = vld [vmem:[%s201 + $0xc0] sm:$0xff]
                %228 = vst [vmem:[%s202 + $0x60] sm:$0xff] %v227
                %v229 = vld [vmem:[%s201 + $0xc8] sm:$0xff]
                %230 = vst [vmem:[%s202 + $0x68] sm:$0xff] %v229
                %v231 = vld [vmem:[%s201 + $0xd0] sm:$0xff]
                %232 = vst [vmem:[%s202 + $0x70] sm:$0xff] %v231
                %v233 = vld [vmem:[%s201 + $0xd8] sm:$0xff]
                %234 = vst [vmem:[%s202 + $0x78] sm:$0xff] %v233
                %v235 = vld [vmem:[%s201 + $0x100] sm:$0xff]
                %236 = vst [vmem:[%s202 + $0x80] sm:$0xff] %v235
                %v237 = vld [vmem:[%s201 + $0x108] sm:$0xff]
                %238 = vst [vmem:[%s202 + $0x88] sm:$0xff] %v237
                %v239 = vld [vmem:[%s201 + $0x110] sm:$0xff]
                %240 = vst [vmem:[%s202 + $0x90] sm:$0xff] %v239
                %v241 = vld [vmem:[%s201 + $0x118] sm:$0xff]
                %242 = vst [vmem:[%s202 + $0x98] sm:$0xff] %v241
                %v243 = vld [vmem:[%s201 + $0x140] sm:$0xff]
                %244 = vst [vmem:[%s202 + $0xa0] sm:$0xff] %v243
                %v245 = vld [vmem:[%s201 + $0x148] sm:$0xff]
                %246 = vst [vmem:[%s202 + $0xa8] sm:$0xff] %v245
                %v247 = vld [vmem:[%s201 + $0x150] sm:$0xff]
                %248 = vst [vmem:[%s202 + $0xb0] sm:$0xff] %v247
                %v249 = vld [vmem:[%s201 + $0x158] sm:$0xff]
                %250 = vst [vmem:[%s202 + $0xb8] sm:$0xff] %v249
                %v251 = vld [vmem:[%s201 + $0x180] sm:$0xff]
                %252 = vst [vmem:[%s202 + $0xc0] sm:$0xff] %v251
                %v253 = vld [vmem:[%s201 + $0x188] sm:$0xff]
                %254 = vst [vmem:[%s202 + $0xc8] sm:$0xff] %v253
                %v255 = vld [vmem:[%s201 + $0x190] sm:$0xff]
                %256 = vst [vmem:[%s202 + $0xd0] sm:$0xff] %v255
                %v257 = vld [vmem:[%s201 + $0x198] sm:$0xff]
                %258 = vst [vmem:[%s202 + $0xd8] sm:$0xff] %v257
                %v259 = vld [vmem:[%s201 + $0x1c0] sm:$0xff]
                %260 = vst [vmem:[%s202 + $0xe0] sm:$0xff] %v259
                %v261 = vld [vmem:[%s201 + $0x1c8] sm:$0xff]
                %262 = vst [vmem:[%s202 + $0xe8] sm:$0xff] %v261
                %v263 = vld [vmem:[%s201 + $0x1d0] sm:$0xff]
                %264 = vst [vmem:[%s202 + $0xf0] sm:$0xff] %v263
                %v265 = vld [vmem:[%s201 + $0x1d8] sm:$0xff]
                %266 = vst [vmem:[%s202 + $0xf8] sm:$0xff] %v265
                %v267 = vld [vmem:[%s201 + $0x200] sm:$0xff]
                %268 = vst [vmem:[%s202 + $0x100] sm:$0xff] %v267
                %v269 = vld [vmem:[%s201 + $0x208] sm:$0xff]
                %270 = vst [vmem:[%s202 + $0x108] sm:$0xff] %v269
                %v271 = vld [vmem:[%s201 + $0x210] sm:$0xff]
                %272 = vst [vmem:[%s202 + $0x110] sm:$0xff] %v271
                %v273 = vld [vmem:[%s201 + $0x218] sm:$0xff]
                %274 = vst [vmem:[%s202 + $0x118] sm:$0xff] %v273
              $region45: #{temporal_vae_forward.23} parent=39 // loop_footer
                %s200 = sadd.s32 1, %s196
              $region46: #{temporal_vae_forward.23} parent=39 // loop_footer_branch
                %195 = sbr.rel target = $region42
              $region47: #{temporal_vae_forward.23} parent=39 // loop_exit
                _
            $region40: #{temporal_vae_forward.23} parent=35 // pred_fallthru
              _
            // Predicated region
            $region48: #{temporal_vae_forward.23} parent=35 // pred_check
              _
            $region49: #{temporal_vae_forward.23} parent=35 // pred_check_branch
              %276 = sbr.rel target = $region51
            $region50: #{temporal_vae_forward.23} parent=35 // pred_region
              _
            $region51: #{temporal_vae_forward.23} parent=35 // pred_fallthru
              _
          $region36: #{temporal_vae_forward.23} parent=31 // pred_fallthru
            _
          %277 = vnop
        $region32: #{temporal_vae_forward.23} parent=27 // pred_fallthru
          _
        // Predicated region
        $region52: #{temporal_vae_forward.23} parent=27 // pred_check
          %p278 = pneg %p100
        $region53: #{temporal_vae_forward.23} parent=27 // pred_check_branch
          %280 = sbr.rel (%p278) target = $region55
        $region54: #{temporal_vae_forward.23} parent=27 // pred_region
          %s281 = smul.u32 8, %s12
          %p282 = scmp.lt.s32.totalorder %s281, 15
          %s283 = scalar_select %p282, %s281, 15
          %s284 = smul.addr %s283, 2
          %s285 = scalar_lea.vmem %s3, %s284
          %s286 = smul.u32 8, %s12
        $region55: #{temporal_vae_forward.23} parent=27 // pred_fallthru
          _
      $region28: #{temporal_vae_forward.23} parent=5 // pred_fallthru
        _
      %p287 = scmp.le.s32.totalorder 1, %s12
      %p288 = scmp.lt.s32.totalorder %s12, 3
      %p289 = pnand %p287, %p288
      %p290 = pneg %p289
      // Predicated region
      $region56: #{temporal_vae_forward.23} parent=5 // pred_check
        _
      $region57: #{temporal_vae_forward.23} parent=5 // pred_check_branch
        %292 = sbr.rel (%p289) target = $region59
      $region58: #{temporal_vae_forward.23} parent=5 // pred_region
        %s293 = ssub.s32 %s12, 1
        %s294 = sand.u32 %s46, 1
        %s295 = sand.u32 %s46, 1
        %s296 = smul.addr %s295, 288
        %s297 = scalar_lea.vmem [#allocation3], %s296
        // Predicated region
        $region60: #{temporal_vae_forward.23} parent=58 // pred_check
          %p298 = pneg %p59
        $region61: #{temporal_vae_forward.23} parent=58 // pred_check_branch
          %300 = sbr.rel (%p298) target = $region63
        $region62: #{temporal_vae_forward.23} parent=58 // pred_region
          _
        $region63: #{temporal_vae_forward.23} parent=58 // pred_fallthru
          _
        %p301 = pneg %p33
        %p302 = pneg %p30
        %s303 = sand.u32 %s46, 1
        %s304 = sand.u32 %s46, 1
        %s305 = smul.addr %s304, 288
        %s306 = scalar_lea.vmem [#allocation3], %s305
        %p307 = pneg %p59
        %p308 = pneg %p56
        %p309 = pneg %p80
        %p310 = pneg %p77
        %s311 = smul.u32 8, %s17
        %p312 = scmp.lt.s32.totalorder %s311, 15
        %s313 = scalar_select %p312, %s311, 15
        %s314 = smul.addr %s313, 2
        %s315 = scalar_lea.vmem %s3, %s314
        %p316 = pneg %p106
        %p317 = pneg %p103
        %p318 = pneg %p127
        %p319 = pneg %p124
        %p320 = pneg %p153
        %p321 = pneg %p150
        %s322 = smul.u32 8, %s17
        %p323 = scmp.lt.s32.totalorder %s322, 15
        %s324 = scalar_select %p323, %s322, 15
        %s325 = smul.addr %s324, 2
        %s326 = scalar_lea.vmem %s5, %s325
        %s327 = smul.u32 8, %s17
        %s328 = smul.u32 8, %s17
        %p329 = scmp.lt.s32.totalorder %s328, 15
        %s330 = scalar_select %p329, %s328, 15
        %s331 = smul.addr %s330, 2
        %s332 = scalar_lea.vmem %s3, %s331
        %s333 = smul.u32 8, %s17
        %s334 = smul.u32 8, %s17
        %p335 = scmp.lt.s32.totalorder %s334, 15
        %s336 = scalar_select %p335, %s334, 15
        %s337 = smul.addr %s336, 2
        %s338 = scalar_lea.vmem %s5, %s337
        %s339 = smul.u32 8, %s17
        %v341 = vld [vmem:[%s0] sm:$0x1]
        %v342 = vld [vmem:[%s297] sm:$0xff]
        %v343 = vld [vmem:[%s297 + $0x8] sm:$0xff]
        %v344 = vld [vmem:[%s297 + $0x10] sm:$0xff]
        %v345 = vld [vmem:[%s297 + $0x18] sm:$0xff]
        %v346 = vld [vmem:[%s297 + $0x20] sm:$0xff]
        %v347 = vld [vmem:[%s297 + $0x28] sm:$0xff]
        %v348 = vld [vmem:[%s297 + $0x30] sm:$0xff]
        %v349 = vld [vmem:[%s297 + $0x38] sm:$0xff]
        %v350 = vld [vmem:[%s297 + $0x40] sm:$0xff]
        %v351 = vld [vmem:[%s297 + $0x48] sm:$0xff]
        %v352 = vld [vmem:[%s297 + $0x50] sm:$0xff]
        %v353 = vld [vmem:[%s297 + $0x58] sm:$0xff]
        %v354 = vld [vmem:[%s297 + $0x60] sm:$0xff]
        %v355 = vld [vmem:[%s297 + $0x68] sm:$0xff]
        %v356 = vld [vmem:[%s297 + $0x70] sm:$0xff]
        %v357 = vld [vmem:[%s297 + $0x78] sm:$0xff]
        %v358 = vld [vmem:[%s297 + $0x80] sm:$0xff]
        %v359 = vld [vmem:[%s297 + $0x88] sm:$0xff]
        %v360 = vld [vmem:[%s297 + $0x90] sm:$0xff]
        %v361 = vld [vmem:[%s297 + $0x98] sm:$0xff]
        %v362 = vld [vmem:[%s297 + $0xa0] sm:$0xff]
        %v363 = vld [vmem:[%s297 + $0xa8] sm:$0xff]
        %v364 = vld [vmem:[%s297 + $0xb0] sm:$0xff]
        %v365 = vld [vmem:[%s297 + $0xb8] sm:$0xff]
        %v366 = vld [vmem:[%s297 + $0xc0] sm:$0xff]
        %v367 = vld [vmem:[%s297 + $0xc8] sm:$0xff]
        %v368 = vld [vmem:[%s297 + $0xd0] sm:$0xff]
        %v369 = vld [vmem:[%s297 + $0xd8] sm:$0xff]
        %v370 = vld [vmem:[%s297 + $0xe0] sm:$0xff]
        %v371 = vld [vmem:[%s297 + $0xe8] sm:$0xff]
        %v372 = vld [vmem:[%s297 + $0xf0] sm:$0xff]
        %v373 = vld [vmem:[%s297 + $0xf8] sm:$0xff]
        %v374 = vld [vmem:[%s297 + $0x100] sm:$0xff]
        %v375 = vld [vmem:[%s297 + $0x108] sm:$0xff]
        %v376 = vld [vmem:[%s297 + $0x110] sm:$0xff]
        %v377 = vld [vmem:[%s297 + $0x118] sm:$0xff]
        %v378 = vld [vmem:[%s2] sm:$0x3]
        %380 = vset.pattern.permute.xlu0 0
        %381 = vperm.xlu0 %380, %v378
        %v382 = vpop.permute.xlu0 %381
        %v420 = vunpack.c.l.b16 %v342
        %v421 = vunpack.c.h.b16 %v342
        %v422 = vunpack.c.l.b16 %v343
        %v423 = vunpack.c.h.b16 %v343
        %v424 = vunpack.c.l.b16 %v344
        %v425 = vunpack.c.h.b16 %v344
        %v426 = vunpack.c.l.b16 %v345
        %v427 = vunpack.c.h.b16 %v345
        %v428 = vunpack.c.l.b16 %v346
        %v429 = vunpack.c.h.b16 %v346
        %v430 = vunpack.c.l.b16 %v347
        %v431 = vunpack.c.h.b16 %v347
        %v432 = vunpack.c.l.b16 %v348
        %v433 = vunpack.c.h.b16 %v348
        %v434 = vunpack.c.l.b16 %v349
        %v435 = vunpack.c.h.b16 %v349
        %v436 = vunpack.c.l.b16 %v350
        %v437 = vunpack.c.h.b16 %v350
        %v438 = vunpack.c.l.b16 %v351
        %v439 = vunpack.c.h.b16 %v351
        %v440 = vunpack.c.l.b16 %v352
        %v441 = vunpack.c.h.b16 %v352
        %v442 = vunpack.c.l.b16 %v353
        %v443 = vunpack.c.h.b16 %v353
        %v444 = vunpack.c.l.b16 %v354
        %v445 = vunpack.c.h.b16 %v354
        %v446 = vunpack.c.l.b16 %v355
        %v447 = vunpack.c.h.b16 %v355
        %v448 = vunpack.c.l.b16 %v356
        %v449 = vunpack.c.h.b16 %v356
        %v450 = vunpack.c.l.b16 %v357
        %v451 = vunpack.c.h.b16 %v357
        %v452 = vunpack.c.l.b16 %v358
        %v453 = vunpack.c.h.b16 %v358
        %v454 = vunpack.c.l.b16 %v359
        %v455 = vunpack.c.h.b16 %v359
        %v456 = vunpack.c.l.b16 %v360
        %v457 = vunpack.c.h.b16 %v360
        %v458 = vunpack.c.l.b16 %v361
        %v459 = vunpack.c.h.b16 %v361
        %v460 = vunpack.c.l.b16 %v362
        %v461 = vunpack.c.h.b16 %v362
        %v462 = vunpack.c.l.b16 %v363
        %v463 = vunpack.c.h.b16 %v363
        %v464 = vunpack.c.l.b16 %v364
        %v465 = vunpack.c.h.b16 %v364
        %v466 = vunpack.c.l.b16 %v365
        %v467 = vunpack.c.h.b16 %v365
        %v468 = vunpack.c.l.b16 %v366
        %v469 = vunpack.c.h.b16 %v366
        %v470 = vunpack.c.l.b16 %v367
        %v471 = vunpack.c.h.b16 %v367
        %v472 = vunpack.c.l.b16 %v368
        %v473 = vunpack.c.h.b16 %v368
        %v474 = vunpack.c.l.b16 %v369
        %v475 = vunpack.c.h.b16 %v369
        %v476 = vunpack.c.l.b16 %v370
        %v477 = vunpack.c.h.b16 %v370
        %v478 = vunpack.c.l.b16 %v371
        %v479 = vunpack.c.h.b16 %v371
        %v480 = vunpack.c.l.b16 %v372
        %v481 = vunpack.c.h.b16 %v372
        %v482 = vunpack.c.l.b16 %v373
        %v483 = vunpack.c.h.b16 %v373
        %v484 = vunpack.c.l.b16 %v374
        %v485 = vunpack.c.h.b16 %v374
        %v486 = vunpack.c.l.b16 %v375
        %v487 = vunpack.c.h.b16 %v375
        %v488 = vunpack.c.l.b16 %v376
        %v489 = vunpack.c.h.b16 %v376
        %v490 = vunpack.c.l.b16 %v377
        %v491 = vunpack.c.h.b16 %v377
        %v492 = vpack.c.b16 %v428, %v420
        %v493 = vpack.c.b16 %v429, %v421
        %v494 = vpack.c.b16 %v430, %v422
        %v495 = vpack.c.b16 %v431, %v423
        %v496 = vpack.c.b16 %v432, %v424
        %v497 = vpack.c.b16 %v433, %v425
        %v498 = vpack.c.b16 %v434, %v426
        %v499 = vpack.c.b16 %v435, %v427
        %v500 = vpack.c.b16 %v444, %v436
        %v501 = vpack.c.b16 %v445, %v437
        %v502 = vpack.c.b16 %v446, %v438
        %v503 = vpack.c.b16 %v447, %v439
        %v504 = vpack.c.b16 %v448, %v440
        %v505 = vpack.c.b16 %v449, %v441
        %v506 = vpack.c.b16 %v450, %v442
        %v507 = vpack.c.b16 %v451, %v443
        %v508 = vpack.c.b16 %v460, %v452
        %v509 = vpack.c.b16 %v461, %v453
        %v510 = vpack.c.b16 %v462, %v454
        %v511 = vpack.c.b16 %v463, %v455
        %v512 = vpack.c.b16 %v464, %v456
        %v513 = vpack.c.b16 %v465, %v457
        %v514 = vpack.c.b16 %v466, %v458
        %v515 = vpack.c.b16 %v467, %v459
        %v516 = vpack.c.b16 %v476, %v468
        %v517 = vpack.c.b16 %v477, %v469
        %v518 = vpack.c.b16 %v478, %v470
        %v519 = vpack.c.b16 %v479, %v471
        %v520 = vpack.c.b16 %v480, %v472
        %v521 = vpack.c.b16 %v481, %v473
        %v522 = vpack.c.b16 %v482, %v474
        %v523 = vpack.c.b16 %v483, %v475
        %v524 = vpack.c.b16 %v484, %v484
        %v525 = vpack.c.b16 %v485, %v485
        %v526 = vpack.c.b16 %v486, %v486
        %v527 = vpack.c.b16 %v487, %v487
        %v528 = vpack.c.b16 %v488, %v488
        %v529 = vpack.c.b16 %v489, %v489
        %v530 = vpack.c.b16 %v490, %v490
        %v531 = vpack.c.b16 %v491, %v491
        %vm564 = vcmask 588800
        %v566 = vsel %vm564, %v341, 0
        %vm568 = vcmask 1043456
        %v570 = vsel %vm568, %v524, 0
        %v573 = vsel %vm568, %v525, 0
        %v576 = vsel %vm568, %v526, 0
        %v579 = vsel %vm568, %v527, 0
        %v582 = vsel %vm568, %v528, 0
        %v585 = vsel %vm568, %v529, 0
        %v588 = vsel %vm568, %v530, 0
        %v591 = vsel %vm568, %v531, 0
        %593 = vmatprep.subr.bf16.mxu0 0
        %594 = vmatpush1.bf16.msra.mxu0 0
        %595 = vmatprep.subr.bf16.mxu0 0
        %596 = vmatpush1.bf16.msra.mxu0 0
        %597 = vmatprep.subr.bf16.mxu0 0
        %598 = vmatpush1.bf16.msra.mxu0 0
        %599 = vmatprep.subr.bf16.mxu0 %v573
        %600 = vmatpush1.bf16.msra.mxu0 %v570
        %601 = vmatprep.subr.bf16.mxu0 %v517
        %602 = vmatpush1.bf16.msra.mxu0 %v516
        %603 = vmatprep.subr.bf16.mxu0 %v509
        %604 = vmatpush1.bf16.msra.mxu0 %v508
        %605 = vmatprep.subr.bf16.mxu0 %v501
        %606 = vmatpush1.bf16.msra.mxu0 %v500
        %607 = vmatprep.subr.bf16.mxu0 %v493
        %608 = vmatpush1.bf16.msra.mxu0 %v492
        %609 = vmatprep.subr.bf16.mxu0 0
        %610 = vmatpush2.bf16.msra.mxu0 0
        %611 = vmatprep.subr.bf16.mxu0 0
        %612 = vmatpush2.bf16.msra.mxu0 0
        %613 = vmatprep.subr.bf16.mxu0 0
        %614 = vmatpush2.bf16.msra.mxu0 0
        %615 = vmatprep.subr.bf16.mxu0 0
        %616 = vmatpush2.bf16.msra.mxu0 0
        %617 = vmatprep.subr.bf16.mxu0 0
        %618 = vmatpush2.bf16.msra.mxu0 0
        %619 = vmatprep.subr.bf16.mxu0 0
        %620 = vmatpush2.bf16.msra.mxu0 0
        %621 = vmatprep.subr.bf16.mxu0 0
        %622 = vmatpush2.bf16.msra.mxu0 0
        %623 = vmatprep.subr.bf16.mxu0 0
        %624 = vmatpush2.bf16.msra.mxu0 0
        %625 = vmatprep.mubr.bf16.mxu0 0
        %626 = vmatmul.mubr.bf16.gmra.mxu0 %v566
        %v627 = vpop.f32.mrf.mxu0
        %v628 = vadd.f32 %v382, %v627
        %v629 = vpop.f32.mrf.mxu0
        %v630 = vadd.f32 %v382, %v629
        %v631 = vpop.f32.mrf.mxu0
        %v632 = vpop.f32.mrf.mxu0
        %633 = vdwg.mxu0
        %634 = vmatprep.subr.bf16.mxu0 0
        %635 = vmatpush1.bf16.msra.mxu0 0
        %636 = vmatprep.subr.bf16.mxu0 0
        %637 = vmatpush1.bf16.msra.mxu0 0
        %638 = vmatprep.subr.bf16.mxu0 0
        %639 = vmatpush1.bf16.msra.mxu0 0
        %640 = vmatprep.subr.bf16.mxu0 %v579
        %641 = vmatpush1.bf16.msra.mxu0 %v576
        %642 = vmatprep.subr.bf16.mxu0 %v519
        %643 = vmatpush1.bf16.msra.mxu0 %v518
        %644 = vmatprep.subr.bf16.mxu0 %v511
        %645 = vmatpush1.bf16.msra.mxu0 %v510
        %646 = vmatprep.subr.bf16.mxu0 %v503
        %647 = vmatpush1.bf16.msra.mxu0 %v502
        %648 = vmatprep.subr.bf16.mxu0 %v495
        %649 = vmatpush1.bf16.msra.mxu0 %v494
        %650 = vmatprep.subr.bf16.mxu0 0
        %651 = vmatpush2.bf16.msra.mxu0 0
        %652 = vmatprep.subr.bf16.mxu0 0
        %653 = vmatpush2.bf16.msra.mxu0 0
        %654 = vmatprep.subr.bf16.mxu0 0
        %655 = vmatpush2.bf16.msra.mxu0 0
        %656 = vmatprep.subr.bf16.mxu0 0
        %657 = vmatpush2.bf16.msra.mxu0 0
        %658 = vmatprep.subr.bf16.mxu0 0
        %659 = vmatpush2.bf16.msra.mxu0 0
        %660 = vmatprep.subr.bf16.mxu0 0
        %661 = vmatpush2.bf16.msra.mxu0 0
        %662 = vmatprep.subr.bf16.mxu0 0
        %663 = vmatpush2.bf16.msra.mxu0 0
        %664 = vmatprep.subr.bf16.mxu0 0
        %665 = vmatpush2.bf16.msra.mxu0 0
        %666 = vmatprep.mubr.bf16.mxu0 0
        %667 = vmatmul.mubr.bf16.gmra.mxu0 %v566
        %v668 = vpop.f32.mrf.mxu0
        %v669 = vadd.f32 %v382, %v668
        %v670 = vpop.f32.mrf.mxu0
        %v671 = vadd.f32 %v382, %v670
        %v672 = vpop.f32.mrf.mxu0
        %v673 = vpop.f32.mrf.mxu0
        %674 = vdwg.mxu0
        %675 = vmatprep.subr.bf16.mxu0 0
        %676 = vmatpush1.bf16.msra.mxu0 0
        %677 = vmatprep.subr.bf16.mxu0 0
        %678 = vmatpush1.bf16.msra.mxu0 0
        %679 = vmatprep.subr.bf16.mxu0 0
        %680 = vmatpush1.bf16.msra.mxu0 0
        %681 = vmatprep.subr.bf16.mxu0 %v585
        %682 = vmatpush1.bf16.msra.mxu0 %v582
        %683 = vmatprep.subr.bf16.mxu0 %v521
        %684 = vmatpush1.bf16.msra.mxu0 %v520
        %685 = vmatprep.subr.bf16.mxu0 %v513
        %686 = vmatpush1.bf16.msra.mxu0 %v512
        %687 = vmatprep.subr.bf16.mxu0 %v505
        %688 = vmatpush1.bf16.msra.mxu0 %v504
        %689 = vmatprep.subr.bf16.mxu0 %v497
        %690 = vmatpush1.bf16.msra.mxu0 %v496
        %691 = vmatprep.subr.bf16.mxu0 0
        %692 = vmatpush2.bf16.msra.mxu0 0
        %693 = vmatprep.subr.bf16.mxu0 0
        %694 = vmatpush2.bf16.msra.mxu0 0
        %695 = vmatprep.subr.bf16.mxu0 0
        %696 = vmatpush2.bf16.msra.mxu0 0
        %697 = vmatprep.subr.bf16.mxu0 0
        %698 = vmatpush2.bf16.msra.mxu0 0
        %699 = vmatprep.subr.bf16.mxu0 0
        %700 = vmatpush2.bf16.msra.mxu0 0
        %701 = vmatprep.subr.bf16.mxu0 0
        %702 = vmatpush2.bf16.msra.mxu0 0
        %703 = vmatprep.subr.bf16.mxu0 0
        %704 = vmatpush2.bf16.msra.mxu0 0
        %705 = vmatprep.subr.bf16.mxu0 0
        %706 = vmatpush2.bf16.msra.mxu0 0
        %707 = vmatprep.mubr.bf16.mxu0 0
        %708 = vmatmul.mubr.bf16.gmra.mxu0 %v566
        %v709 = vpop.f32.mrf.mxu0
        %v710 = vadd.f32 %v382, %v709
        %v711 = vpop.f32.mrf.mxu0
        %v712 = vadd.f32 %v382, %v711
        %v713 = vpop.f32.mrf.mxu0
        %v714 = vpop.f32.mrf.mxu0
        %715 = vdwg.mxu0
        %716 = vmatprep.subr.bf16.mxu0 0
        %717 = vmatpush1.bf16.msra.mxu0 0
        %718 = vmatprep.subr.bf16.mxu0 0
        %719 = vmatpush1.bf16.msra.mxu0 0
        %720 = vmatprep.subr.bf16.mxu0 0
        %721 = vmatpush1.bf16.msra.mxu0 0
        %722 = vmatprep.subr.bf16.mxu0 %v591
        %723 = vmatpush1.bf16.msra.mxu0 %v588
        %724 = vmatprep.subr.bf16.mxu0 %v523
        %725 = vmatpush1.bf16.msra.mxu0 %v522
        %726 = vmatprep.subr.bf16.mxu0 %v515
        %727 = vmatpush1.bf16.msra.mxu0 %v514
        %728 = vmatprep.subr.bf16.mxu0 %v507
        %729 = vmatpush1.bf16.msra.mxu0 %v506
        %730 = vmatprep.subr.bf16.mxu0 %v499
        %731 = vmatpush1.bf16.msra.mxu0 %v498
        %732 = vmatprep.subr.bf16.mxu0 0
        %733 = vmatpush2.bf16.msra.mxu0 0
        %734 = vmatprep.subr.bf16.mxu0 0
        %735 = vmatpush2.bf16.msra.mxu0 0
        %736 = vmatprep.subr.bf16.mxu0 0
        %737 = vmatpush2.bf16.msra.mxu0 0
        %738 = vmatprep.subr.bf16.mxu0 0
        %739 = vmatpush2.bf16.msra.mxu0 0
        %740 = vmatprep.subr.bf16.mxu0 0
        %741 = vmatpush2.bf16.msra.mxu0 0
        %742 = vmatprep.subr.bf16.mxu0 0
        %743 = vmatpush2.bf16.msra.mxu0 0
        %744 = vmatprep.subr.bf16.mxu0 0
        %745 = vmatpush2.bf16.msra.mxu0 0
        %746 = vmatprep.subr.bf16.mxu0 0
        %747 = vmatpush2.bf16.msra.mxu0 0
        %748 = vmatprep.mubr.bf16.mxu0 0
        %749 = vmatmul.mubr.bf16.gmra.mxu0 %v566
        %v750 = vpop.f32.mrf.mxu0
        %v751 = vadd.f32 %v382, %v750
        %v752 = vpop.f32.mrf.mxu0
        %v753 = vadd.f32 %v382, %v752
        %v754 = vpop.f32.mrf.mxu0
        %v755 = vpop.f32.mrf.mxu0
        %756 = vdwg.mxu0
        %v757 = vtanh.pop %v628
        %v758 = vtanh.pop %v630
        %v759 = vtanh.pop %v669
        %v760 = vtanh.pop %v671
        %v761 = vtanh.pop %v710
        %v762 = vtanh.pop %v712
        %v763 = vtanh.pop %v751
        %v764 = vtanh.pop %v753
        %v765 = vld [vmem:[%s332] sm:$0xff]
        %v766 = vld [vmem:[%s332 + $0x8] sm:$0xff]
        %v769 = vcombine.high %v765, %v765
        %v771 = vunpack.c.l.s4 1983009808
        %v772 = vunpack.c.0.s8 %v771
        %v773 = vlaneseq
        %v774 = vshrl.u32 %v773, 7
        %v775 = vsub.s32 %v772, %v774
        %v776 = vrot.slane %v765, %v775
        %v778 = vunpack.c.l.s4 1983009808
        %v779 = vunpack.c.0.s8 %v778
        %v780 = vlaneseq
        %v781 = vshrl.u32 %v780, 7
        %v782 = vsub.s32 %v779, %v781
        %v783 = vrot.slane %v769, %v782
        %v784 = vcombine.high %v776, %v776
        %v785 = vcombine.high %v783, %v783
        %v786 = vcombine.high %v766, %v766
        %v788 = vunpack.c.l.s4 1983009808
        %v789 = vunpack.c.0.s8 %v788
        %v790 = vlaneseq
        %v791 = vshrl.u32 %v790, 7
        %v792 = vsub.s32 %v789, %v791
        %v793 = vrot.slane %v766, %v792
        %v795 = vunpack.c.l.s4 1983009808
        %v796 = vunpack.c.0.s8 %v795
        %v797 = vlaneseq
        %v798 = vshrl.u32 %v797, 7
        %v799 = vsub.s32 %v796, %v798
        %v800 = vrot.slane %v786, %v799
        %v801 = vcombine.high %v793, %v793
        %v802 = vcombine.high %v800, %v800
        %v811 = vadd.f32 %v757, %v776
        %v812 = vadd.f32 %v758, %v784
        %v813 = vadd.f32 %v759, %v783
        %v814 = vadd.f32 %v760, %v785
        %v815 = vadd.f32 %v761, %v793
        %v816 = vadd.f32 %v762, %v801
        %v817 = vadd.f32 %v763, %v800
        %v818 = vadd.f32 %v764, %v802
        %s819 = sld [smem:[#allocation2]]
        %v820 = vstv %s819
        %v821 = vmul.f32 %v811, %v820
        %v822 = vmul.f32 %v812, %v820
        %v823 = vmul.f32 %v813, %v820
        %v824 = vmul.f32 %v814, %v820
        %v825 = vmul.f32 %v815, %v820
        %v826 = vmul.f32 %v816, %v820
        %v827 = vmul.f32 %v817, %v820
        %v828 = vmul.f32 %v818, %v820
        %v837 = vcombine.low %v821, %v822
        %v838 = vcombine.low %v823, %v824
        %v840 = vunpack.c.l.s4 1983009808
        %v841 = vunpack.c.0.s8 %v840
        %v842 = vlaneseq
        %v843 = vshrl.u32 %v842, 7
        %v844 = vsub.s32 %v841, %v843
        %v845 = vrot.slane %v837, %v844
        %v847 = vunpack.c.l.s4 1983009808
        %v848 = vunpack.c.0.s8 %v847
        %v849 = vlaneseq
        %v850 = vshrl.u32 %v849, 7
        %v851 = vsub.s32 %v848, %v850
        %v852 = vrot.slane %v838, %v851
        %v853 = vcombine.low %v845, %v852
        %v854 = vcombine.low %v825, %v826
        %v855 = vcombine.low %v827, %v828
        %v857 = vunpack.c.l.s4 1983009808
        %v858 = vunpack.c.0.s8 %v857
        %v859 = vlaneseq
        %v860 = vshrl.u32 %v859, 7
        %v861 = vsub.s32 %v858, %v860
        %v862 = vrot.slane %v854, %v861
        %v864 = vunpack.c.l.s4 1983009808
        %v865 = vunpack.c.0.s8 %v864
        %v866 = vlaneseq
        %v867 = vshrl.u32 %v866, 7
        %v868 = vsub.s32 %v865, %v867
        %v869 = vrot.slane %v855, %v868
        %v870 = vcombine.low %v862, %v869
        %873 = vst [vmem:[%s338] sm:$0xff] %v853
        %874 = vst [vmem:[%s338 + $0x8] sm:$0xff] %v870
        %s875 = smul.u32 8, %s17
        %p876 = scmp.lt.s32.totalorder %s875, 15
        %s877 = scalar_select %p876, %s875, 15
        %s878 = smul.addr %s877, 2
        %s879 = scalar_lea.vmem %s5, %s878
        // Predicated region
        $region64: #{temporal_vae_forward.23} parent=58 // pred_check
          %p880 = pneg %p150
        $region65: #{temporal_vae_forward.23} parent=58 // pred_check_branch
          %882 = sbr.rel (%p880) target = $region67
        $region66: #{temporal_vae_forward.23} parent=58 // pred_region
          %s883 = smul.u32 8, %s17
        $region67: #{temporal_vae_forward.23} parent=58 // pred_fallthru
          _
      $region59: #{temporal_vae_forward.23} parent=5 // pred_fallthru
        _
      %p884 = scmp.le.s32.totalorder 2, %s12
      // Predicated region
      $region68: #{temporal_vae_forward.23} parent=5 // pred_check
        %p885 = pneg %p884
      $region69: #{temporal_vae_forward.23} parent=5 // pred_check_branch
        %887 = sbr.rel (%p885) target = $region71
      $region70: #{temporal_vae_forward.23} parent=5 // pred_region
        %s888 = ssub.s32 %s12, 2
        // Predicated region
        $region72: #{temporal_vae_forward.23} parent=70 // pred_check
          %p889 = pneg %p156
        $region73: #{temporal_vae_forward.23} parent=70 // pred_check_branch
          %891 = sbr.rel (%p889) target = $region75
        $region74: #{temporal_vae_forward.23} parent=70 // pred_region
          %s892 = smul.u32 8, %s18
          %p893 = scmp.lt.s32.totalorder %s892, 15
          %s894 = scalar_select %p893, %s892, 15
          %s895 = smul.addr %s894, 2
          %s896 = scalar_lea.vmem %s5, %s895
        $region75: #{temporal_vae_forward.23} parent=70 // pred_fallthru
          _
      $region71: #{temporal_vae_forward.23} parent=5 // pred_fallthru
        _
    $region6: #{temporal_vae_forward.23} parent=1 // loop_footer
      %s16 = sadd.s32 1, %s12
    $region7: #{temporal_vae_forward.23} parent=1 // loop_footer_branch
      %11 = sbr.rel target = $region3
    $region8: #{temporal_vae_forward.23} parent=1 // loop_exit
      _

</llo_original>
